<compile_context>
chip_gen: v6e
topology: v6e:2x2x1
jax: 0.10.0
libtpu: 0.0.40
codegen_flags: <defaults>
</compile_context>

<pallas_src>
import jax
import jax.numpy as jnp
from jax.experimental import pallas as pl
from jax.experimental.pallas import tpu as pltpu


def _rnn_kernel(x_ref, h0_ref, whx_ref, whh_ref, why_ref, bh_ref, by_ref,
                probs_ref, hfin_ref, xproj_ref, hcarry_ref):
    Hp, Bt = h0_ref.shape
    TcBt = xproj_ref.shape[1]
    Tc = TcBt // Bt                      # static Python int
    nt = pl.program_id(1)                # time-chunk index (innermost axis)

    # ---- Phase 1: time-parallel input projection for this chunk (one GEMM) --
    xproj_ref[...] = jnp.dot(whx_ref[...], x_ref[...],
                             preferred_element_type=jnp.float32)

    # Re-initialize the carried hidden state at the first chunk of a batch tile.
    @pl.when(nt == 0)
    def _():
        hcarry_ref[...] = h0_ref[...]

    # Hoisted bias broadcast (JAX does not CSE broadcast_in_dim per iteration).
    bh_b = jnp.broadcast_to(bh_ref[...], (Hp, Bt))

    # ---- Phase 2: serial recurrence (only Whh @ h + bias + tanh per step) ---
    def step(t, h):
        col = pl.multiple_of(t * Bt, 128)            # Bt is a multiple of 128
        pre = (xproj_ref[:, pl.ds(col, Bt)]
               + jnp.dot(whh_ref[...], h, preferred_element_type=jnp.float32)
               + bh_b)
        h_new = jnp.tanh(pre)
        # In-place reuse: this xproj column was already consumed above, so the
        # saved hidden state overwrites it (no separate `hall` scratch).
        xproj_ref[:, pl.ds(col, Bt)] = h_new
        return h_new

    # Tc is small (<= max_time_chunk) and static -> bounded full unroll.
    h_final = jax.lax.fori_loop(0, Tc, step, hcarry_ref[...], unroll=True)
    hcarry_ref[...] = h_final

    @pl.when(nt == pl.num_programs(1) - 1)
    def _():
        hfin_ref[...] = h_final

    # ---- Phase 3: time-parallel output projection + stabilized softmax ------
    # (softmax over the class/sublane axis; lane-dense (Cp, Tc*Bt) store).
    hall = xproj_ref[...].astype(why_ref.dtype)      # no-op on the f32 path
    y = (jnp.dot(why_ref[...], hall, preferred_element_type=jnp.float32)
         + by_ref[...])                              # padded class rows ~ -1e30
    y = y - jnp.max(y, axis=0, keepdims=True)
    e = jnp.exp(y)
    denom = jnp.sum(e, axis=0, keepdims=True)
    # Exact reciprocal keeps tight agreement with the f32 reference; switch to
    # pl.reciprocal(denom, approx=True) to push the divide onto the EUP slot.
    probs_ref[...] = e * pl.reciprocal(denom)


def _round_up(n, m):
    return ((n + m - 1) // m) * m


def _vmem_limit_bytes():
    """Per-generation VMEM cap: ~3/4 of physical (96 MiB v5e/v6e, 48 MiB v7x)."""
    try:
        cap = pltpu.get_tpu_info().vmem_capacity_bytes
        return int(min(cap * 3 // 4, 100 * 1024 * 1024))
    except Exception:
        return 64 * 1024 * 1024


def vanilla_rnn_forward(x, h_prev, Whx, Whh, Why, bh, by,
                        *, batch_tile=128, max_time_chunk=16,
                        mxu_dtype=jnp.float32):
    """x: (S, D, B), h_prev: (H, B) -> (probs (S, B, C), h_final (H, B))."""
    S, D, B = x.shape
    H = Whh.shape[0]
    C = Why.shape[0]

    Bt = batch_tile                      # lane tile (multiple of 128; 256 can
                                         # help on v6e/v7x once B is large)
    Bp = _round_up(B, Bt)
    NB = Bp // Bt
    Dp = _round_up(D, 8)                 # sublane-aligned contraction dim
    Hp = _round_up(H, 128)               # lane dim of Why / both dims of Whh
    Cp = _round_up(C, 8)                 # sublane dim of the logits

    # Largest divisor of S that is <= max_time_chunk: keeps VMEM O(Tc) instead
    # of O(S) with no masked-tail handling (worst case Tc=1 is still correct).
    Tc = 1
    for d in range(1, min(S, max_time_chunk) + 1):
        if S % d == 0:
            Tc = d
    NT = S // Tc
    TcBt = Tc * Bt

    f32 = jnp.float32
    w_dtype = mxu_dtype                  # bf16 recommended on v6e/v7x at scale
                                         # for x/Whx/Why only (f32 accumulate).

    # ---- pad & lay out operands: batch on lanes, per-(tile, chunk) packing --
    x_p = jnp.zeros((S, Dp, Bp), f32).at[:, :D, :B].set(x.astype(f32))
    # (Dp, NB, NT, Tc, Bt) flattened: grid point (nb, nt) owns a contiguous
    # (Dp, Tc*Bt) column block; local timestep t lives at columns [t*Bt, ...).
    x_flat = (x_p.reshape(NT, Tc, Dp, NB, Bt)
                 .transpose(2, 3, 0, 1, 4)
                 .reshape(Dp, NB * S * Bt)
                 .astype(w_dtype))

    h0_p = jnp.zeros((Hp, Bp), f32).at[:H, :B].set(h_prev.astype(f32))
    whx_p = jnp.zeros((Hp, Dp), w_dtype).at[:H, :D].set(Whx.astype(w_dtype))
    # Whh stays f32 regardless of mxu_dtype: the recurrence carry must not be
    # re-quantized every timestep (error would compound over S).
    whh_p = jnp.zeros((Hp, Hp), f32).at[:H, :H].set(Whh.astype(f32))
    why_p = jnp.zeros((Cp, Hp), w_dtype).at[:C, :H].set(Why.astype(w_dtype))
    bh_p = jnp.zeros((Hp, 1), f32).at[:H, 0].set(bh.astype(f32))
    # Padded class rows get a very negative bias -> ~0 softmax mass.
    by_p = jnp.full((Cp, 1), -1e30, f32).at[:C, 0].set(by.astype(f32))

    grid_spec = pltpu.PrefetchScalarGridSpec(
        num_scalar_prefetch=0,
        grid=(NB, NT),                                        # (batch, time-chunk)
        in_specs=[
            pl.BlockSpec((Dp, TcBt), lambda nb, nt: (0, nb * NT + nt)),  # x
            pl.BlockSpec((Hp, Bt), lambda nb, nt: (0, nb)),              # h0
            # Constant index maps: fetched once, VMEM-resident across the grid.
            pl.BlockSpec((Hp, Dp), lambda nb, nt: (0, 0)),               # Whx
            pl.BlockSpec((Hp, Hp), lambda nb, nt: (0, 0)),               # Whh
            pl.BlockSpec((Cp, Hp), lambda nb, nt: (0, 0)),               # Why
            pl.BlockSpec((Hp, 1), lambda nb, nt: (0, 0)),                # bh
            pl.BlockSpec((Cp, 1), lambda nb, nt: (0, 0)),                # by
        ],
        out_specs=[
            pl.BlockSpec((Cp, TcBt), lambda nb, nt: (0, nb * NT + nt)),  # probs
            pl.BlockSpec((Hp, Bt), lambda nb, nt: (0, nb)),              # h_final
        ],
        scratch_shapes=[
            pltpu.VMEM((Hp, TcBt), jnp.float32),   # Whx@X chunk, reused as h_t
            pltpu.VMEM((Hp, Bt), jnp.float32),     # h carried across chunks
        ],
    )

    probs_flat, hfin = pl.pallas_call(
        _rnn_kernel,
        out_shape=(
            jax.ShapeDtypeStruct((Cp, NB * S * Bt), jnp.float32),
            jax.ShapeDtypeStruct((Hp, Bp), jnp.float32),
        ),
        grid_spec=grid_spec,
        compiler_params=pltpu.CompilerParams(
            # Batch tiles independent -> megacore-shardable; time axis serial.
            dimension_semantics=("parallel", "arbitrary"),
            vmem_limit_bytes=_vmem_limit_bytes(),
        ),
    )(x_flat, h0_p, whx_p, whh_p, why_p, bh_p, by_p)

    # Single wrapper-side transpose back to the module's (S, B, C) layout.
    probs = (probs_flat.reshape(Cp, NB, NT, Tc, Bt)
                       .transpose(2, 3, 1, 4, 0)              # (NT, Tc, NB, Bt, Cp)
                       .reshape(S, Bp, Cp)[:, :B, :C])
    h_final = hfin[:H, :B]
    return probs, h_final


def _reference(x, h_prev, Whx, Whh, Why, bh, by):
    S = x.shape[0]
    h = h_prev
    outs = []
    for t in range(S):
        h = jnp.tanh(Whx @ x[t] + Whh @ h + bh[:, None])
        y = Why @ h + by[:, None]
        p = jnp.exp(y) / jnp.sum(jnp.exp(y), axis=0)
        outs.append(p.T)
    return jnp.stack(outs), h


if __name__ == "__main__":
    seq_length, input_dim, num_hidden, num_classes, batch_size = 8, 4, 32, 10, 2

    key = jax.random.PRNGKey(0)
    k_x, k_h, k_whx, k_whh, k_why = jax.random.split(key, 5)

    # Mirrors torch.randn / zeros init in the module's __init__.
    Whx = jax.random.normal(k_whx, (num_hidden, input_dim), jnp.float32)
    Whh = jax.random.normal(k_whh, (num_hidden, num_hidden), jnp.float32)
    Why = jax.random.normal(k_why, (num_classes, num_hidden), jnp.float32)
    bh = jnp.zeros((num_hidden,), jnp.float32)
    by = jnp.zeros((num_classes,), jnp.float32)

    x = jax.random.normal(k_x, (seq_length, input_dim, batch_size), jnp.float32)
    h0 = jax.random.normal(k_h, (num_hidden, batch_size), jnp.float32)

    probs, h_final = vanilla_rnn_forward(x, h0, Whx, Whh, Why, bh, by)
    jax.block_until_ready((probs, h_final))

    ref_probs, ref_h = _reference(x, h0, Whx, Whh, Why, bh, by)
    assert probs.shape == (seq_length, batch_size, num_classes)
    assert h_final.shape == (num_hidden, batch_size)
    assert jnp.allclose(probs, ref_probs, atol=1e-4, rtol=1e-4), \
        float(jnp.max(jnp.abs(probs - ref_probs)))
    assert jnp.allclose(h_final, ref_h, atol=1e-4, rtol=1e-4), \
        float(jnp.max(jnp.abs(h_final - ref_h)))

    print("KERNEL_OK")
</pallas_src>

<mosaic_0001>
module attributes {stable_mosaic.version = 11 : i64} {
  func.func @_rnn_kernel(%arg0: i32, %arg1: i32, %arg2: memref<8x1024xf32, #tpu.memory_space<vmem>>, %arg3: memref<128x128xf32, #tpu.memory_space<vmem>>, %arg4: memref<128x8xf32, #tpu.memory_space<vmem>>, %arg5: memref<128x128xf32, #tpu.memory_space<vmem>>, %arg6: memref<16x128xf32, #tpu.memory_space<vmem>>, %arg7: memref<128x1xf32, #tpu.memory_space<vmem>>, %arg8: memref<16x1xf32, #tpu.memory_space<vmem>>, %arg9: memref<16x1024xf32, #tpu.memory_space<vmem>>, %arg10: memref<128x128xf32, #tpu.memory_space<vmem>>, %arg11: memref<128x1024xf32, #tpu.memory_space<vmem>>, %arg12: memref<128x128xf32, #tpu.memory_space<vmem>>) attributes {dimension_semantics = [#tpu.dimension_semantics<parallel>, #tpu.dimension_semantics<arbitrary>], iteration_bounds = array<i64: 1, 1>, scalar_prefetch = 0 : i64, scratch_operands = 2 : i64, tpu.core_type = #tpu.core_type<tc>, window_params = [{transform_indices = @transform_0, window_bounds = array<i64: 8, 1024>}, {transform_indices = @transform_1, window_bounds = array<i64: 128, 128>}, {pipeline_mode = #tpu.pipeline_mode<synchronous>, transform_indices = @transform_2, window_bounds = array<i64: 128, 8>}, {pipeline_mode = #tpu.pipeline_mode<synchronous>, transform_indices = @transform_3, window_bounds = array<i64: 128, 128>}, {pipeline_mode = #tpu.pipeline_mode<synchronous>, transform_indices = @transform_4, window_bounds = array<i64: 16, 128>}, {pipeline_mode = #tpu.pipeline_mode<synchronous>, transform_indices = @transform_5, window_bounds = array<i64: 128, 1>}, {pipeline_mode = #tpu.pipeline_mode<synchronous>, transform_indices = @transform_6, window_bounds = array<i64: 16, 1>}, {transform_indices = @transform_7, window_bounds = array<i64: 16, 1024>}, {transform_indices = @transform_8, window_bounds = array<i64: 128, 128>}]} {
    %c0 = arith.constant 0 : index
    %c0_0 = arith.constant 0 : index
    %0 = vector.load %arg4[%c0, %c0_0] : memref<128x8xf32, #tpu.memory_space<vmem>>, vector<128x8xf32>
    %c0_1 = arith.constant 0 : index
    %c0_2 = arith.constant 0 : index
    %1 = vector.load %arg2[%c0_1, %c0_2] : memref<8x1024xf32, #tpu.memory_space<vmem>>, vector<8x1024xf32>
    %cst = arith.constant dense<0.000000e+00> : vector<128x1024xf32>
    %2 = tpu.matmul %0, %1, %cst {dimension_numbers = #tpu.dot_dimension_numbers<[1], [0], [0], [1], [0, 0, 1, 1], [], []>} : vector<128x8xf32>, vector<8x1024xf32>, vector<128x1024xf32> -> vector<128x1024xf32>
    %c0_3 = arith.constant 0 : index
    %c0_4 = arith.constant 0 : index
    %3 = vector.load %arg11[%c0_3, %c0_4] : memref<128x1024xf32, #tpu.memory_space<vmem>>, vector<128x1024xf32>
    tpu.vector_store %arg11[%c0_3, %c0_4], %2 {strides = array<i32>} : memref<128x1024xf32, #tpu.memory_space<vmem>>, vector<128x1024xf32>,
    %c0_i32 = arith.constant 0 : i32
    %4 = arith.cmpi eq, %arg1, %c0_i32 : i32
    %5 = arith.extui %4 : i1 to i32
    %c0_i32_5 = arith.constant 0 : i32
    %6 = arith.cmpi ne, %5, %c0_i32_5 : i32
    scf.if %6 {
      %c0_73 = arith.constant 0 : index
      %c0_74 = arith.constant 0 : index
      %120 = vector.load %arg3[%c0_73, %c0_74] : memref<128x128xf32, #tpu.memory_space<vmem>>, vector<128x128xf32>
      %c0_75 = arith.constant 0 : index
      %c0_76 = arith.constant 0 : index
      %121 = vector.load %arg12[%c0_75, %c0_76] : memref<128x128xf32, #tpu.memory_space<vmem>>, vector<128x128xf32>
      tpu.vector_store %arg12[%c0_75, %c0_76], %120 {strides = array<i32>} : memref<128x128xf32, #tpu.memory_space<vmem>>, vector<128x128xf32>,
    } else {
    }
    %c0_6 = arith.constant 0 : index
    %c0_7 = arith.constant 0 : index
    %7 = vector.load %arg7[%c0_6, %c0_7] : memref<128x1xf32, #tpu.memory_space<vmem>>, vector<128x1xf32>
    %8 = vector.shape_cast %7 : vector<128x1xf32> to vector<128x1xf32>
    %9 = vector.broadcast %8 : vector<128x1xf32> to vector<128x128xf32>
    %c0_8 = arith.constant 0 : index
    %c0_9 = arith.constant 0 : index
    %10 = vector.load %arg12[%c0_8, %c0_9] : memref<128x128xf32, #tpu.memory_space<vmem>>, vector<128x128xf32>
    %c0_i32_10 = arith.constant 0 : i32
    %c128_i32 = arith.constant 128 : i32
    %11 = arith.muli %c0_i32_10, %c128_i32 : i32
    %12 = tpu.assume_multiple %11, 128 : i32
    %c0_11 = arith.constant 0 : index
    %13 = arith.index_cast %12 : i32 to index
    %14 = vector.load %arg11[%c0_11, %13] : memref<128x1024xf32, #tpu.memory_space<vmem>>, vector<128x128xf32>
    %c0_12 = arith.constant 0 : index
    %c0_13 = arith.constant 0 : index
    %15 = vector.load %arg5[%c0_12, %c0_13] : memref<128x128xf32, #tpu.memory_space<vmem>>, vector<128x128xf32>
    %cst_14 = arith.constant dense<0.000000e+00> : vector<128x128xf32>
    %16 = tpu.matmul %15, %10, %cst_14 {dimension_numbers = #tpu.dot_dimension_numbers<[1], [0], [0], [1], [0, 0, 1, 1], [], []>} : vector<128x128xf32>, vector<128x128xf32>, vector<128x128xf32> -> vector<128x128xf32>
    %17 = arith.addf %14, %16 : vector<128x128xf32>
    %18 = arith.addf %17, %9 : vector<128x128xf32>
    %19 = math.tanh %18 : vector<128x128xf32>
    %c0_15 = arith.constant 0 : index
    %20 = arith.index_cast %12 : i32 to index
    %21 = vector.load %arg11[%c0_15, %20] : memref<128x1024xf32, #tpu.memory_space<vmem>>, vector<128x128xf32>
    tpu.vector_store %arg11[%c0_15, %20], %19 {strides = array<i32>} : memref<128x1024xf32, #tpu.memory_space<vmem>>, vector<128x128xf32>,
    %c1_i32 = arith.constant 1 : i32
    %c128_i32_16 = arith.constant 128 : i32
    %22 = arith.muli %c1_i32, %c128_i32_16 : i32
    %23 = tpu.assume_multiple %22, 128 : i32
    %c0_17 = arith.constant 0 : index
    %24 = arith.index_cast %23 : i32 to index
    %25 = vector.load %arg11[%c0_17, %24] : memref<128x1024xf32, #tpu.memory_space<vmem>>, vector<128x128xf32>
    %c0_18 = arith.constant 0 : index
    %c0_19 = arith.constant 0 : index
    %26 = vector.load %arg5[%c0_18, %c0_19] : memref<128x128xf32, #tpu.memory_space<vmem>>, vector<128x128xf32>
    %cst_20 = arith.constant dense<0.000000e+00> : vector<128x128xf32>
    %27 = tpu.matmul %26, %19, %cst_20 {dimension_numbers = #tpu.dot_dimension_numbers<[1], [0], [0], [1], [0, 0, 1, 1], [], []>} : vector<128x128xf32>, vector<128x128xf32>, vector<128x128xf32> -> vector<128x128xf32>
    %28 = arith.addf %25, %27 : vector<128x128xf32>
    %29 = arith.addf %28, %9 : vector<128x128xf32>
    %30 = math.tanh %29 : vector<128x128xf32>
    %c0_21 = arith.constant 0 : index
    %31 = arith.index_cast %23 : i32 to index
    %32 = vector.load %arg11[%c0_21, %31] : memref<128x1024xf32, #tpu.memory_space<vmem>>, vector<128x128xf32>
    tpu.vector_store %arg11[%c0_21, %31], %30 {strides = array<i32>} : memref<128x1024xf32, #tpu.memory_space<vmem>>, vector<128x128xf32>,
    %c2_i32 = arith.constant 2 : i32
    %c128_i32_22 = arith.constant 128 : i32
    %33 = arith.muli %c2_i32, %c128_i32_22 : i32
    %34 = tpu.assume_multiple %33, 128 : i32
    %c0_23 = arith.constant 0 : index
    %35 = arith.index_cast %34 : i32 to index
    %36 = vector.load %arg11[%c0_23, %35] : memref<128x1024xf32, #tpu.memory_space<vmem>>, vector<128x128xf32>
    %c0_24 = arith.constant 0 : index
    %c0_25 = arith.constant 0 : index
    %37 = vector.load %arg5[%c0_24, %c0_25] : memref<128x128xf32, #tpu.memory_space<vmem>>, vector<128x128xf32>
    %cst_26 = arith.constant dense<0.000000e+00> : vector<128x128xf32>
    %38 = tpu.matmul %37, %30, %cst_26 {dimension_numbers = #tpu.dot_dimension_numbers<[1], [0], [0], [1], [0, 0, 1, 1], [], []>} : vector<128x128xf32>, vector<128x128xf32>, vector<128x128xf32> -> vector<128x128xf32>
    %39 = arith.addf %36, %38 : vector<128x128xf32>
    %40 = arith.addf %39, %9 : vector<128x128xf32>
    %41 = math.tanh %40 : vector<128x128xf32>
    %c0_27 = arith.constant 0 : index
    %42 = arith.index_cast %34 : i32 to index
    %43 = vector.load %arg11[%c0_27, %42] : memref<128x1024xf32, #tpu.memory_space<vmem>>, vector<128x128xf32>
    tpu.vector_store %arg11[%c0_27, %42], %41 {strides = array<i32>} : memref<128x1024xf32, #tpu.memory_space<vmem>>, vector<128x128xf32>,
    %c3_i32 = arith.constant 3 : i32
    %c128_i32_28 = arith.constant 128 : i32
    %44 = arith.muli %c3_i32, %c128_i32_28 : i32
    %45 = tpu.assume_multiple %44, 128 : i32
    %c0_29 = arith.constant 0 : index
    %46 = arith.index_cast %45 : i32 to index
    %47 = vector.load %arg11[%c0_29, %46] : memref<128x1024xf32, #tpu.memory_space<vmem>>, vector<128x128xf32>
    %c0_30 = arith.constant 0 : index
    %c0_31 = arith.constant 0 : index
    %48 = vector.load %arg5[%c0_30, %c0_31] : memref<128x128xf32, #tpu.memory_space<vmem>>, vector<128x128xf32>
    %cst_32 = arith.constant dense<0.000000e+00> : vector<128x128xf32>
    %49 = tpu.matmul %48, %41, %cst_32 {dimension_numbers = #tpu.dot_dimension_numbers<[1], [0], [0], [1], [0, 0, 1, 1], [], []>} : vector<128x128xf32>, vector<128x128xf32>, vector<128x128xf32> -> vector<128x128xf32>
    %50 = arith.addf %47, %49 : vector<128x128xf32>
    %51 = arith.addf %50, %9 : vector<128x128xf32>
    %52 = math.tanh %51 : vector<128x128xf32>
    %c0_33 = arith.constant 0 : index
    %53 = arith.index_cast %45 : i32 to index
    %54 = vector.load %arg11[%c0_33, %53] : memref<128x1024xf32, #tpu.memory_space<vmem>>, vector<128x128xf32>
    tpu.vector_store %arg11[%c0_33, %53], %52 {strides = array<i32>} : memref<128x1024xf32, #tpu.memory_space<vmem>>, vector<128x128xf32>,
    %c4_i32 = arith.constant 4 : i32
    %c128_i32_34 = arith.constant 128 : i32
    %55 = arith.muli %c4_i32, %c128_i32_34 : i32
    %56 = tpu.assume_multiple %55, 128 : i32
    %c0_35 = arith.constant 0 : index
    %57 = arith.index_cast %56 : i32 to index
    %58 = vector.load %arg11[%c0_35, %57] : memref<128x1024xf32, #tpu.memory_space<vmem>>, vector<128x128xf32>
    %c0_36 = arith.constant 0 : index
    %c0_37 = arith.constant 0 : index
    %59 = vector.load %arg5[%c0_36, %c0_37] : memref<128x128xf32, #tpu.memory_space<vmem>>, vector<128x128xf32>
    %cst_38 = arith.constant dense<0.000000e+00> : vector<128x128xf32>
    %60 = tpu.matmul %59, %52, %cst_38 {dimension_numbers = #tpu.dot_dimension_numbers<[1], [0], [0], [1], [0, 0, 1, 1], [], []>} : vector<128x128xf32>, vector<128x128xf32>, vector<128x128xf32> -> vector<128x128xf32>
    %61 = arith.addf %58, %60 : vector<128x128xf32>
    %62 = arith.addf %61, %9 : vector<128x128xf32>
    %63 = math.tanh %62 : vector<128x128xf32>
    %c0_39 = arith.constant 0 : index
    %64 = arith.index_cast %56 : i32 to index
    %65 = vector.load %arg11[%c0_39, %64] : memref<128x1024xf32, #tpu.memory_space<vmem>>, vector<128x128xf32>
    tpu.vector_store %arg11[%c0_39, %64], %63 {strides = array<i32>} : memref<128x1024xf32, #tpu.memory_space<vmem>>, vector<128x128xf32>,
    %c5_i32 = arith.constant 5 : i32
    %c128_i32_40 = arith.constant 128 : i32
    %66 = arith.muli %c5_i32, %c128_i32_40 : i32
    %67 = tpu.assume_multiple %66, 128 : i32
    %c0_41 = arith.constant 0 : index
    %68 = arith.index_cast %67 : i32 to index
    %69 = vector.load %arg11[%c0_41, %68] : memref<128x1024xf32, #tpu.memory_space<vmem>>, vector<128x128xf32>
    %c0_42 = arith.constant 0 : index
    %c0_43 = arith.constant 0 : index
    %70 = vector.load %arg5[%c0_42, %c0_43] : memref<128x128xf32, #tpu.memory_space<vmem>>, vector<128x128xf32>
    %cst_44 = arith.constant dense<0.000000e+00> : vector<128x128xf32>
    %71 = tpu.matmul %70, %63, %cst_44 {dimension_numbers = #tpu.dot_dimension_numbers<[1], [0], [0], [1], [0, 0, 1, 1], [], []>} : vector<128x128xf32>, vector<128x128xf32>, vector<128x128xf32> -> vector<128x128xf32>
    %72 = arith.addf %69, %71 : vector<128x128xf32>
    %73 = arith.addf %72, %9 : vector<128x128xf32>
    %74 = math.tanh %73 : vector<128x128xf32>
    %c0_45 = arith.constant 0 : index
    %75 = arith.index_cast %67 : i32 to index
    %76 = vector.load %arg11[%c0_45, %75] : memref<128x1024xf32, #tpu.memory_space<vmem>>, vector<128x128xf32>
    tpu.vector_store %arg11[%c0_45, %75], %74 {strides = array<i32>} : memref<128x1024xf32, #tpu.memory_space<vmem>>, vector<128x128xf32>,
    %c6_i32 = arith.constant 6 : i32
    %c128_i32_46 = arith.constant 128 : i32
    %77 = arith.muli %c6_i32, %c128_i32_46 : i32
    %78 = tpu.assume_multiple %77, 128 : i32
    %c0_47 = arith.constant 0 : index
    %79 = arith.index_cast %78 : i32 to index
    %80 = vector.load %arg11[%c0_47, %79] : memref<128x1024xf32, #tpu.memory_space<vmem>>, vector<128x128xf32>
    %c0_48 = arith.constant 0 : index
    %c0_49 = arith.constant 0 : index
    %81 = vector.load %arg5[%c0_48, %c0_49] : memref<128x128xf32, #tpu.memory_space<vmem>>, vector<128x128xf32>
    %cst_50 = arith.constant dense<0.000000e+00> : vector<128x128xf32>
    %82 = tpu.matmul %81, %74, %cst_50 {dimension_numbers = #tpu.dot_dimension_numbers<[1], [0], [0], [1], [0, 0, 1, 1], [], []>} : vector<128x128xf32>, vector<128x128xf32>, vector<128x128xf32> -> vector<128x128xf32>
    %83 = arith.addf %80, %82 : vector<128x128xf32>
    %84 = arith.addf %83, %9 : vector<128x128xf32>
    %85 = math.tanh %84 : vector<128x128xf32>
    %c0_51 = arith.constant 0 : index
    %86 = arith.index_cast %78 : i32 to index
    %87 = vector.load %arg11[%c0_51, %86] : memref<128x1024xf32, #tpu.memory_space<vmem>>, vector<128x128xf32>
    tpu.vector_store %arg11[%c0_51, %86], %85 {strides = array<i32>} : memref<128x1024xf32, #tpu.memory_space<vmem>>, vector<128x128xf32>,
    %c7_i32 = arith.constant 7 : i32
    %c128_i32_52 = arith.constant 128 : i32
    %88 = arith.muli %c7_i32, %c128_i32_52 : i32
    %89 = tpu.assume_multiple %88, 128 : i32
    %c0_53 = arith.constant 0 : index
    %90 = arith.index_cast %89 : i32 to index
    %91 = vector.load %arg11[%c0_53, %90] : memref<128x1024xf32, #tpu.memory_space<vmem>>, vector<128x128xf32>
    %c0_54 = arith.constant 0 : index
    %c0_55 = arith.constant 0 : index
    %92 = vector.load %arg5[%c0_54, %c0_55] : memref<128x128xf32, #tpu.memory_space<vmem>>, vector<128x128xf32>
    %cst_56 = arith.constant dense<0.000000e+00> : vector<128x128xf32>
    %93 = tpu.matmul %92, %85, %cst_56 {dimension_numbers = #tpu.dot_dimension_numbers<[1], [0], [0], [1], [0, 0, 1, 1], [], []>} : vector<128x128xf32>, vector<128x128xf32>, vector<128x128xf32> -> vector<128x128xf32>
    %94 = arith.addf %91, %93 : vector<128x128xf32>
    %95 = arith.addf %94, %9 : vector<128x128xf32>
    %96 = math.tanh %95 : vector<128x128xf32>
    %c0_57 = arith.constant 0 : index
    %97 = arith.index_cast %89 : i32 to index
    %98 = vector.load %arg11[%c0_57, %97] : memref<128x1024xf32, #tpu.memory_space<vmem>>, vector<128x128xf32>
    tpu.vector_store %arg11[%c0_57, %97], %96 {strides = array<i32>} : memref<128x1024xf32, #tpu.memory_space<vmem>>, vector<128x128xf32>,
    %c8_i32 = arith.constant 8 : i32
    %c0_58 = arith.constant 0 : index
    %c0_59 = arith.constant 0 : index
    %99 = vector.load %arg12[%c0_58, %c0_59] : memref<128x128xf32, #tpu.memory_space<vmem>>, vector<128x128xf32>
    tpu.vector_store %arg12[%c0_58, %c0_59], %96 {strides = array<i32>} : memref<128x128xf32, #tpu.memory_space<vmem>>, vector<128x128xf32>,
    %c0_i32_60 = arith.constant 0 : i32
    %100 = arith.cmpi eq, %arg1, %c0_i32_60 : i32
    %101 = arith.extui %100 : i1 to i32
    %c0_i32_61 = arith.constant 0 : i32
    %102 = arith.cmpi ne, %101, %c0_i32_61 : i32
    scf.if %102 {
      %c0_73 = arith.constant 0 : index
      %c0_74 = arith.constant 0 : index
      %120 = vector.load %arg10[%c0_73, %c0_74] : memref<128x128xf32, #tpu.memory_space<vmem>>, vector<128x128xf32>
      tpu.vector_store %arg10[%c0_73, %c0_74], %96 {strides = array<i32>} : memref<128x128xf32, #tpu.memory_space<vmem>>, vector<128x128xf32>,
    } else {
    }
    %c0_62 = arith.constant 0 : index
    %c0_63 = arith.constant 0 : index
    %103 = vector.load %arg11[%c0_62, %c0_63] : memref<128x1024xf32, #tpu.memory_space<vmem>>, vector<128x1024xf32>
    %c0_64 = arith.constant 0 : index
    %c0_65 = arith.constant 0 : index
    %104 = vector.load %arg6[%c0_64, %c0_65] : memref<16x128xf32, #tpu.memory_space<vmem>>, vector<16x128xf32>
    %cst_66 = arith.constant dense<0.000000e+00> : vector<16x1024xf32>
    %105 = tpu.matmul %104, %103, %cst_66 {dimension_numbers = #tpu.dot_dimension_numbers<[1], [0], [0], [1], [0, 0, 1, 1], [], []>} : vector<16x128xf32>, vector<128x1024xf32>, vector<16x1024xf32> -> vector<16x1024xf32>
    %c0_67 = arith.constant 0 : index
    %c0_68 = arith.constant 0 : index
    %106 = vector.load %arg8[%c0_67, %c0_68] : memref<16x1xf32, #tpu.memory_space<vmem>>, vector<16x1xf32>
    %107 = vector.broadcast %106 : vector<16x1xf32> to vector<16x1024xf32>
    %108 = arith.addf %105, %107 : vector<16x1024xf32>
    %cst_69 = arith.constant dense<0xFF800000> : vector<1024xf32>
    %109 = vector.multi_reduction <maximumf>, %108, %cst_69 [0] : vector<16x1024xf32> to vector<1024xf32>
    %110 = vector.shape_cast %109 : vector<1024xf32> to vector<1x1024xf32>
    %111 = vector.broadcast %110 : vector<1x1024xf32> to vector<16x1024xf32>
    %112 = arith.subf %108, %111 : vector<16x1024xf32>
    %113 = math.exp %112 : vector<16x1024xf32>
    %cst_70 = arith.constant dense<0.000000e+00> : vector<1024xf32>
    %114 = vector.multi_reduction <add>, %113, %cst_70 [0] : vector<16x1024xf32> to vector<1024xf32>
    %115 = vector.shape_cast %114 : vector<1024xf32> to vector<1x1024xf32>
    %116 = tpu.reciprocal %115 : vector<1x1024xf32> -> vector<1x1024xf32>
    %117 = vector.broadcast %116 : vector<1x1024xf32> to vector<16x1024xf32>
    %118 = arith.mulf %113, %117 : vector<16x1024xf32>
    %c0_71 = arith.constant 0 : index
    %c0_72 = arith.constant 0 : index
    %119 = vector.load %arg9[%c0_71, %c0_72] : memref<16x1024xf32, #tpu.memory_space<vmem>>, vector<16x1024xf32>
    tpu.vector_store %arg9[%c0_71, %c0_72], %118 {strides = array<i32>} : memref<16x1024xf32, #tpu.memory_space<vmem>>, vector<16x1024xf32>,
    return
  }
  func.func @transform_0(%arg0: i32, %arg1: i32) -> (i32, i32) {
    %c1_i32 = arith.constant 1 : i32
    %0 = arith.muli %arg0, %c1_i32 : i32
    %1 = arith.addi %0, %arg1 : i32
    %c0_i32 = arith.constant 0 : i32
    %c0_i32_0 = arith.constant 0 : i32
    return %c0_i32, %1 : i32, i32
  }
  func.func @transform_1(%arg0: i32, %arg1: i32) -> (i32, i32) {
    %c0_i32 = arith.constant 0 : i32
    %c0_i32_0 = arith.constant 0 : i32
    return %c0_i32, %arg0 : i32, i32
  }
  func.func @transform_2(%arg0: i32, %arg1: i32) -> (i32, i32) {
    %c0_i32 = arith.constant 0 : i32
    %c0_i32_0 = arith.constant 0 : i32
    %c0_i32_1 = arith.constant 0 : i32
    return %c0_i32, %c0_i32_0 : i32, i32
  }
  func.func @transform_3(%arg0: i32, %arg1: i32) -> (i32, i32) {
    %c0_i32 = arith.constant 0 : i32
    %c0_i32_0 = arith.constant 0 : i32
    %c0_i32_1 = arith.constant 0 : i32
    return %c0_i32, %c0_i32_0 : i32, i32
  }
  func.func @transform_4(%arg0: i32, %arg1: i32) -> (i32, i32) {
    %c0_i32 = arith.constant 0 : i32
    %c0_i32_0 = arith.constant 0 : i32
    %c0_i32_1 = arith.constant 0 : i32
    return %c0_i32, %c0_i32_0 : i32, i32
  }
  func.func @transform_5(%arg0: i32, %arg1: i32) -> (i32, i32) {
    %c0_i32 = arith.constant 0 : i32
    %c0_i32_0 = arith.constant 0 : i32
    %c0_i32_1 = arith.constant 0 : i32
    return %c0_i32, %c0_i32_0 : i32, i32
  }
  func.func @transform_6(%arg0: i32, %arg1: i32) -> (i32, i32) {
    %c0_i32 = arith.constant 0 : i32
    %c0_i32_0 = arith.constant 0 : i32
    %c0_i32_1 = arith.constant 0 : i32
    return %c0_i32, %c0_i32_0 : i32, i32
  }
  func.func @transform_7(%arg0: i32, %arg1: i32) -> (i32, i32) {
    %c1_i32 = arith.constant 1 : i32
    %0 = arith.muli %arg0, %c1_i32 : i32
    %1 = arith.addi %0, %arg1 : i32
    %c0_i32 = arith.constant 0 : i32
    %c0_i32_0 = arith.constant 0 : i32
    return %c0_i32, %1 : i32, i32
  }
  func.func @transform_8(%arg0: i32, %arg1: i32) -> (i32, i32) {
    %c0_i32 = arith.constant 0 : i32
    %c0_i32_0 = arith.constant 0 : i32
    return %c0_i32, %arg0 : i32, i32
  }
}

</mosaic_0001>

<llo_original>
// kernel: tpu_custom_call.1
$region0: #{tpu_custom_call.1}
  #allocation0 [shape = 'u32[]', space=smem, size = 0x4, offset = 0x4, fixed_abs, tag = 'smem constant byte address 0x4 - core index']
  #allocation1 [shape = 'u32[144,128]{1,0:T(1,128)}', space=vmem, size = 0x12000, scoped, tag = 'internal scratch']
  #allocation2 [shape = 'f32[128,1024]{1,0:T(8,128)}', space=vmem, size = 0x80000, scoped, tag = 'scratch operand']
  #allocation3 [shape = 'f32[128,128]{1,0:T(8,128)}', space=vmem, size = 0x10000, scoped, tag = 'scratch operand']
  %s0 = inlined_call_operand.hbm [shape: f32[8,1024], index: 0, kind: input, shape index: {}]
  %s1 = inlined_call_operand.vmem [shape: f32[128,128], index: 1, kind: input, shape index: {}]
  %s2 = inlined_call_operand.vmem [shape: f32[128,8], index: 2, kind: input, shape index: {}]
  %s3 = inlined_call_operand.vmem [shape: f32[128,128], index: 3, kind: input, shape index: {}]
  %s4 = inlined_call_operand.vmem [shape: f32[16,128], index: 4, kind: input, shape index: {}]
  %s5 = inlined_call_operand.vmem [shape: f32[128,1], index: 5, kind: input, shape index: {}]
  %s6 = inlined_call_operand.vmem [shape: f32[16,1], index: 6, kind: input, shape index: {}]
  %s7 = inlined_call_operand.hbm [shape: f32[16,1024], index: 7, kind: output, shape index: {0}]
  %s8 = inlined_call_operand.hbm [shape: f32[128,128], index: 8, kind: output, shape index: {1}]
  %9 = xla_tuple %s7, %s8
  %s10 = sld [smem:[#allocation0]]
  $region58: #{tpu_custom_call.1} parent=0
    _
  %s12 = ssub.s32 1, %s10
  %s13 = scalar_select 0, %s12, %s10
  $region1: #{tpu_custom_call.1} parent=0
    #allocation4 [shape = 'u8[32768]{0}', space=vmem, size = 0x8000, scoped, tag = 'input window, operand 0, single buffered']
    #allocation5 [shape = 's32[1]{0}', space=sflag, size = 0x4, scoped, tag = 'scoped memory for tpu_custom_call.1']
    #allocation6 [shape = 's32[1]{0}', space=sflag, size = 0x4, scoped, tag = 'scoped memory for tpu_custom_call.1']
    #allocation7 [shape = 'u8[65536]{0}', space=vmem, size = 0x10000, scoped, tag = 'output window, operand 0, single buffered']
    #allocation8 [shape = 'u8[65536]{0}', space=vmem, size = 0x10000, scoped, tag = 'output window, operand 1, single buffered']
    #allocation9 [shape = 's32[1]{0}', space=sflag, size = 0x4, scoped, tag = 'scoped memory for tpu_custom_call.1']
    %14 = vsyncpa [#allocation5], 0
    %15 = vsyncpa [#allocation6], 0
    %16 = vsyncpa [#allocation9], 0
    // Predicated region
    $region2: #{tpu_custom_call.1} parent=1 // pred_check
      _
    $region3: #{tpu_custom_call.1} parent=1 // pred_check_branch
      %18 = sbr.rel (0) target = $region5
    $region4: #{tpu_custom_call.1} parent=1 // pred_region
      %s19 = sadd.s32 0, 0
      %s20 = smul.u32 8, %s19
      %s22 = ssub.s32 1024, 1024
      %23 = vsyncadd [#allocation5], %s22
      %s24 = smul.addr %s20, 128
      %s25 = scalar_lea.hbm %s0, %s24
      %s27 = sshll.u32 [#allocation4], 4
      %s28 = int_to_ptr.vmem [resolvable:$true] %s27
      %30 = dma.hbm_to_vmem [thread:$0]  %s25, 1024, %s28, [#allocation5]
    $region5: #{tpu_custom_call.1} parent=1 // pred_fallthru
      _
    // Predicated region
    $region6: #{tpu_custom_call.1} parent=1 // pred_check
      _
    $region7: #{tpu_custom_call.1} parent=1 // pred_check_branch
      %32 = sbr.rel (0) target = $region9
    $region8: #{tpu_custom_call.1} parent=1 // pred_region
      _
    $region9: #{tpu_custom_call.1} parent=1 // pred_fallthru
      _
    // Predicated region
    $region10: #{tpu_custom_call.1} parent=1 // pred_check
      _
    $region11: #{tpu_custom_call.1} parent=1 // pred_check_branch
      %34 = sbr.rel (0) target = $region13
    $region12: #{tpu_custom_call.1} parent=1 // pred_region
      _
    $region13: #{tpu_custom_call.1} parent=1 // pred_fallthru
      _
    // Predicated region
    $region14: #{tpu_custom_call.1} parent=1 // pred_check
      _
    $region15: #{tpu_custom_call.1} parent=1 // pred_check_branch
      %36 = sbr.rel (0) target = $region17
    $region16: #{tpu_custom_call.1} parent=1 // pred_region
      _
    $region17: #{tpu_custom_call.1} parent=1 // pred_fallthru
      _
    // Predicated region
    $region18: #{tpu_custom_call.1} parent=1 // pred_check
      _
    $region19: #{tpu_custom_call.1} parent=1 // pred_check_branch
      %38 = sbr.rel (0) target = $region21
    $region20: #{tpu_custom_call.1} parent=1 // pred_region
      _
    $region21: #{tpu_custom_call.1} parent=1 // pred_fallthru
      _
    // Predicated region
    $region22: #{tpu_custom_call.1} parent=1 // pred_check
      _
    $region23: #{tpu_custom_call.1} parent=1 // pred_check_branch
      %40 = sbr.rel (0) target = $region25
    $region24: #{tpu_custom_call.1} parent=1 // pred_region
      _
    $region25: #{tpu_custom_call.1} parent=1 // pred_fallthru
      _
    // Predicated region
    $region26: #{tpu_custom_call.1} parent=1 // pred_check
      _
    $region27: #{tpu_custom_call.1} parent=1 // pred_check_branch
      %42 = sbr.rel (0) target = $region29
    $region28: #{tpu_custom_call.1} parent=1 // pred_region
      _
    $region29: #{tpu_custom_call.1} parent=1 // pred_fallthru
      _
    // Predicated region
    $region30: #{tpu_custom_call.1} parent=1 // pred_check
      _
    $region31: #{tpu_custom_call.1} parent=1 // pred_check_branch
      %44 = sbr.rel (0) target = $region33
    $region32: #{tpu_custom_call.1} parent=1 // pred_region
      %45 = dma.done [#allocation5], 1024
    $region33: #{tpu_custom_call.1} parent=1 // pred_fallthru
      _
    %s46 = sadd.s32 0, 0
    %s47 = smul.u32 8, %s46
    %s48 = sadd.s32 0, 0
    %s49 = smul.u32 8, %s48
    %v50 = vld [vmem:[%s2] sm:$0xff]
    %v51 = vld [vmem:[%s2 + $0x8] sm:$0xff]
    %v52 = vld [vmem:[%s2 + $0x10] sm:$0xff]
    %v53 = vld [vmem:[%s2 + $0x18] sm:$0xff]
    %v54 = vld [vmem:[%s2 + $0x20] sm:$0xff]
    %v55 = vld [vmem:[%s2 + $0x28] sm:$0xff]
    %v56 = vld [vmem:[%s2 + $0x30] sm:$0xff]
    %v57 = vld [vmem:[%s2 + $0x38] sm:$0xff]
    %v58 = vld [vmem:[%s2 + $0x40] sm:$0xff]
    %v59 = vld [vmem:[%s2 + $0x48] sm:$0xff]
    %v60 = vld [vmem:[%s2 + $0x50] sm:$0xff]
    %v61 = vld [vmem:[%s2 + $0x58] sm:$0xff]
    %v62 = vld [vmem:[%s2 + $0x60] sm:$0xff]
    %v63 = vld [vmem:[%s2 + $0x68] sm:$0xff]
    %v64 = vld [vmem:[%s2 + $0x70] sm:$0xff]
    %v65 = vld [vmem:[%s2 + $0x78] sm:$0xff]
    %v66 = vld [vmem:[#allocation4] sm:$0xff]
    %v67 = vld [vmem:[#allocation4 + $0x8] sm:$0xff]
    %v68 = vld [vmem:[#allocation4 + $0x10] sm:$0xff]
    %v69 = vld [vmem:[#allocation4 + $0x18] sm:$0xff]
    %v70 = vld [vmem:[#allocation4 + $0x20] sm:$0xff]
    %v71 = vld [vmem:[#allocation4 + $0x28] sm:$0xff]
    %v72 = vld [vmem:[#allocation4 + $0x30] sm:$0xff]
    %v73 = vld [vmem:[#allocation4 + $0x38] sm:$0xff]
    %vm74 = vcmask 64512
    %v76 = vsel %vm74, %v50, 0
    %v79 = vsel %vm74, %v51, 0
    %v82 = vsel %vm74, %v52, 0
    %v85 = vsel %vm74, %v53, 0
    %v88 = vsel %vm74, %v54, 0
    %v91 = vsel %vm74, %v55, 0
    %v94 = vsel %vm74, %v56, 0
    %v97 = vsel %vm74, %v57, 0
    %v100 = vsel %vm74, %v58, 0
    %v103 = vsel %vm74, %v59, 0
    %v106 = vsel %vm74, %v60, 0
    %v109 = vsel %vm74, %v61, 0
    %v112 = vsel %vm74, %v62, 0
    %v115 = vsel %vm74, %v63, 0
    %v118 = vsel %vm74, %v64, 0
    %v121 = vsel %vm74, %v65, 0
    %123 = vmatprep.subr.mxu0 0.0
    %124 = vmatpush1.msra.mxu0 0.0
    %125 = vmatprep.subr.mxu0 0.0
    %126 = vmatpush1.msra.mxu0 0.0
    %127 = vmatprep.subr.mxu0 0.0
    %128 = vmatpush1.msra.mxu0 0.0
    %129 = vmatprep.subr.mxu0 0.0
    %130 = vmatpush1.msra.mxu0 0.0
    %131 = vmatprep.subr.mxu0 0.0
    %132 = vmatpush1.msra.mxu0 0.0
    %133 = vmatprep.subr.mxu0 0.0
    %134 = vmatpush1.msra.mxu0 0.0
    %135 = vmatprep.subr.mxu0 0.0
    %136 = vmatpush1.msra.mxu0 0.0
    %137 = vmatprep.subr.mxu0 0.0
    %138 = vmatpush1.msra.mxu0 0.0
    %139 = vmatprep.subr.mxu0 0.0
    %140 = vmatpush1.msra.mxu0 0.0
    %141 = vmatprep.subr.mxu0 0.0
    %142 = vmatpush1.msra.mxu0 0.0
    %143 = vmatprep.subr.mxu0 0.0
    %144 = vmatpush1.msra.mxu0 0.0
    %145 = vmatprep.subr.mxu0 0.0
    %146 = vmatpush1.msra.mxu0 0.0
    %147 = vmatprep.subr.mxu0 0.0
    %148 = vmatpush1.msra.mxu0 0.0
    %149 = vmatprep.subr.mxu0 0.0
    %150 = vmatpush1.msra.mxu0 0.0
    %151 = vmatprep.subr.mxu0 0.0
    %152 = vmatpush1.msra.mxu0 0.0
    %153 = vmatprep.subr.mxu0 %v67
    %154 = vmatpush1.msra.mxu0 %v66
    %155 = vmatprep.subr.mxu0 0.0
    %156 = vmatpush2.msra.mxu0 0.0
    %157 = vmatprep.subr.mxu0 0.0
    %158 = vmatpush2.msra.mxu0 0.0
    %159 = vmatprep.subr.mxu0 0.0
    %160 = vmatpush2.msra.mxu0 0.0
    %161 = vmatprep.subr.mxu0 0.0
    %162 = vmatpush2.msra.mxu0 0.0
    %163 = vmatprep.subr.mxu0 0.0
    %164 = vmatpush2.msra.mxu0 0.0
    %165 = vmatprep.subr.mxu0 0.0
    %166 = vmatpush2.msra.mxu0 0.0
    %167 = vmatprep.subr.mxu0 0.0
    %168 = vmatpush2.msra.mxu0 0.0
    %169 = vmatprep.subr.mxu0 0.0
    %170 = vmatpush2.msra.mxu0 0.0
    %171 = vmatprep.subr.mxu0 0.0
    %172 = vmatpush2.msra.mxu0 0.0
    %173 = vmatprep.subr.mxu0 0.0
    %174 = vmatpush2.msra.mxu0 0.0
    %175 = vmatprep.subr.mxu0 0.0
    %176 = vmatpush2.msra.mxu0 0.0
    %177 = vmatprep.subr.mxu0 0.0
    %178 = vmatpush2.msra.mxu0 0.0
    %179 = vmatprep.subr.mxu0 0.0
    %180 = vmatpush2.msra.mxu0 0.0
    %181 = vmatprep.subr.mxu0 0.0
    %182 = vmatpush2.msra.mxu0 0.0
    %183 = vmatprep.subr.mxu0 0.0
    %184 = vmatpush2.msra.mxu0 0.0
    %185 = vmatprep.subr.mxu0 0.0
    %186 = vmatpush2.msra.mxu0 0.0
    %187 = vmatprep.mubr.f32.mxu0 0.0
    %188 = vmatmul.mubr.f32.gmra.mxu0 %v76
    %v189 = vpop.f32.mrf.mxu0
    %v190 = vadd.f32 0.0, %v189
    %v191 = vpop.f32.mrf.mxu0
    %v192 = vadd.f32 0.0, %v191
    %193 = vmatprep.mubr.f32.mxu0 0.0
    %194 = vmatmul.mubr.f32.gmra.mxu0 %v79
    %v195 = vpop.f32.mrf.mxu0
    %v196 = vadd.f32 0.0, %v195
    %v197 = vpop.f32.mrf.mxu0
    %v198 = vadd.f32 0.0, %v197
    %199 = vmatprep.mubr.f32.mxu0 0.0
    %200 = vmatmul.mubr.f32.gmra.mxu0 %v82
    %v201 = vpop.f32.mrf.mxu0
    %v202 = vadd.f32 0.0, %v201
    %v203 = vpop.f32.mrf.mxu0
    %v204 = vadd.f32 0.0, %v203
    %205 = vmatprep.mubr.f32.mxu0 0.0
    %206 = vmatmul.mubr.f32.gmra.mxu0 %v85
    %v207 = vpop.f32.mrf.mxu0
    %v208 = vadd.f32 0.0, %v207
    %v209 = vpop.f32.mrf.mxu0
    %v210 = vadd.f32 0.0, %v209
    %211 = vmatprep.mubr.f32.mxu0 0.0
    %212 = vmatmul.mubr.f32.gmra.mxu0 %v88
    %v213 = vpop.f32.mrf.mxu0
    %v214 = vadd.f32 0.0, %v213
    %v215 = vpop.f32.mrf.mxu0
    %v216 = vadd.f32 0.0, %v215
    %217 = vmatprep.mubr.f32.mxu0 0.0
    %218 = vmatmul.mubr.f32.gmra.mxu0 %v91
    %v219 = vpop.f32.mrf.mxu0
    %v220 = vadd.f32 0.0, %v219
    %v221 = vpop.f32.mrf.mxu0
    %v222 = vadd.f32 0.0, %v221
    %223 = vmatprep.mubr.f32.mxu0 0.0
    %224 = vmatmul.mubr.f32.gmra.mxu0 %v94
    %v225 = vpop.f32.mrf.mxu0
    %v226 = vadd.f32 0.0, %v225
    %v227 = vpop.f32.mrf.mxu0
    %v228 = vadd.f32 0.0, %v227
    %229 = vmatprep.mubr.f32.mxu0 0.0
    %230 = vmatmul.mubr.f32.gmra.mxu0 %v97
    %v231 = vpop.f32.mrf.mxu0
    %v232 = vadd.f32 0.0, %v231
    %v233 = vpop.f32.mrf.mxu0
    %v234 = vadd.f32 0.0, %v233
    %235 = vmatprep.mubr.f32.mxu0 0.0
    %236 = vmatmul.mubr.f32.gmra.mxu0 %v100
    %v237 = vpop.f32.mrf.mxu0
    %v238 = vadd.f32 0.0, %v237
    %v239 = vpop.f32.mrf.mxu0
    %v240 = vadd.f32 0.0, %v239
    %241 = vmatprep.mubr.f32.mxu0 0.0
    %242 = vmatmul.mubr.f32.gmra.mxu0 %v103
    %v243 = vpop.f32.mrf.mxu0
    %v244 = vadd.f32 0.0, %v243
    %v245 = vpop.f32.mrf.mxu0
    %v246 = vadd.f32 0.0, %v245
    %247 = vmatprep.mubr.f32.mxu0 0.0
    %248 = vmatmul.mubr.f32.gmra.mxu0 %v106
    %v249 = vpop.f32.mrf.mxu0
    %v250 = vadd.f32 0.0, %v249
    %v251 = vpop.f32.mrf.mxu0
    %v252 = vadd.f32 0.0, %v251
    %253 = vmatprep.mubr.f32.mxu0 0.0
    %254 = vmatmul.mubr.f32.gmra.mxu0 %v109
    %v255 = vpop.f32.mrf.mxu0
    %v256 = vadd.f32 0.0, %v255
    %v257 = vpop.f32.mrf.mxu0
    %v258 = vadd.f32 0.0, %v257
    %259 = vmatprep.mubr.f32.mxu0 0.0
    %260 = vmatmul.mubr.f32.gmra.mxu0 %v112
    %v261 = vpop.f32.mrf.mxu0
    %v262 = vadd.f32 0.0, %v261
    %v263 = vpop.f32.mrf.mxu0
    %v264 = vadd.f32 0.0, %v263
    %265 = vmatprep.mubr.f32.mxu0 0.0
    %266 = vmatmul.mubr.f32.gmra.mxu0 %v115
    %v267 = vpop.f32.mrf.mxu0
    %v268 = vadd.f32 0.0, %v267
    %v269 = vpop.f32.mrf.mxu0
    %v270 = vadd.f32 0.0, %v269
    %271 = vmatprep.mubr.f32.mxu0 0.0
    %272 = vmatmul.mubr.f32.gmra.mxu0 %v118
    %v273 = vpop.f32.mrf.mxu0
    %v274 = vadd.f32 0.0, %v273
    %v275 = vpop.f32.mrf.mxu0
    %v276 = vadd.f32 0.0, %v275
    %277 = vmatprep.mubr.f32.mxu0 0.0
    %278 = vmatmul.mubr.f32.gmra.mxu0 %v121
    %v279 = vpop.f32.mrf.mxu0
    %v280 = vadd.f32 0.0, %v279
    %v281 = vpop.f32.mrf.mxu0
    %v282 = vadd.f32 0.0, %v281
    %283 = vdwg.mxu0
    %284 = vmatprep.subr.mxu0 0.0
    %285 = vmatpush1.msra.mxu0 0.0
    %286 = vmatprep.subr.mxu0 0.0
    %287 = vmatpush1.msra.mxu0 0.0
    %288 = vmatprep.subr.mxu0 0.0
    %289 = vmatpush1.msra.mxu0 0.0
    %290 = vmatprep.subr.mxu0 0.0
    %291 = vmatpush1.msra.mxu0 0.0
    %292 = vmatprep.subr.mxu0 0.0
    %293 = vmatpush1.msra.mxu0 0.0
    %294 = vmatprep.subr.mxu0 0.0
    %295 = vmatpush1.msra.mxu0 0.0
    %296 = vmatprep.subr.mxu0 0.0
    %297 = vmatpush1.msra.mxu0 0.0
    %298 = vmatprep.subr.mxu0 0.0
    %299 = vmatpush1.msra.mxu0 0.0
    %300 = vmatprep.subr.mxu0 0.0
    %301 = vmatpush1.msra.mxu0 0.0
    %302 = vmatprep.subr.mxu0 0.0
    %303 = vmatpush1.msra.mxu0 0.0
    %304 = vmatprep.subr.mxu0 0.0
    %305 = vmatpush1.msra.mxu0 0.0
    %306 = vmatprep.subr.mxu0 0.0
    %307 = vmatpush1.msra.mxu0 0.0
    %308 = vmatprep.subr.mxu0 0.0
    %309 = vmatpush1.msra.mxu0 0.0
    %310 = vmatprep.subr.mxu0 0.0
    %311 = vmatpush1.msra.mxu0 0.0
    %312 = vmatprep.subr.mxu0 0.0
    %313 = vmatpush1.msra.mxu0 0.0
    %314 = vmatprep.subr.mxu0 %v69
    %315 = vmatpush1.msra.mxu0 %v68
    %316 = vmatprep.subr.mxu0 0.0
    %317 = vmatpush2.msra.mxu0 0.0
    %318 = vmatprep.subr.mxu0 0.0
    %319 = vmatpush2.msra.mxu0 0.0
    %320 = vmatprep.subr.mxu0 0.0
    %321 = vmatpush2.msra.mxu0 0.0
    %322 = vmatprep.subr.mxu0 0.0
    %323 = vmatpush2.msra.mxu0 0.0
    %324 = vmatprep.subr.mxu0 0.0
    %325 = vmatpush2.msra.mxu0 0.0
    %326 = vmatprep.subr.mxu0 0.0
    %327 = vmatpush2.msra.mxu0 0.0
    %328 = vmatprep.subr.mxu0 0.0
    %329 = vmatpush2.msra.mxu0 0.0
    %330 = vmatprep.subr.mxu0 0.0
    %331 = vmatpush2.msra.mxu0 0.0
    %332 = vmatprep.subr.mxu0 0.0
    %333 = vmatpush2.msra.mxu0 0.0
    %334 = vmatprep.subr.mxu0 0.0
    %335 = vmatpush2.msra.mxu0 0.0
    %336 = vmatprep.subr.mxu0 0.0
    %337 = vmatpush2.msra.mxu0 0.0
    %338 = vmatprep.subr.mxu0 0.0
    %339 = vmatpush2.msra.mxu0 0.0
    %340 = vmatprep.subr.mxu0 0.0
    %341 = vmatpush2.msra.mxu0 0.0
    %342 = vmatprep.subr.mxu0 0.0
    %343 = vmatpush2.msra.mxu0 0.0
    %344 = vmatprep.subr.mxu0 0.0
    %345 = vmatpush2.msra.mxu0 0.0
    %346 = vmatprep.subr.mxu0 0.0
    %347 = vmatpush2.msra.mxu0 0.0
    %348 = vmatprep.mubr.f32.mxu0 0.0
    %349 = vmatmul.mubr.f32.gmra.mxu0 %v76
    %v350 = vpop.f32.mrf.mxu0
    %v351 = vadd.f32 0.0, %v350
    %v352 = vpop.f32.mrf.mxu0
    %v353 = vadd.f32 0.0, %v352
    %354 = vmatprep.mubr.f32.mxu0 0.0
    %355 = vmatmul.mubr.f32.gmra.mxu0 %v79
    %v356 = vpop.f32.mrf.mxu0
    %v357 = vadd.f32 0.0, %v356
    %v358 = vpop.f32.mrf.mxu0
    %v359 = vadd.f32 0.0, %v358
    %360 = vmatprep.mubr.f32.mxu0 0.0
    %361 = vmatmul.mubr.f32.gmra.mxu0 %v82
    %v362 = vpop.f32.mrf.mxu0
    %v363 = vadd.f32 0.0, %v362
    %v364 = vpop.f32.mrf.mxu0
    %v365 = vadd.f32 0.0, %v364
    %366 = vmatprep.mubr.f32.mxu0 0.0
    %367 = vmatmul.mubr.f32.gmra.mxu0 %v85
    %v368 = vpop.f32.mrf.mxu0
    %v369 = vadd.f32 0.0, %v368
    %v370 = vpop.f32.mrf.mxu0
    %v371 = vadd.f32 0.0, %v370
    %372 = vmatprep.mubr.f32.mxu0 0.0
    %373 = vmatmul.mubr.f32.gmra.mxu0 %v88
    %v374 = vpop.f32.mrf.mxu0
    %v375 = vadd.f32 0.0, %v374
    %v376 = vpop.f32.mrf.mxu0
    %v377 = vadd.f32 0.0, %v376
    %378 = vmatprep.mubr.f32.mxu0 0.0
    %379 = vmatmul.mubr.f32.gmra.mxu0 %v91
    %v380 = vpop.f32.mrf.mxu0
    %v381 = vadd.f32 0.0, %v380
    %v382 = vpop.f32.mrf.mxu0
    %v383 = vadd.f32 0.0, %v382
    %384 = vmatprep.mubr.f32.mxu0 0.0
    %385 = vmatmul.mubr.f32.gmra.mxu0 %v94
    %v386 = vpop.f32.mrf.mxu0
    %v387 = vadd.f32 0.0, %v386
    %v388 = vpop.f32.mrf.mxu0
    %v389 = vadd.f32 0.0, %v388
    %390 = vmatprep.mubr.f32.mxu0 0.0
    %391 = vmatmul.mubr.f32.gmra.mxu0 %v97
    %v392 = vpop.f32.mrf.mxu0
    %v393 = vadd.f32 0.0, %v392
    %v394 = vpop.f32.mrf.mxu0
    %v395 = vadd.f32 0.0, %v394
    %396 = vmatprep.mubr.f32.mxu0 0.0
    %397 = vmatmul.mubr.f32.gmra.mxu0 %v100
    %v398 = vpop.f32.mrf.mxu0
    %v399 = vadd.f32 0.0, %v398
    %v400 = vpop.f32.mrf.mxu0
    %v401 = vadd.f32 0.0, %v400
    %402 = vmatprep.mubr.f32.mxu0 0.0
    %403 = vmatmul.mubr.f32.gmra.mxu0 %v103
    %v404 = vpop.f32.mrf.mxu0
    %v405 = vadd.f32 0.0, %v404
    %v406 = vpop.f32.mrf.mxu0
    %v407 = vadd.f32 0.0, %v406
    %408 = vmatprep.mubr.f32.mxu0 0.0
    %409 = vmatmul.mubr.f32.gmra.mxu0 %v106
    %v410 = vpop.f32.mrf.mxu0
    %v411 = vadd.f32 0.0, %v410
    %v412 = vpop.f32.mrf.mxu0
    %v413 = vadd.f32 0.0, %v412
    %414 = vmatprep.mubr.f32.mxu0 0.0
    %415 = vmatmul.mubr.f32.gmra.mxu0 %v109
    %v416 = vpop.f32.mrf.mxu0
    %v417 = vadd.f32 0.0, %v416
    %v418 = vpop.f32.mrf.mxu0
    %v419 = vadd.f32 0.0, %v418
    %420 = vmatprep.mubr.f32.mxu0 0.0
    %421 = vmatmul.mubr.f32.gmra.mxu0 %v112
    %v422 = vpop.f32.mrf.mxu0
    %v423 = vadd.f32 0.0, %v422
    %v424 = vpop.f32.mrf.mxu0
    %v425 = vadd.f32 0.0, %v424
    %426 = vmatprep.mubr.f32.mxu0 0.0
    %427 = vmatmul.mubr.f32.gmra.mxu0 %v115
    %v428 = vpop.f32.mrf.mxu0
    %v429 = vadd.f32 0.0, %v428
    %v430 = vpop.f32.mrf.mxu0
    %v431 = vadd.f32 0.0, %v430
    %432 = vmatprep.mubr.f32.mxu0 0.0
    %433 = vmatmul.mubr.f32.gmra.mxu0 %v118
    %v434 = vpop.f32.mrf.mxu0
    %v435 = vadd.f32 0.0, %v434
    %v436 = vpop.f32.mrf.mxu0
    %v437 = vadd.f32 0.0, %v436
    %438 = vmatprep.mubr.f32.mxu0 0.0
    %439 = vmatmul.mubr.f32.gmra.mxu0 %v121
    %v440 = vpop.f32.mrf.mxu0
    %v441 = vadd.f32 0.0, %v440
    %v442 = vpop.f32.mrf.mxu0
    %v443 = vadd.f32 0.0, %v442
    %444 = vdwg.mxu0
    %445 = vmatprep.subr.mxu0 0.0
    %446 = vmatpush1.msra.mxu0 0.0
    %447 = vmatprep.subr.mxu0 0.0
    %448 = vmatpush1.msra.mxu0 0.0
    %449 = vmatprep.subr.mxu0 0.0
    %450 = vmatpush1.msra.mxu0 0.0
    %451 = vmatprep.subr.mxu0 0.0
    %452 = vmatpush1.msra.mxu0 0.0
    %453 = vmatprep.subr.mxu0 0.0
    %454 = vmatpush1.msra.mxu0 0.0
    %455 = vmatprep.subr.mxu0 0.0
    %456 = vmatpush1.msra.mxu0 0.0
    %457 = vmatprep.subr.mxu0 0.0
    %458 = vmatpush1.msra.mxu0 0.0
    %459 = vmatprep.subr.mxu0 0.0
    %460 = vmatpush1.msra.mxu0 0.0
    %461 = vmatprep.subr.mxu0 0.0
    %462 = vmatpush1.msra.mxu0 0.0
    %463 = vmatprep.subr.mxu0 0.0
    %464 = vmatpush1.msra.mxu0 0.0
    %465 = vmatprep.subr.mxu0 0.0
    %466 = vmatpush1.msra.mxu0 0.0
    %467 = vmatprep.subr.mxu0 0.0
    %468 = vmatpush1.msra.mxu0 0.0
    %469 = vmatprep.subr.mxu0 0.0
    %470 = vmatpush1.msra.mxu0 0.0
    %471 = vmatprep.subr.mxu0 0.0
    %472 = vmatpush1.msra.mxu0 0.0
    %473 = vmatprep.subr.mxu0 0.0
    %474 = vmatpush1.msra.mxu0 0.0
    %475 = vmatprep.subr.mxu0 %v71
    %476 = vmatpush1.msra.mxu0 %v70
    %477 = vmatprep.subr.mxu0 0.0
    %478 = vmatpush2.msra.mxu0 0.0
    %479 = vmatprep.subr.mxu0 0.0
    %480 = vmatpush2.msra.mxu0 0.0
    %481 = vmatprep.subr.mxu0 0.0
    %482 = vmatpush2.msra.mxu0 0.0
    %483 = vmatprep.subr.mxu0 0.0
    %484 = vmatpush2.msra.mxu0 0.0
    %485 = vmatprep.subr.mxu0 0.0
    %486 = vmatpush2.msra.mxu0 0.0
    %487 = vmatprep.subr.mxu0 0.0
    %488 = vmatpush2.msra.mxu0 0.0
    %489 = vmatprep.subr.mxu0 0.0
    %490 = vmatpush2.msra.mxu0 0.0
    %491 = vmatprep.subr.mxu0 0.0
    %492 = vmatpush2.msra.mxu0 0.0
    %493 = vmatprep.subr.mxu0 0.0
    %494 = vmatpush2.msra.mxu0 0.0
    %495 = vmatprep.subr.mxu0 0.0
    %496 = vmatpush2.msra.mxu0 0.0
    %497 = vmatprep.subr.mxu0 0.0
    %498 = vmatpush2.msra.mxu0 0.0
    %499 = vmatprep.subr.mxu0 0.0
    %500 = vmatpush2.msra.mxu0 0.0
    %501 = vmatprep.subr.mxu0 0.0
    %502 = vmatpush2.msra.mxu0 0.0
    %503 = vmatprep.subr.mxu0 0.0
    %504 = vmatpush2.msra.mxu0 0.0
    %505 = vmatprep.subr.mxu0 0.0
    %506 = vmatpush2.msra.mxu0 0.0
    %507 = vmatprep.subr.mxu0 0.0
    %508 = vmatpush2.msra.mxu0 0.0
    %509 = vmatprep.mubr.f32.mxu0 0.0
    %510 = vmatmul.mubr.f32.gmra.mxu0 %v76
    %v511 = vpop.f32.mrf.mxu0
    %v512 = vadd.f32 0.0, %v511
    %v513 = vpop.f32.mrf.mxu0
    %v514 = vadd.f32 0.0, %v513
    %515 = vmatprep.mubr.f32.mxu0 0.0
    %516 = vmatmul.mubr.f32.gmra.mxu0 %v79
    %v517 = vpop.f32.mrf.mxu0
    %v518 = vadd.f32 0.0, %v517
    %v519 = vpop.f32.mrf.mxu0
    %v520 = vadd.f32 0.0, %v519
    %521 = vmatprep.mubr.f32.mxu0 0.0
    %522 = vmatmul.mubr.f32.gmra.mxu0 %v82
    %v523 = vpop.f32.mrf.mxu0
    %v524 = vadd.f32 0.0, %v523
    %v525 = vpop.f32.mrf.mxu0
    %v526 = vadd.f32 0.0, %v525
    %527 = vmatprep.mubr.f32.mxu0 0.0
    %528 = vmatmul.mubr.f32.gmra.mxu0 %v85
    %v529 = vpop.f32.mrf.mxu0
    %v530 = vadd.f32 0.0, %v529
    %v531 = vpop.f32.mrf.mxu0
    %v532 = vadd.f32 0.0, %v531
    %533 = vmatprep.mubr.f32.mxu0 0.0
    %534 = vmatmul.mubr.f32.gmra.mxu0 %v88
    %v535 = vpop.f32.mrf.mxu0
    %v536 = vadd.f32 0.0, %v535
    %v537 = vpop.f32.mrf.mxu0
    %v538 = vadd.f32 0.0, %v537
    %539 = vmatprep.mubr.f32.mxu0 0.0
    %540 = vmatmul.mubr.f32.gmra.mxu0 %v91
    %v541 = vpop.f32.mrf.mxu0
    %v542 = vadd.f32 0.0, %v541
    %v543 = vpop.f32.mrf.mxu0
    %v544 = vadd.f32 0.0, %v543
    %545 = vmatprep.mubr.f32.mxu0 0.0
    %546 = vmatmul.mubr.f32.gmra.mxu0 %v94
    %v547 = vpop.f32.mrf.mxu0
    %v548 = vadd.f32 0.0, %v547
    %v549 = vpop.f32.mrf.mxu0
    %v550 = vadd.f32 0.0, %v549
    %551 = vmatprep.mubr.f32.mxu0 0.0
    %552 = vmatmul.mubr.f32.gmra.mxu0 %v97
    %v553 = vpop.f32.mrf.mxu0
    %v554 = vadd.f32 0.0, %v553
    %v555 = vpop.f32.mrf.mxu0
    %v556 = vadd.f32 0.0, %v555
    %557 = vmatprep.mubr.f32.mxu0 0.0
    %558 = vmatmul.mubr.f32.gmra.mxu0 %v100
    %v559 = vpop.f32.mrf.mxu0
    %v560 = vadd.f32 0.0, %v559
    %v561 = vpop.f32.mrf.mxu0
    %v562 = vadd.f32 0.0, %v561
    %563 = vmatprep.mubr.f32.mxu0 0.0
    %564 = vmatmul.mubr.f32.gmra.mxu0 %v103
    %v565 = vpop.f32.mrf.mxu0
    %v566 = vadd.f32 0.0, %v565
    %v567 = vpop.f32.mrf.mxu0
    %v568 = vadd.f32 0.0, %v567
    %569 = vmatprep.mubr.f32.mxu0 0.0
    %570 = vmatmul.mubr.f32.gmra.mxu0 %v106
    %v571 = vpop.f32.mrf.mxu0
    %v572 = vadd.f32 0.0, %v571
    %v573 = vpop.f32.mrf.mxu0
    %v574 = vadd.f32 0.0, %v573
    %575 = vmatprep.mubr.f32.mxu0 0.0
    %576 = vmatmul.mubr.f32.gmra.mxu0 %v109
    %v577 = vpop.f32.mrf.mxu0
    %v578 = vadd.f32 0.0, %v577
    %v579 = vpop.f32.mrf.mxu0
    %v580 = vadd.f32 0.0, %v579
    %581 = vmatprep.mubr.f32.mxu0 0.0
    %582 = vmatmul.mubr.f32.gmra.mxu0 %v112
    %v583 = vpop.f32.mrf.mxu0
    %v584 = vadd.f32 0.0, %v583
    %v585 = vpop.f32.mrf.mxu0
    %v586 = vadd.f32 0.0, %v585
    %587 = vmatprep.mubr.f32.mxu0 0.0
    %588 = vmatmul.mubr.f32.gmra.mxu0 %v115
    %v589 = vpop.f32.mrf.mxu0
    %v590 = vadd.f32 0.0, %v589
    %v591 = vpop.f32.mrf.mxu0
    %v592 = vadd.f32 0.0, %v591
    %593 = vmatprep.mubr.f32.mxu0 0.0
    %594 = vmatmul.mubr.f32.gmra.mxu0 %v118
    %v595 = vpop.f32.mrf.mxu0
    %v596 = vadd.f32 0.0, %v595
    %v597 = vpop.f32.mrf.mxu0
    %v598 = vadd.f32 0.0, %v597
    %599 = vmatprep.mubr.f32.mxu0 0.0
    %600 = vmatmul.mubr.f32.gmra.mxu0 %v121
    %v601 = vpop.f32.mrf.mxu0
    %v602 = vadd.f32 0.0, %v601
    %v603 = vpop.f32.mrf.mxu0
    %v604 = vadd.f32 0.0, %v603
    %605 = vdwg.mxu0
    %606 = vmatprep.subr.mxu0 0.0
    %607 = vmatpush1.msra.mxu0 0.0
    %608 = vmatprep.subr.mxu0 0.0
    %609 = vmatpush1.msra.mxu0 0.0
    %610 = vmatprep.subr.mxu0 0.0
    %611 = vmatpush1.msra.mxu0 0.0
    %612 = vmatprep.subr.mxu0 0.0
    %613 = vmatpush1.msra.mxu0 0.0
    %614 = vmatprep.subr.mxu0 0.0
    %615 = vmatpush1.msra.mxu0 0.0
    %616 = vmatprep.subr.mxu0 0.0
    %617 = vmatpush1.msra.mxu0 0.0
    %618 = vmatprep.subr.mxu0 0.0
    %619 = vmatpush1.msra.mxu0 0.0
    %620 = vmatprep.subr.mxu0 0.0
    %621 = vmatpush1.msra.mxu0 0.0
    %622 = vmatprep.subr.mxu0 0.0
    %623 = vmatpush1.msra.mxu0 0.0
    %624 = vmatprep.subr.mxu0 0.0
    %625 = vmatpush1.msra.mxu0 0.0
    %626 = vmatprep.subr.mxu0 0.0
    %627 = vmatpush1.msra.mxu0 0.0
    %628 = vmatprep.subr.mxu0 0.0
    %629 = vmatpush1.msra.mxu0 0.0
    %630 = vmatprep.subr.mxu0 0.0
    %631 = vmatpush1.msra.mxu0 0.0
    %632 = vmatprep.subr.mxu0 0.0
    %633 = vmatpush1.msra.mxu0 0.0
    %634 = vmatprep.subr.mxu0 0.0
    %635 = vmatpush1.msra.mxu0 0.0
    %636 = vmatprep.subr.mxu0 %v73
    %637 = vmatpush1.msra.mxu0 %v72
    %638 = vmatprep.subr.mxu0 0.0
    %639 = vmatpush2.msra.mxu0 0.0
    %640 = vmatprep.subr.mxu0 0.0
    %641 = vmatpush2.msra.mxu0 0.0
    %642 = vmatprep.subr.mxu0 0.0
    %643 = vmatpush2.msra.mxu0 0.0
    %644 = vmatprep.subr.mxu0 0.0
    %645 = vmatpush2.msra.mxu0 0.0
    %646 = vmatprep.subr.mxu0 0.0
    %647 = vmatpush2.msra.mxu0 0.0
    %648 = vmatprep.subr.mxu0 0.0
    %649 = vmatpush2.msra.mxu0 0.0
    %650 = vmatprep.subr.mxu0 0.0
    %651 = vmatpush2.msra.mxu0 0.0
    %652 = vmatprep.subr.mxu0 0.0
    %653 = vmatpush2.msra.mxu0 0.0
    %654 = vmatprep.subr.mxu0 0.0
    %655 = vmatpush2.msra.mxu0 0.0
    %656 = vmatprep.subr.mxu0 0.0
    %657 = vmatpush2.msra.mxu0 0.0
    %658 = vmatprep.subr.mxu0 0.0
    %659 = vmatpush2.msra.mxu0 0.0
    %660 = vmatprep.subr.mxu0 0.0
    %661 = vmatpush2.msra.mxu0 0.0
    %662 = vmatprep.subr.mxu0 0.0
    %663 = vmatpush2.msra.mxu0 0.0
    %664 = vmatprep.subr.mxu0 0.0
    %665 = vmatpush2.msra.mxu0 0.0
    %666 = vmatprep.subr.mxu0 0.0
    %667 = vmatpush2.msra.mxu0 0.0
    %668 = vmatprep.subr.mxu0 0.0
    %669 = vmatpush2.msra.mxu0 0.0
    %670 = vmatprep.mubr.f32.mxu0 0.0
    %671 = vmatmul.mubr.f32.gmra.mxu0 %v76
    %v672 = vpop.f32.mrf.mxu0
    %v673 = vadd.f32 0.0, %v672
    %v674 = vpop.f32.mrf.mxu0
    %v675 = vadd.f32 0.0, %v674
    %676 = vmatprep.mubr.f32.mxu0 0.0
    %677 = vmatmul.mubr.f32.gmra.mxu0 %v79
    %v678 = vpop.f32.mrf.mxu0
    %v679 = vadd.f32 0.0, %v678
    %v680 = vpop.f32.mrf.mxu0
    %v681 = vadd.f32 0.0, %v680
    %682 = vmatprep.mubr.f32.mxu0 0.0
    %683 = vmatmul.mubr.f32.gmra.mxu0 %v82
    %v684 = vpop.f32.mrf.mxu0
    %v685 = vadd.f32 0.0, %v684
    %v686 = vpop.f32.mrf.mxu0
    %v687 = vadd.f32 0.0, %v686
    %688 = vmatprep.mubr.f32.mxu0 0.0
    %689 = vmatmul.mubr.f32.gmra.mxu0 %v85
    %v690 = vpop.f32.mrf.mxu0
    %v691 = vadd.f32 0.0, %v690
    %v692 = vpop.f32.mrf.mxu0
    %v693 = vadd.f32 0.0, %v692
    %694 = vmatprep.mubr.f32.mxu0 0.0
    %695 = vmatmul.mubr.f32.gmra.mxu0 %v88
    %v696 = vpop.f32.mrf.mxu0
    %v697 = vadd.f32 0.0, %v696
    %v698 = vpop.f32.mrf.mxu0
    %v699 = vadd.f32 0.0, %v698
    %700 = vmatprep.mubr.f32.mxu0 0.0
    %701 = vmatmul.mubr.f32.gmra.mxu0 %v91
    %v702 = vpop.f32.mrf.mxu0
    %v703 = vadd.f32 0.0, %v702
    %v704 = vpop.f32.mrf.mxu0
    %v705 = vadd.f32 0.0, %v704
    %706 = vmatprep.mubr.f32.mxu0 0.0
    %707 = vmatmul.mubr.f32.gmra.mxu0 %v94
    %v708 = vpop.f32.mrf.mxu0
    %v709 = vadd.f32 0.0, %v708
    %v710 = vpop.f32.mrf.mxu0
    %v711 = vadd.f32 0.0, %v710
    %712 = vmatprep.mubr.f32.mxu0 0.0
    %713 = vmatmul.mubr.f32.gmra.mxu0 %v97
    %v714 = vpop.f32.mrf.mxu0
    %v715 = vadd.f32 0.0, %v714
    %v716 = vpop.f32.mrf.mxu0
    %v717 = vadd.f32 0.0, %v716
    %718 = vmatprep.mubr.f32.mxu0 0.0
    %719 = vmatmul.mubr.f32.gmra.mxu0 %v100
    %v720 = vpop.f32.mrf.mxu0
    %v721 = vadd.f32 0.0, %v720
    %v722 = vpop.f32.mrf.mxu0
    %v723 = vadd.f32 0.0, %v722
    %724 = vmatprep.mubr.f32.mxu0 0.0
    %725 = vmatmul.mubr.f32.gmra.mxu0 %v103
    %v726 = vpop.f32.mrf.mxu0
    %v727 = vadd.f32 0.0, %v726
    %v728 = vpop.f32.mrf.mxu0
    %v729 = vadd.f32 0.0, %v728
    %730 = vmatprep.mubr.f32.mxu0 0.0
    %731 = vmatmul.mubr.f32.gmra.mxu0 %v106
    %v732 = vpop.f32.mrf.mxu0
    %v733 = vadd.f32 0.0, %v732
    %v734 = vpop.f32.mrf.mxu0
    %v735 = vadd.f32 0.0, %v734
    %736 = vmatprep.mubr.f32.mxu0 0.0
    %737 = vmatmul.mubr.f32.gmra.mxu0 %v109
    %v738 = vpop.f32.mrf.mxu0
    %v739 = vadd.f32 0.0, %v738
    %v740 = vpop.f32.mrf.mxu0
    %v741 = vadd.f32 0.0, %v740
    %742 = vmatprep.mubr.f32.mxu0 0.0
    %743 = vmatmul.mubr.f32.gmra.mxu0 %v112
    %v744 = vpop.f32.mrf.mxu0
    %v745 = vadd.f32 0.0, %v744
    %v746 = vpop.f32.mrf.mxu0
    %v747 = vadd.f32 0.0, %v746
    %748 = vmatprep.mubr.f32.mxu0 0.0
    %749 = vmatmul.mubr.f32.gmra.mxu0 %v115
    %v750 = vpop.f32.mrf.mxu0
    %v751 = vadd.f32 0.0, %v750
    %v752 = vpop.f32.mrf.mxu0
    %v753 = vadd.f32 0.0, %v752
    %754 = vmatprep.mubr.f32.mxu0 0.0
    %755 = vmatmul.mubr.f32.gmra.mxu0 %v118
    %v756 = vpop.f32.mrf.mxu0
    %v757 = vadd.f32 0.0, %v756
    %v758 = vpop.f32.mrf.mxu0
    %v759 = vadd.f32 0.0, %v758
    %760 = vmatprep.mubr.f32.mxu0 0.0
    %761 = vmatmul.mubr.f32.gmra.mxu0 %v121
    %v762 = vpop.f32.mrf.mxu0
    %v763 = vadd.f32 0.0, %v762
    %v764 = vpop.f32.mrf.mxu0
    %v765 = vadd.f32 0.0, %v764
    %766 = vdwg.mxu0
    %767 = vst [vmem:[#allocation2] sm:$0xff] %v190
    %768 = vst [vmem:[#allocation2 + $0x8] sm:$0xff] %v192
    %769 = vst [vmem:[#allocation2 + $0x10] sm:$0xff] %v351
    %770 = vst [vmem:[#allocation2 + $0x18] sm:$0xff] %v353
    %771 = vst [vmem:[#allocation2 + $0x20] sm:$0xff] %v512
    %772 = vst [vmem:[#allocation2 + $0x28] sm:$0xff] %v514
    %773 = vst [vmem:[#allocation2 + $0x30] sm:$0xff] %v673
    %774 = vst [vmem:[#allocation2 + $0x38] sm:$0xff] %v675
    %775 = vst [vmem:[#allocation2 + $0x40] sm:$0xff] %v196
    %776 = vst [vmem:[#allocation2 + $0x48] sm:$0xff] %v198
    %777 = vst [vmem:[#allocation2 + $0x50] sm:$0xff] %v357
    %778 = vst [vmem:[#allocation2 + $0x58] sm:$0xff] %v359
    %779 = vst [vmem:[#allocation2 + $0x60] sm:$0xff] %v518
    %780 = vst [vmem:[#allocation2 + $0x68] sm:$0xff] %v520
    %781 = vst [vmem:[#allocation2 + $0x70] sm:$0xff] %v679
    %782 = vst [vmem:[#allocation2 + $0x78] sm:$0xff] %v681
    %783 = vst [vmem:[#allocation2 + $0x80] sm:$0xff] %v202
    %784 = vst [vmem:[#allocation2 + $0x88] sm:$0xff] %v204
    %785 = vst [vmem:[#allocation2 + $0x90] sm:$0xff] %v363
    %786 = vst [vmem:[#allocation2 + $0x98] sm:$0xff] %v365
    %787 = vst [vmem:[#allocation2 + $0xa0] sm:$0xff] %v524
    %788 = vst [vmem:[#allocation2 + $0xa8] sm:$0xff] %v526
    %789 = vst [vmem:[#allocation2 + $0xb0] sm:$0xff] %v685
    %790 = vst [vmem:[#allocation2 + $0xb8] sm:$0xff] %v687
    %791 = vst [vmem:[#allocation2 + $0xc0] sm:$0xff] %v208
    %792 = vst [vmem:[#allocation2 + $0xc8] sm:$0xff] %v210
    %793 = vst [vmem:[#allocation2 + $0xd0] sm:$0xff] %v369
    %794 = vst [vmem:[#allocation2 + $0xd8] sm:$0xff] %v371
    %795 = vst [vmem:[#allocation2 + $0xe0] sm:$0xff] %v530
    %796 = vst [vmem:[#allocation2 + $0xe8] sm:$0xff] %v532
    %797 = vst [vmem:[#allocation2 + $0xf0] sm:$0xff] %v691
    %798 = vst [vmem:[#allocation2 + $0xf8] sm:$0xff] %v693
    %799 = vst [vmem:[#allocation2 + $0x100] sm:$0xff] %v214
    %800 = vst [vmem:[#allocation2 + $0x108] sm:$0xff] %v216
    %801 = vst [vmem:[#allocation2 + $0x110] sm:$0xff] %v375
    %802 = vst [vmem:[#allocation2 + $0x118] sm:$0xff] %v377
    %803 = vst [vmem:[#allocation2 + $0x120] sm:$0xff] %v536
    %804 = vst [vmem:[#allocation2 + $0x128] sm:$0xff] %v538
    %805 = vst [vmem:[#allocation2 + $0x130] sm:$0xff] %v697
    %806 = vst [vmem:[#allocation2 + $0x138] sm:$0xff] %v699
    %807 = vst [vmem:[#allocation2 + $0x140] sm:$0xff] %v220
    %808 = vst [vmem:[#allocation2 + $0x148] sm:$0xff] %v222
    %809 = vst [vmem:[#allocation2 + $0x150] sm:$0xff] %v381
    %810 = vst [vmem:[#allocation2 + $0x158] sm:$0xff] %v383
    %811 = vst [vmem:[#allocation2 + $0x160] sm:$0xff] %v542
    %812 = vst [vmem:[#allocation2 + $0x168] sm:$0xff] %v544
    %813 = vst [vmem:[#allocation2 + $0x170] sm:$0xff] %v703
    %814 = vst [vmem:[#allocation2 + $0x178] sm:$0xff] %v705
    %815 = vst [vmem:[#allocation2 + $0x180] sm:$0xff] %v226
    %816 = vst [vmem:[#allocation2 + $0x188] sm:$0xff] %v228
    %817 = vst [vmem:[#allocation2 + $0x190] sm:$0xff] %v387
    %818 = vst [vmem:[#allocation2 + $0x198] sm:$0xff] %v389
    %819 = vst [vmem:[#allocation2 + $0x1a0] sm:$0xff] %v548
    %820 = vst [vmem:[#allocation2 + $0x1a8] sm:$0xff] %v550
    %821 = vst [vmem:[#allocation2 + $0x1b0] sm:$0xff] %v709
    %822 = vst [vmem:[#allocation2 + $0x1b8] sm:$0xff] %v711
    %823 = vst [vmem:[#allocation2 + $0x1c0] sm:$0xff] %v232
    %824 = vst [vmem:[#allocation2 + $0x1c8] sm:$0xff] %v234
    %825 = vst [vmem:[#allocation2 + $0x1d0] sm:$0xff] %v393
    %826 = vst [vmem:[#allocation2 + $0x1d8] sm:$0xff] %v395
    %827 = vst [vmem:[#allocation2 + $0x1e0] sm:$0xff] %v554
    %828 = vst [vmem:[#allocation2 + $0x1e8] sm:$0xff] %v556
    %829 = vst [vmem:[#allocation2 + $0x1f0] sm:$0xff] %v715
    %830 = vst [vmem:[#allocation2 + $0x1f8] sm:$0xff] %v717
    %831 = vst [vmem:[#allocation2 + $0x200] sm:$0xff] %v238
    %832 = vst [vmem:[#allocation2 + $0x208] sm:$0xff] %v240
    %833 = vst [vmem:[#allocation2 + $0x210] sm:$0xff] %v399
    %834 = vst [vmem:[#allocation2 + $0x218] sm:$0xff] %v401
    %835 = vst [vmem:[#allocation2 + $0x220] sm:$0xff] %v560
    %836 = vst [vmem:[#allocation2 + $0x228] sm:$0xff] %v562
    %837 = vst [vmem:[#allocation2 + $0x230] sm:$0xff] %v721
    %838 = vst [vmem:[#allocation2 + $0x238] sm:$0xff] %v723
    %839 = vst [vmem:[#allocation2 + $0x240] sm:$0xff] %v244
    %840 = vst [vmem:[#allocation2 + $0x248] sm:$0xff] %v246
    %841 = vst [vmem:[#allocation2 + $0x250] sm:$0xff] %v405
    %842 = vst [vmem:[#allocation2 + $0x258] sm:$0xff] %v407
    %843 = vst [vmem:[#allocation2 + $0x260] sm:$0xff] %v566
    %844 = vst [vmem:[#allocation2 + $0x268] sm:$0xff] %v568
    %845 = vst [vmem:[#allocation2 + $0x270] sm:$0xff] %v727
    %846 = vst [vmem:[#allocation2 + $0x278] sm:$0xff] %v729
    %847 = vst [vmem:[#allocation2 + $0x280] sm:$0xff] %v250
    %848 = vst [vmem:[#allocation2 + $0x288] sm:$0xff] %v252
    %849 = vst [vmem:[#allocation2 + $0x290] sm:$0xff] %v411
    %850 = vst [vmem:[#allocation2 + $0x298] sm:$0xff] %v413
    %851 = vst [vmem:[#allocation2 + $0x2a0] sm:$0xff] %v572
    %852 = vst [vmem:[#allocation2 + $0x2a8] sm:$0xff] %v574
    %853 = vst [vmem:[#allocation2 + $0x2b0] sm:$0xff] %v733
    %854 = vst [vmem:[#allocation2 + $0x2b8] sm:$0xff] %v735
    %855 = vst [vmem:[#allocation2 + $0x2c0] sm:$0xff] %v256
    %856 = vst [vmem:[#allocation2 + $0x2c8] sm:$0xff] %v258
    %857 = vst [vmem:[#allocation2 + $0x2d0] sm:$0xff] %v417
    %858 = vst [vmem:[#allocation2 + $0x2d8] sm:$0xff] %v419
    %859 = vst [vmem:[#allocation2 + $0x2e0] sm:$0xff] %v578
    %860 = vst [vmem:[#allocation2 + $0x2e8] sm:$0xff] %v580
    %861 = vst [vmem:[#allocation2 + $0x2f0] sm:$0xff] %v739
    %862 = vst [vmem:[#allocation2 + $0x2f8] sm:$0xff] %v741
    %863 = vst [vmem:[#allocation2 + $0x300] sm:$0xff] %v262
    %864 = vst [vmem:[#allocation2 + $0x308] sm:$0xff] %v264
    %865 = vst [vmem:[#allocation2 + $0x310] sm:$0xff] %v423
    %866 = vst [vmem:[#allocation2 + $0x318] sm:$0xff] %v425
    %867 = vst [vmem:[#allocation2 + $0x320] sm:$0xff] %v584
    %868 = vst [vmem:[#allocation2 + $0x328] sm:$0xff] %v586
    %869 = vst [vmem:[#allocation2 + $0x330] sm:$0xff] %v745
    %870 = vst [vmem:[#allocation2 + $0x338] sm:$0xff] %v747
    %871 = vst [vmem:[#allocation2 + $0x340] sm:$0xff] %v268
    %872 = vst [vmem:[#allocation2 + $0x348] sm:$0xff] %v270
    %873 = vst [vmem:[#allocation2 + $0x350] sm:$0xff] %v429
    %874 = vst [vmem:[#allocation2 + $0x358] sm:$0xff] %v431
    %875 = vst [vmem:[#allocation2 + $0x360] sm:$0xff] %v590
    %876 = vst [vmem:[#allocation2 + $0x368] sm:$0xff] %v592
    %877 = vst [vmem:[#allocation2 + $0x370] sm:$0xff] %v751
    %878 = vst [vmem:[#allocation2 + $0x378] sm:$0xff] %v753
    %879 = vst [vmem:[#allocation2 + $0x380] sm:$0xff] %v274
    %880 = vst [vmem:[#allocation2 + $0x388] sm:$0xff] %v276
    %881 = vst [vmem:[#allocation2 + $0x390] sm:$0xff] %v435
    %882 = vst [vmem:[#allocation2 + $0x398] sm:$0xff] %v437
    %883 = vst [vmem:[#allocation2 + $0x3a0] sm:$0xff] %v596
    %884 = vst [vmem:[#allocation2 + $0x3a8] sm:$0xff] %v598
    %885 = vst [vmem:[#allocation2 + $0x3b0] sm:$0xff] %v757
    %886 = vst [vmem:[#allocation2 + $0x3b8] sm:$0xff] %v759
    %887 = vst [vmem:[#allocation2 + $0x3c0] sm:$0xff] %v280
    %888 = vst [vmem:[#allocation2 + $0x3c8] sm:$0xff] %v282
    %889 = vst [vmem:[#allocation2 + $0x3d0] sm:$0xff] %v441
    %890 = vst [vmem:[#allocation2 + $0x3d8] sm:$0xff] %v443
    %891 = vst [vmem:[#allocation2 + $0x3e0] sm:$0xff] %v602
    %892 = vst [vmem:[#allocation2 + $0x3e8] sm:$0xff] %v604
    %893 = vst [vmem:[#allocation2 + $0x3f0] sm:$0xff] %v763
    %894 = vst [vmem:[#allocation2 + $0x3f8] sm:$0xff] %v765
    %p895 = scmp.eq.s32.totalorder 0, 0
    // Predicated region
    $region34: #{tpu_custom_call.1} parent=1 // pred_check
      %p896 = pneg %p895
    $region35: #{tpu_custom_call.1} parent=1 // pred_check_branch
      %898 = sbr.rel (%p896) target = $region37
    $region36: #{tpu_custom_call.1} parent=1 // pred_region
      %v899 = vld [vmem:[%s1] sm:$0xff]
      %v900 = vld [vmem:[%s1 + $0x8] sm:$0xff]
      %v901 = vld [vmem:[%s1 + $0x10] sm:$0xff]
      %v902 = vld [vmem:[%s1 + $0x18] sm:$0xff]
      %v903 = vld [vmem:[%s1 + $0x20] sm:$0xff]
      %v904 = vld [vmem:[%s1 + $0x28] sm:$0xff]
      %v905 = vld [vmem:[%s1 + $0x30] sm:$0xff]
      %v906 = vld [vmem:[%s1 + $0x38] sm:$0xff]
      %v907 = vld [vmem:[%s1 + $0x40] sm:$0xff]
      %v908 = vld [vmem:[%s1 + $0x48] sm:$0xff]
      %v909 = vld [vmem:[%s1 + $0x50] sm:$0xff]
      %v910 = vld [vmem:[%s1 + $0x58] sm:$0xff]
      %v911 = vld [vmem:[%s1 + $0x60] sm:$0xff]
      %v912 = vld [vmem:[%s1 + $0x68] sm:$0xff]
      %v913 = vld [vmem:[%s1 + $0x70] sm:$0xff]
      %v914 = vld [vmem:[%s1 + $0x78] sm:$0xff]
      %915 = vst [vmem:[#allocation3] sm:$0xff] %v899
      %916 = vst [vmem:[#allocation3 + $0x8] sm:$0xff] %v900
      %917 = vst [vmem:[#allocation3 + $0x10] sm:$0xff] %v901
      %918 = vst [vmem:[#allocation3 + $0x18] sm:$0xff] %v902
      %919 = vst [vmem:[#allocation3 + $0x20] sm:$0xff] %v903
      %920 = vst [vmem:[#allocation3 + $0x28] sm:$0xff] %v904
      %921 = vst [vmem:[#allocation3 + $0x30] sm:$0xff] %v905
      %922 = vst [vmem:[#allocation3 + $0x38] sm:$0xff] %v906
      %923 = vst [vmem:[#allocation3 + $0x40] sm:$0xff] %v907
      %924 = vst [vmem:[#allocation3 + $0x48] sm:$0xff] %v908
      %925 = vst [vmem:[#allocation3 + $0x50] sm:$0xff] %v909
      %926 = vst [vmem:[#allocation3 + $0x58] sm:$0xff] %v910
      %927 = vst [vmem:[#allocation3 + $0x60] sm:$0xff] %v911
      %928 = vst [vmem:[#allocation3 + $0x68] sm:$0xff] %v912
      %929 = vst [vmem:[#allocation3 + $0x70] sm:$0xff] %v913
      %930 = vst [vmem:[#allocation3 + $0x78] sm:$0xff] %v914
    $region37: #{tpu_custom_call.1} parent=1 // pred_fallthru
      _
    %v931 = vld [vmem:[%s5] sm:$0xff]
    %v932 = vld [vmem:[%s5 + $0x8] sm:$0xff]
    %v933 = vld [vmem:[%s5 + $0x10] sm:$0xff]
    %v934 = vld [vmem:[%s5 + $0x18] sm:$0xff]
    %v935 = vld [vmem:[%s5 + $0x20] sm:$0xff]
    %v936 = vld [vmem:[%s5 + $0x28] sm:$0xff]
    %v937 = vld [vmem:[%s5 + $0x30] sm:$0xff]
    %v938 = vld [vmem:[%s5 + $0x38] sm:$0xff]
    %v939 = vld [vmem:[%s5 + $0x40] sm:$0xff]
    %v940 = vld [vmem:[%s5 + $0x48] sm:$0xff]
    %v941 = vld [vmem:[%s5 + $0x50] sm:$0xff]
    %v942 = vld [vmem:[%s5 + $0x58] sm:$0xff]
    %v943 = vld [vmem:[%s5 + $0x60] sm:$0xff]
    %v944 = vld [vmem:[%s5 + $0x68] sm:$0xff]
    %v945 = vld [vmem:[%s5 + $0x70] sm:$0xff]
    %v946 = vld [vmem:[%s5 + $0x78] sm:$0xff]
    %948 = vset.pattern.permute.xlu0 0
    %949 = vperm.xlu0 %948, %v931
    %v950 = vpop.permute.xlu0 %949
    %953 = vset.pattern.permute.xlu0 0
    %954 = vperm.xlu0 %953, %v932
    %v955 = vpop.permute.xlu0 %954
    %958 = vset.pattern.permute.xlu0 0
    %959 = vperm.xlu0 %958, %v933
    %v960 = vpop.permute.xlu0 %959
    %963 = vset.pattern.permute.xlu0 0
    %964 = vperm.xlu0 %963, %v934
    %v965 = vpop.permute.xlu0 %964
    %968 = vset.pattern.permute.xlu0 0
    %969 = vperm.xlu0 %968, %v935
    %v970 = vpop.permute.xlu0 %969
    %973 = vset.pattern.permute.xlu0 0
    %974 = vperm.xlu0 %973, %v936
    %v975 = vpop.permute.xlu0 %974
    %978 = vset.pattern.permute.xlu0 0
    %979 = vperm.xlu0 %978, %v937
    %v980 = vpop.permute.xlu0 %979
    %983 = vset.pattern.permute.xlu0 0
    %984 = vperm.xlu0 %983, %v938
    %v985 = vpop.permute.xlu0 %984
    %988 = vset.pattern.permute.xlu0 0
    %989 = vperm.xlu0 %988, %v939
    %v990 = vpop.permute.xlu0 %989
    %993 = vset.pattern.permute.xlu0 0
    %994 = vperm.xlu0 %993, %v940
    %v995 = vpop.permute.xlu0 %994
    %998 = vset.pattern.permute.xlu0 0
    %999 = vperm.xlu0 %998, %v941
    %v1000 = vpop.permute.xlu0 %999
    %1003 = vset.pattern.permute.xlu0 0
    %1004 = vperm.xlu0 %1003, %v942
    %v1005 = vpop.permute.xlu0 %1004
    %1008 = vset.pattern.permute.xlu0 0
    %1009 = vperm.xlu0 %1008, %v943
    %v1010 = vpop.permute.xlu0 %1009
    %1013 = vset.pattern.permute.xlu0 0
    %1014 = vperm.xlu0 %1013, %v944
    %v1015 = vpop.permute.xlu0 %1014
    %1018 = vset.pattern.permute.xlu0 0
    %1019 = vperm.xlu0 %1018, %v945
    %v1020 = vpop.permute.xlu0 %1019
    %1023 = vset.pattern.permute.xlu0 0
    %1024 = vperm.xlu0 %1023, %v946
    %v1025 = vpop.permute.xlu0 %1024
    %v1027 = vld [vmem:[#allocation3] sm:$0xff]
    %v1028 = vld [vmem:[#allocation3 + $0x8] sm:$0xff]
    %v1029 = vld [vmem:[#allocation3 + $0x10] sm:$0xff]
    %v1030 = vld [vmem:[#allocation3 + $0x18] sm:$0xff]
    %v1031 = vld [vmem:[#allocation3 + $0x20] sm:$0xff]
    %v1032 = vld [vmem:[#allocation3 + $0x28] sm:$0xff]
    %v1033 = vld [vmem:[#allocation3 + $0x30] sm:$0xff]
    %v1034 = vld [vmem:[#allocation3 + $0x38] sm:$0xff]
    %v1035 = vld [vmem:[#allocation3 + $0x40] sm:$0xff]
    %v1036 = vld [vmem:[#allocation3 + $0x48] sm:$0xff]
    %v1037 = vld [vmem:[#allocation3 + $0x50] sm:$0xff]
    %v1038 = vld [vmem:[#allocation3 + $0x58] sm:$0xff]
    %v1039 = vld [vmem:[#allocation3 + $0x60] sm:$0xff]
    %v1040 = vld [vmem:[#allocation3 + $0x68] sm:$0xff]
    %v1041 = vld [vmem:[#allocation3 + $0x70] sm:$0xff]
    %v1042 = vld [vmem:[#allocation3 + $0x78] sm:$0xff]
    %v1043 = vld [vmem:[#allocation2] sm:$0xff]
    %v1044 = vld [vmem:[#allocation2 + $0x40] sm:$0xff]
    %v1045 = vld [vmem:[#allocation2 + $0x80] sm:$0xff]
    %v1046 = vld [vmem:[#allocation2 + $0xc0] sm:$0xff]
    %v1047 = vld [vmem:[#allocation2 + $0x100] sm:$0xff]
    %v1048 = vld [vmem:[#allocation2 + $0x140] sm:$0xff]
    %v1049 = vld [vmem:[#allocation2 + $0x180] sm:$0xff]
    %v1050 = vld [vmem:[#allocation2 + $0x1c0] sm:$0xff]
    %v1051 = vld [vmem:[#allocation2 + $0x200] sm:$0xff]
    %v1052 = vld [vmem:[#allocation2 + $0x240] sm:$0xff]
    %v1053 = vld [vmem:[#allocation2 + $0x280] sm:$0xff]
    %v1054 = vld [vmem:[#allocation2 + $0x2c0] sm:$0xff]
    %v1055 = vld [vmem:[#allocation2 + $0x300] sm:$0xff]
    %v1056 = vld [vmem:[#allocation2 + $0x340] sm:$0xff]
    %v1057 = vld [vmem:[#allocation2 + $0x380] sm:$0xff]
    %v1058 = vld [vmem:[#allocation2 + $0x3c0] sm:$0xff]
    %v1059 = vld [vmem:[%s3] sm:$0xff]
    %v1060 = vld [vmem:[%s3 + $0x8] sm:$0xff]
    %v1061 = vld [vmem:[%s3 + $0x10] sm:$0xff]
    %v1062 = vld [vmem:[%s3 + $0x18] sm:$0xff]
    %v1063 = vld [vmem:[%s3 + $0x20] sm:$0xff]
    %v1064 = vld [vmem:[%s3 + $0x28] sm:$0xff]
    %v1065 = vld [vmem:[%s3 + $0x30] sm:$0xff]
    %v1066 = vld [vmem:[%s3 + $0x38] sm:$0xff]
    %v1067 = vld [vmem:[%s3 + $0x40] sm:$0xff]
    %v1068 = vld [vmem:[%s3 + $0x48] sm:$0xff]
    %v1069 = vld [vmem:[%s3 + $0x50] sm:$0xff]
    %v1070 = vld [vmem:[%s3 + $0x58] sm:$0xff]
    %v1071 = vld [vmem:[%s3 + $0x60] sm:$0xff]
    %v1072 = vld [vmem:[%s3 + $0x68] sm:$0xff]
    %v1073 = vld [vmem:[%s3 + $0x70] sm:$0xff]
    %v1074 = vld [vmem:[%s3 + $0x78] sm:$0xff]
    %1075 = vmatprep.subr.mxu0 0.0
    %1076 = vmatpush1.msra.mxu0 %v1042
    %1077 = vmatprep.subr.mxu0 0.0
    %1078 = vmatpush1.msra.mxu0 %v1041
    %1079 = vmatprep.subr.mxu0 0.0
    %1080 = vmatpush1.msra.mxu0 %v1040
    %1081 = vmatprep.subr.mxu0 0.0
    %1082 = vmatpush1.msra.mxu0 %v1039
    %1083 = vmatprep.subr.mxu0 0.0
    %1084 = vmatpush1.msra.mxu0 %v1038
    %1085 = vmatprep.subr.mxu0 0.0
    %1086 = vmatpush1.msra.mxu0 %v1037
    %1087 = vmatprep.subr.mxu0 0.0
    %1088 = vmatpush1.msra.mxu0 %v1036
    %1089 = vmatprep.subr.mxu0 0.0
    %1090 = vmatpush1.msra.mxu0 %v1035
    %1091 = vmatprep.subr.mxu0 0.0
    %1092 = vmatpush1.msra.mxu0 %v1034
    %1093 = vmatprep.subr.mxu0 0.0
    %1094 = vmatpush1.msra.mxu0 %v1033
    %1095 = vmatprep.subr.mxu0 0.0
    %1096 = vmatpush1.msra.mxu0 %v1032
    %1097 = vmatprep.subr.mxu0 0.0
    %1098 = vmatpush1.msra.mxu0 %v1031
    %1099 = vmatprep.subr.mxu0 0.0
    %1100 = vmatpush1.msra.mxu0 %v1030
    %1101 = vmatprep.subr.mxu0 0.0
    %1102 = vmatpush1.msra.mxu0 %v1029
    %1103 = vmatprep.subr.mxu0 0.0
    %1104 = vmatpush1.msra.mxu0 %v1028
    %1105 = vmatprep.subr.mxu0 0.0
    %1106 = vmatpush1.msra.mxu0 %v1027
    %1107 = vmatprep.subr.mxu0 0.0
    %1108 = vmatpush2.msra.mxu0 0.0
    %1109 = vmatprep.subr.mxu0 0.0
    %1110 = vmatpush2.msra.mxu0 0.0
    %1111 = vmatprep.subr.mxu0 0.0
    %1112 = vmatpush2.msra.mxu0 0.0
    %1113 = vmatprep.subr.mxu0 0.0
    %1114 = vmatpush2.msra.mxu0 0.0
    %1115 = vmatprep.subr.mxu0 0.0
    %1116 = vmatpush2.msra.mxu0 0.0
    %1117 = vmatprep.subr.mxu0 0.0
    %1118 = vmatpush2.msra.mxu0 0.0
    %1119 = vmatprep.subr.mxu0 0.0
    %1120 = vmatpush2.msra.mxu0 0.0
    %1121 = vmatprep.subr.mxu0 0.0
    %1122 = vmatpush2.msra.mxu0 0.0
    %1123 = vmatprep.subr.mxu0 0.0
    %1124 = vmatpush2.msra.mxu0 0.0
    %1125 = vmatprep.subr.mxu0 0.0
    %1126 = vmatpush2.msra.mxu0 0.0
    %1127 = vmatprep.subr.mxu0 0.0
    %1128 = vmatpush2.msra.mxu0 0.0
    %1129 = vmatprep.subr.mxu0 0.0
    %1130 = vmatpush2.msra.mxu0 0.0
    %1131 = vmatprep.subr.mxu0 0.0
    %1132 = vmatpush2.msra.mxu0 0.0
    %1133 = vmatprep.subr.mxu0 0.0
    %1134 = vmatpush2.msra.mxu0 0.0
    %1135 = vmatprep.subr.mxu0 0.0
    %1136 = vmatpush2.msra.mxu0 0.0
    %1137 = vmatprep.subr.mxu0 0.0
    %1138 = vmatpush2.msra.mxu0 0.0
    %1139 = vmatprep.mubr.f32.mxu0 0.0
    %1140 = vmatmul.mubr.f32.gmra.mxu0 %v1059
    %v1141 = vpop.f32.mrf.mxu0
    %v1142 = vadd.f32 0.0, %v1141
    %v1143 = vpop.f32.mrf.mxu0
    %1144 = vmatprep.mubr.f32.mxu0 0.0
    %1145 = vmatmul.mubr.f32.gmra.mxu0 %v1060
    %v1146 = vpop.f32.mrf.mxu0
    %v1147 = vadd.f32 0.0, %v1146
    %v1148 = vpop.f32.mrf.mxu0
    %1149 = vmatprep.mubr.f32.mxu0 0.0
    %1150 = vmatmul.mubr.f32.gmra.mxu0 %v1061
    %v1151 = vpop.f32.mrf.mxu0
    %v1152 = vadd.f32 0.0, %v1151
    %v1153 = vpop.f32.mrf.mxu0
    %1154 = vmatprep.mubr.f32.mxu0 0.0
    %1155 = vmatmul.mubr.f32.gmra.mxu0 %v1062
    %v1156 = vpop.f32.mrf.mxu0
    %v1157 = vadd.f32 0.0, %v1156
    %v1158 = vpop.f32.mrf.mxu0
    %1159 = vmatprep.mubr.f32.mxu0 0.0
    %1160 = vmatmul.mubr.f32.gmra.mxu0 %v1063
    %v1161 = vpop.f32.mrf.mxu0
    %v1162 = vadd.f32 0.0, %v1161
    %v1163 = vpop.f32.mrf.mxu0
    %1164 = vmatprep.mubr.f32.mxu0 0.0
    %1165 = vmatmul.mubr.f32.gmra.mxu0 %v1064
    %v1166 = vpop.f32.mrf.mxu0
    %v1167 = vadd.f32 0.0, %v1166
    %v1168 = vpop.f32.mrf.mxu0
    %1169 = vmatprep.mubr.f32.mxu0 0.0
    %1170 = vmatmul.mubr.f32.gmra.mxu0 %v1065
    %v1171 = vpop.f32.mrf.mxu0
    %v1172 = vadd.f32 0.0, %v1171
    %v1173 = vpop.f32.mrf.mxu0
    %1174 = vmatprep.mubr.f32.mxu0 0.0
    %1175 = vmatmul.mubr.f32.gmra.mxu0 %v1066
    %v1176 = vpop.f32.mrf.mxu0
    %v1177 = vadd.f32 0.0, %v1176
    %v1178 = vpop.f32.mrf.mxu0
    %1179 = vmatprep.mubr.f32.mxu0 0.0
    %1180 = vmatmul.mubr.f32.gmra.mxu0 %v1067
    %v1181 = vpop.f32.mrf.mxu0
    %v1182 = vadd.f32 0.0, %v1181
    %v1183 = vpop.f32.mrf.mxu0
    %1184 = vmatprep.mubr.f32.mxu0 0.0
    %1185 = vmatmul.mubr.f32.gmra.mxu0 %v1068
    %v1186 = vpop.f32.mrf.mxu0
    %v1187 = vadd.f32 0.0, %v1186
    %v1188 = vpop.f32.mrf.mxu0
    %1189 = vmatprep.mubr.f32.mxu0 0.0
    %1190 = vmatmul.mubr.f32.gmra.mxu0 %v1069
    %v1191 = vpop.f32.mrf.mxu0
    %v1192 = vadd.f32 0.0, %v1191
    %v1193 = vpop.f32.mrf.mxu0
    %1194 = vmatprep.mubr.f32.mxu0 0.0
    %1195 = vmatmul.mubr.f32.gmra.mxu0 %v1070
    %v1196 = vpop.f32.mrf.mxu0
    %v1197 = vadd.f32 0.0, %v1196
    %v1198 = vpop.f32.mrf.mxu0
    %1199 = vmatprep.mubr.f32.mxu0 0.0
    %1200 = vmatmul.mubr.f32.gmra.mxu0 %v1071
    %v1201 = vpop.f32.mrf.mxu0
    %v1202 = vadd.f32 0.0, %v1201
    %v1203 = vpop.f32.mrf.mxu0
    %1204 = vmatprep.mubr.f32.mxu0 0.0
    %1205 = vmatmul.mubr.f32.gmra.mxu0 %v1072
    %v1206 = vpop.f32.mrf.mxu0
    %v1207 = vadd.f32 0.0, %v1206
    %v1208 = vpop.f32.mrf.mxu0
    %1209 = vmatprep.mubr.f32.mxu0 0.0
    %1210 = vmatmul.mubr.f32.gmra.mxu0 %v1073
    %v1211 = vpop.f32.mrf.mxu0
    %v1212 = vadd.f32 0.0, %v1211
    %v1213 = vpop.f32.mrf.mxu0
    %1214 = vmatprep.mubr.f32.mxu0 0.0
    %1215 = vmatmul.mubr.f32.gmra.mxu0 %v1074
    %v1216 = vpop.f32.mrf.mxu0
    %v1217 = vadd.f32 0.0, %v1216
    %v1218 = vpop.f32.mrf.mxu0
    %1219 = vdwg.mxu0
    %v1220 = vadd.f32 %v1043, %v1142
    %v1221 = vadd.f32 %v1044, %v1147
    %v1222 = vadd.f32 %v1045, %v1152
    %v1223 = vadd.f32 %v1046, %v1157
    %v1224 = vadd.f32 %v1047, %v1162
    %v1225 = vadd.f32 %v1048, %v1167
    %v1226 = vadd.f32 %v1049, %v1172
    %v1227 = vadd.f32 %v1050, %v1177
    %v1228 = vadd.f32 %v1051, %v1182
    %v1229 = vadd.f32 %v1052, %v1187
    %v1230 = vadd.f32 %v1053, %v1192
    %v1231 = vadd.f32 %v1054, %v1197
    %v1232 = vadd.f32 %v1055, %v1202
    %v1233 = vadd.f32 %v1056, %v1207
    %v1234 = vadd.f32 %v1057, %v1212
    %v1235 = vadd.f32 %v1058, %v1217
    %v1236 = vadd.f32 %v1220, %v950
    %v1237 = vadd.f32 %v1221, %v955
    %v1238 = vadd.f32 %v1222, %v960
    %v1239 = vadd.f32 %v1223, %v965
    %v1240 = vadd.f32 %v1224, %v970
    %v1241 = vadd.f32 %v1225, %v975
    %v1242 = vadd.f32 %v1226, %v980
    %v1243 = vadd.f32 %v1227, %v985
    %v1244 = vadd.f32 %v1228, %v990
    %v1245 = vadd.f32 %v1229, %v995
    %v1246 = vadd.f32 %v1230, %v1000
    %v1247 = vadd.f32 %v1231, %v1005
    %v1248 = vadd.f32 %v1232, %v1010
    %v1249 = vadd.f32 %v1233, %v1015
    %v1250 = vadd.f32 %v1234, %v1020
    %v1251 = vadd.f32 %v1235, %v1025
    %v1252 = vtanh.pop %v1236
    %v1253 = vtanh.pop %v1237
    %v1254 = vtanh.pop %v1238
    %v1255 = vtanh.pop %v1239
    %v1256 = vtanh.pop %v1240
    %v1257 = vtanh.pop %v1241
    %v1258 = vtanh.pop %v1242
    %v1259 = vtanh.pop %v1243
    %v1260 = vtanh.pop %v1244
    %v1261 = vtanh.pop %v1245
    %v1262 = vtanh.pop %v1246
    %v1263 = vtanh.pop %v1247
    %v1264 = vtanh.pop %v1248
    %v1265 = vtanh.pop %v1249
    %v1266 = vtanh.pop %v1250
    %v1267 = vtanh.pop %v1251
    %1268 = vst [vmem:[#allocation2] sm:$0xff] %v1252
    %1269 = vst [vmem:[#allocation2 + $0x40] sm:$0xff] %v1253
    %1270 = vst [vmem:[#allocation2 + $0x80] sm:$0xff] %v1254
    %1271 = vst [vmem:[#allocation2 + $0xc0] sm:$0xff] %v1255
    %1272 = vst [vmem:[#allocation2 + $0x100] sm:$0xff] %v1256
    %1273 = vst [vmem:[#allocation2 + $0x140] sm:$0xff] %v1257
    %1274 = vst [vmem:[#allocation2 + $0x180] sm:$0xff] %v1258
    %1275 = vst [vmem:[#allocation2 + $0x1c0] sm:$0xff] %v1259
    %1276 = vst [vmem:[#allocation2 + $0x200] sm:$0xff] %v1260
    %1277 = vst [vmem:[#allocation2 + $0x240] sm:$0xff] %v1261
    %1278 = vst [vmem:[#allocation2 + $0x280] sm:$0xff] %v1262
    %1279 = vst [vmem:[#allocation2 + $0x2c0] sm:$0xff] %v1263
    %1280 = vst [vmem:[#allocation2 + $0x300] sm:$0xff] %v1264
    %1281 = vst [vmem:[#allocation2 + $0x340] sm:$0xff] %v1265
    %1282 = vst [vmem:[#allocation2 + $0x380] sm:$0xff] %v1266
    %1283 = vst [vmem:[#allocation2 + $0x3c0] sm:$0xff] %v1267
    %s1284 = scalar_lea.vmem [#allocation2], 8
    %v1285 = vld [vmem:[%s1284] sm:$0xff]
    %v1286 = vld [vmem:[%s1284 + $0x40] sm:$0xff]
    %v1287 = vld [vmem:[%s1284 + $0x80] sm:$0xff]
    %v1288 = vld [vmem:[%s1284 + $0xc0] sm:$0xff]
    %v1289 = vld [vmem:[%s1284 + $0x100] sm:$0xff]
    %v1290 = vld [vmem:[%s1284 + $0x140] sm:$0xff]
    %v1291 = vld [vmem:[%s1284 + $0x180] sm:$0xff]
    %v1292 = vld [vmem:[%s1284 + $0x1c0] sm:$0xff]
    %v1293 = vld [vmem:[%s1284 + $0x200] sm:$0xff]
    %v1294 = vld [vmem:[%s1284 + $0x240] sm:$0xff]
    %v1295 = vld [vmem:[%s1284 + $0x280] sm:$0xff]
    %v1296 = vld [vmem:[%s1284 + $0x2c0] sm:$0xff]
    %v1297 = vld [vmem:[%s1284 + $0x300] sm:$0xff]
    %v1298 = vld [vmem:[%s1284 + $0x340] sm:$0xff]
    %v1299 = vld [vmem:[%s1284 + $0x380] sm:$0xff]
    %v1300 = vld [vmem:[%s1284 + $0x3c0] sm:$0xff]
    %v1301 = vld [vmem:[%s3] sm:$0xff]
    %v1302 = vld [vmem:[%s3 + $0x8] sm:$0xff]
    %v1303 = vld [vmem:[%s3 + $0x10] sm:$0xff]
    %v1304 = vld [vmem:[%s3 + $0x18] sm:$0xff]
    %v1305 = vld [vmem:[%s3 + $0x20] sm:$0xff]
    %v1306 = vld [vmem:[%s3 + $0x28] sm:$0xff]
    %v1307 = vld [vmem:[%s3 + $0x30] sm:$0xff]
    %v1308 = vld [vmem:[%s3 + $0x38] sm:$0xff]
    %v1309 = vld [vmem:[%s3 + $0x40] sm:$0xff]
    %v1310 = vld [vmem:[%s3 + $0x48] sm:$0xff]
    %v1311 = vld [vmem:[%s3 + $0x50] sm:$0xff]
    %v1312 = vld [vmem:[%s3 + $0x58] sm:$0xff]
    %v1313 = vld [vmem:[%s3 + $0x60] sm:$0xff]
    %v1314 = vld [vmem:[%s3 + $0x68] sm:$0xff]
    %v1315 = vld [vmem:[%s3 + $0x70] sm:$0xff]
    %v1316 = vld [vmem:[%s3 + $0x78] sm:$0xff]
    %1317 = vmatprep.subr.mxu0 0.0
    %1318 = vmatpush1.msra.mxu0 %v1267
    %1319 = vmatprep.subr.mxu0 0.0
    %1320 = vmatpush1.msra.mxu0 %v1266
    %1321 = vmatprep.subr.mxu0 0.0
    %1322 = vmatpush1.msra.mxu0 %v1265
    %1323 = vmatprep.subr.mxu0 0.0
    %1324 = vmatpush1.msra.mxu0 %v1264
    %1325 = vmatprep.subr.mxu0 0.0
    %1326 = vmatpush1.msra.mxu0 %v1263
    %1327 = vmatprep.subr.mxu0 0.0
    %1328 = vmatpush1.msra.mxu0 %v1262
    %1329 = vmatprep.subr.mxu0 0.0
    %1330 = vmatpush1.msra.mxu0 %v1261
    %1331 = vmatprep.subr.mxu0 0.0
    %1332 = vmatpush1.msra.mxu0 %v1260
    %1333 = vmatprep.subr.mxu0 0.0
    %1334 = vmatpush1.msra.mxu0 %v1259
    %1335 = vmatprep.subr.mxu0 0.0
    %1336 = vmatpush1.msra.mxu0 %v1258
    %1337 = vmatprep.subr.mxu0 0.0
    %1338 = vmatpush1.msra.mxu0 %v1257
    %1339 = vmatprep.subr.mxu0 0.0
    %1340 = vmatpush1.msra.mxu0 %v1256
    %1341 = vmatprep.subr.mxu0 0.0
    %1342 = vmatpush1.msra.mxu0 %v1255
    %1343 = vmatprep.subr.mxu0 0.0
    %1344 = vmatpush1.msra.mxu0 %v1254
    %1345 = vmatprep.subr.mxu0 0.0
    %1346 = vmatpush1.msra.mxu0 %v1253
    %1347 = vmatprep.subr.mxu0 0.0
    %1348 = vmatpush1.msra.mxu0 %v1252
    %1349 = vmatprep.subr.mxu0 0.0
    %1350 = vmatpush2.msra.mxu0 0.0
    %1351 = vmatprep.subr.mxu0 0.0
    %1352 = vmatpush2.msra.mxu0 0.0
    %1353 = vmatprep.subr.mxu0 0.0
    %1354 = vmatpush2.msra.mxu0 0.0
    %1355 = vmatprep.subr.mxu0 0.0
    %1356 = vmatpush2.msra.mxu0 0.0
    %1357 = vmatprep.subr.mxu0 0.0
    %1358 = vmatpush2.msra.mxu0 0.0
    %1359 = vmatprep.subr.mxu0 0.0
    %1360 = vmatpush2.msra.mxu0 0.0
    %1361 = vmatprep.subr.mxu0 0.0
    %1362 = vmatpush2.msra.mxu0 0.0
    %1363 = vmatprep.subr.mxu0 0.0
    %1364 = vmatpush2.msra.mxu0 0.0
    %1365 = vmatprep.subr.mxu0 0.0
    %1366 = vmatpush2.msra.mxu0 0.0
    %1367 = vmatprep.subr.mxu0 0.0
    %1368 = vmatpush2.msra.mxu0 0.0
    %1369 = vmatprep.subr.mxu0 0.0
    %1370 = vmatpush2.msra.mxu0 0.0
    %1371 = vmatprep.subr.mxu0 0.0
    %1372 = vmatpush2.msra.mxu0 0.0
    %1373 = vmatprep.subr.mxu0 0.0
    %1374 = vmatpush2.msra.mxu0 0.0
    %1375 = vmatprep.subr.mxu0 0.0
    %1376 = vmatpush2.msra.mxu0 0.0
    %1377 = vmatprep.subr.mxu0 0.0
    %1378 = vmatpush2.msra.mxu0 0.0
    %1379 = vmatprep.subr.mxu0 0.0
    %1380 = vmatpush2.msra.mxu0 0.0
    %1381 = vmatprep.mubr.f32.mxu0 0.0
    %1382 = vmatmul.mubr.f32.gmra.mxu0 %v1301
    %v1383 = vpop.f32.mrf.mxu0
    %v1384 = vadd.f32 0.0, %v1383
    %v1385 = vpop.f32.mrf.mxu0
    %1386 = vmatprep.mubr.f32.mxu0 0.0
    %1387 = vmatmul.mubr.f32.gmra.mxu0 %v1302
    %v1388 = vpop.f32.mrf.mxu0
    %v1389 = vadd.f32 0.0, %v1388
    %v1390 = vpop.f32.mrf.mxu0
    %1391 = vmatprep.mubr.f32.mxu0 0.0
    %1392 = vmatmul.mubr.f32.gmra.mxu0 %v1303
    %v1393 = vpop.f32.mrf.mxu0
    %v1394 = vadd.f32 0.0, %v1393
    %v1395 = vpop.f32.mrf.mxu0
    %1396 = vmatprep.mubr.f32.mxu0 0.0
    %1397 = vmatmul.mubr.f32.gmra.mxu0 %v1304
    %v1398 = vpop.f32.mrf.mxu0
    %v1399 = vadd.f32 0.0, %v1398
    %v1400 = vpop.f32.mrf.mxu0
    %1401 = vmatprep.mubr.f32.mxu0 0.0
    %1402 = vmatmul.mubr.f32.gmra.mxu0 %v1305
    %v1403 = vpop.f32.mrf.mxu0
    %v1404 = vadd.f32 0.0, %v1403
    %v1405 = vpop.f32.mrf.mxu0
    %1406 = vmatprep.mubr.f32.mxu0 0.0
    %1407 = vmatmul.mubr.f32.gmra.mxu0 %v1306
    %v1408 = vpop.f32.mrf.mxu0
    %v1409 = vadd.f32 0.0, %v1408
    %v1410 = vpop.f32.mrf.mxu0
    %1411 = vmatprep.mubr.f32.mxu0 0.0
    %1412 = vmatmul.mubr.f32.gmra.mxu0 %v1307
    %v1413 = vpop.f32.mrf.mxu0
    %v1414 = vadd.f32 0.0, %v1413
    %v1415 = vpop.f32.mrf.mxu0
    %1416 = vmatprep.mubr.f32.mxu0 0.0
    %1417 = vmatmul.mubr.f32.gmra.mxu0 %v1308
    %v1418 = vpop.f32.mrf.mxu0
    %v1419 = vadd.f32 0.0, %v1418
    %v1420 = vpop.f32.mrf.mxu0
    %1421 = vmatprep.mubr.f32.mxu0 0.0
    %1422 = vmatmul.mubr.f32.gmra.mxu0 %v1309
    %v1423 = vpop.f32.mrf.mxu0
    %v1424 = vadd.f32 0.0, %v1423
    %v1425 = vpop.f32.mrf.mxu0
    %1426 = vmatprep.mubr.f32.mxu0 0.0
    %1427 = vmatmul.mubr.f32.gmra.mxu0 %v1310
    %v1428 = vpop.f32.mrf.mxu0
    %v1429 = vadd.f32 0.0, %v1428
    %v1430 = vpop.f32.mrf.mxu0
    %1431 = vmatprep.mubr.f32.mxu0 0.0
    %1432 = vmatmul.mubr.f32.gmra.mxu0 %v1311
    %v1433 = vpop.f32.mrf.mxu0
    %v1434 = vadd.f32 0.0, %v1433
    %v1435 = vpop.f32.mrf.mxu0
    %1436 = vmatprep.mubr.f32.mxu0 0.0
    %1437 = vmatmul.mubr.f32.gmra.mxu0 %v1312
    %v1438 = vpop.f32.mrf.mxu0
    %v1439 = vadd.f32 0.0, %v1438
    %v1440 = vpop.f32.mrf.mxu0
    %1441 = vmatprep.mubr.f32.mxu0 0.0
    %1442 = vmatmul.mubr.f32.gmra.mxu0 %v1313
    %v1443 = vpop.f32.mrf.mxu0
    %v1444 = vadd.f32 0.0, %v1443
    %v1445 = vpop.f32.mrf.mxu0
    %1446 = vmatprep.mubr.f32.mxu0 0.0
    %1447 = vmatmul.mubr.f32.gmra.mxu0 %v1314
    %v1448 = vpop.f32.mrf.mxu0
    %v1449 = vadd.f32 0.0, %v1448
    %v1450 = vpop.f32.mrf.mxu0
    %1451 = vmatprep.mubr.f32.mxu0 0.0
    %1452 = vmatmul.mubr.f32.gmra.mxu0 %v1315
    %v1453 = vpop.f32.mrf.mxu0
    %v1454 = vadd.f32 0.0, %v1453
    %v1455 = vpop.f32.mrf.mxu0
    %1456 = vmatprep.mubr.f32.mxu0 0.0
    %1457 = vmatmul.mubr.f32.gmra.mxu0 %v1316
    %v1458 = vpop.f32.mrf.mxu0
    %v1459 = vadd.f32 0.0, %v1458
    %v1460 = vpop.f32.mrf.mxu0
    %1461 = vdwg.mxu0
    %v1462 = vadd.f32 %v1285, %v1384
    %v1463 = vadd.f32 %v1286, %v1389
    %v1464 = vadd.f32 %v1287, %v1394
    %v1465 = vadd.f32 %v1288, %v1399
    %v1466 = vadd.f32 %v1289, %v1404
    %v1467 = vadd.f32 %v1290, %v1409
    %v1468 = vadd.f32 %v1291, %v1414
    %v1469 = vadd.f32 %v1292, %v1419
    %v1470 = vadd.f32 %v1293, %v1424
    %v1471 = vadd.f32 %v1294, %v1429
    %v1472 = vadd.f32 %v1295, %v1434
    %v1473 = vadd.f32 %v1296, %v1439
    %v1474 = vadd.f32 %v1297, %v1444
    %v1475 = vadd.f32 %v1298, %v1449
    %v1476 = vadd.f32 %v1299, %v1454
    %v1477 = vadd.f32 %v1300, %v1459
    %v1478 = vadd.f32 %v1462, %v950
    %v1479 = vadd.f32 %v1463, %v955
    %v1480 = vadd.f32 %v1464, %v960
    %v1481 = vadd.f32 %v1465, %v965
    %v1482 = vadd.f32 %v1466, %v970
    %v1483 = vadd.f32 %v1467, %v975
    %v1484 = vadd.f32 %v1468, %v980
    %v1485 = vadd.f32 %v1469, %v985
    %v1486 = vadd.f32 %v1470, %v990
    %v1487 = vadd.f32 %v1471, %v995
    %v1488 = vadd.f32 %v1472, %v1000
    %v1489 = vadd.f32 %v1473, %v1005
    %v1490 = vadd.f32 %v1474, %v1010
    %v1491 = vadd.f32 %v1475, %v1015
    %v1492 = vadd.f32 %v1476, %v1020
    %v1493 = vadd.f32 %v1477, %v1025
    %v1494 = vtanh.pop %v1478
    %v1495 = vtanh.pop %v1479
    %v1496 = vtanh.pop %v1480
    %v1497 = vtanh.pop %v1481
    %v1498 = vtanh.pop %v1482
    %v1499 = vtanh.pop %v1483
    %v1500 = vtanh.pop %v1484
    %v1501 = vtanh.pop %v1485
    %v1502 = vtanh.pop %v1486
    %v1503 = vtanh.pop %v1487
    %v1504 = vtanh.pop %v1488
    %v1505 = vtanh.pop %v1489
    %v1506 = vtanh.pop %v1490
    %v1507 = vtanh.pop %v1491
    %v1508 = vtanh.pop %v1492
    %v1509 = vtanh.pop %v1493
    %1510 = vst [vmem:[%s1284] sm:$0xff] %v1494
    %1511 = vst [vmem:[%s1284 + $0x40] sm:$0xff] %v1495
    %1512 = vst [vmem:[%s1284 + $0x80] sm:$0xff] %v1496
    %1513 = vst [vmem:[%s1284 + $0xc0] sm:$0xff] %v1497
    %1514 = vst [vmem:[%s1284 + $0x100] sm:$0xff] %v1498
    %1515 = vst [vmem:[%s1284 + $0x140] sm:$0xff] %v1499
    %1516 = vst [vmem:[%s1284 + $0x180] sm:$0xff] %v1500
    %1517 = vst [vmem:[%s1284 + $0x1c0] sm:$0xff] %v1501
    %1518 = vst [vmem:[%s1284 + $0x200] sm:$0xff] %v1502
    %1519 = vst [vmem:[%s1284 + $0x240] sm:$0xff] %v1503
    %1520 = vst [vmem:[%s1284 + $0x280] sm:$0xff] %v1504
    %1521 = vst [vmem:[%s1284 + $0x2c0] sm:$0xff] %v1505
    %1522 = vst [vmem:[%s1284 + $0x300] sm:$0xff] %v1506
    %1523 = vst [vmem:[%s1284 + $0x340] sm:$0xff] %v1507
    %1524 = vst [vmem:[%s1284 + $0x380] sm:$0xff] %v1508
    %1525 = vst [vmem:[%s1284 + $0x3c0] sm:$0xff] %v1509
    %s1526 = scalar_lea.vmem [#allocation2], 16
    %v1527 = vld [vmem:[%s1526] sm:$0xff]
    %v1528 = vld [vmem:[%s1526 + $0x40] sm:$0xff]
    %v1529 = vld [vmem:[%s1526 + $0x80] sm:$0xff]
    %v1530 = vld [vmem:[%s1526 + $0xc0] sm:$0xff]
    %v1531 = vld [vmem:[%s1526 + $0x100] sm:$0xff]
    %v1532 = vld [vmem:[%s1526 + $0x140] sm:$0xff]
    %v1533 = vld [vmem:[%s1526 + $0x180] sm:$0xff]
    %v1534 = vld [vmem:[%s1526 + $0x1c0] sm:$0xff]
    %v1535 = vld [vmem:[%s1526 + $0x200] sm:$0xff]
    %v1536 = vld [vmem:[%s1526 + $0x240] sm:$0xff]
    %v1537 = vld [vmem:[%s1526 + $0x280] sm:$0xff]
    %v1538 = vld [vmem:[%s1526 + $0x2c0] sm:$0xff]
    %v1539 = vld [vmem:[%s1526 + $0x300] sm:$0xff]
    %v1540 = vld [vmem:[%s1526 + $0x340] sm:$0xff]
    %v1541 = vld [vmem:[%s1526 + $0x380] sm:$0xff]
    %v1542 = vld [vmem:[%s1526 + $0x3c0] sm:$0xff]
    %v1543 = vld [vmem:[%s3] sm:$0xff]
    %v1544 = vld [vmem:[%s3 + $0x8] sm:$0xff]
    %v1545 = vld [vmem:[%s3 + $0x10] sm:$0xff]
    %v1546 = vld [vmem:[%s3 + $0x18] sm:$0xff]
    %v1547 = vld [vmem:[%s3 + $0x20] sm:$0xff]
    %v1548 = vld [vmem:[%s3 + $0x28] sm:$0xff]
    %v1549 = vld [vmem:[%s3 + $0x30] sm:$0xff]
    %v1550 = vld [vmem:[%s3 + $0x38] sm:$0xff]
    %v1551 = vld [vmem:[%s3 + $0x40] sm:$0xff]
    %v1552 = vld [vmem:[%s3 + $0x48] sm:$0xff]
    %v1553 = vld [vmem:[%s3 + $0x50] sm:$0xff]
    %v1554 = vld [vmem:[%s3 + $0x58] sm:$0xff]
    %v1555 = vld [vmem:[%s3 + $0x60] sm:$0xff]
    %v1556 = vld [vmem:[%s3 + $0x68] sm:$0xff]
    %v1557 = vld [vmem:[%s3 + $0x70] sm:$0xff]
    %v1558 = vld [vmem:[%s3 + $0x78] sm:$0xff]
    %1559 = vmatprep.subr.mxu0 0.0
    %1560 = vmatpush1.msra.mxu0 %v1509
    %1561 = vmatprep.subr.mxu0 0.0
    %1562 = vmatpush1.msra.mxu0 %v1508
    %1563 = vmatprep.subr.mxu0 0.0
    %1564 = vmatpush1.msra.mxu0 %v1507
    %1565 = vmatprep.subr.mxu0 0.0
    %1566 = vmatpush1.msra.mxu0 %v1506
    %1567 = vmatprep.subr.mxu0 0.0
    %1568 = vmatpush1.msra.mxu0 %v1505
    %1569 = vmatprep.subr.mxu0 0.0
    %1570 = vmatpush1.msra.mxu0 %v1504
    %1571 = vmatprep.subr.mxu0 0.0
    %1572 = vmatpush1.msra.mxu0 %v1503
    %1573 = vmatprep.subr.mxu0 0.0
    %1574 = vmatpush1.msra.mxu0 %v1502
    %1575 = vmatprep.subr.mxu0 0.0
    %1576 = vmatpush1.msra.mxu0 %v1501
    %1577 = vmatprep.subr.mxu0 0.0
    %1578 = vmatpush1.msra.mxu0 %v1500
    %1579 = vmatprep.subr.mxu0 0.0
    %1580 = vmatpush1.msra.mxu0 %v1499
    %1581 = vmatprep.subr.mxu0 0.0
    %1582 = vmatpush1.msra.mxu0 %v1498
    %1583 = vmatprep.subr.mxu0 0.0
    %1584 = vmatpush1.msra.mxu0 %v1497
    %1585 = vmatprep.subr.mxu0 0.0
    %1586 = vmatpush1.msra.mxu0 %v1496
    %1587 = vmatprep.subr.mxu0 0.0
    %1588 = vmatpush1.msra.mxu0 %v1495
    %1589 = vmatprep.subr.mxu0 0.0
    %1590 = vmatpush1.msra.mxu0 %v1494
    %1591 = vmatprep.subr.mxu0 0.0
    %1592 = vmatpush2.msra.mxu0 0.0
    %1593 = vmatprep.subr.mxu0 0.0
    %1594 = vmatpush2.msra.mxu0 0.0
    %1595 = vmatprep.subr.mxu0 0.0
    %1596 = vmatpush2.msra.mxu0 0.0
    %1597 = vmatprep.subr.mxu0 0.0
    %1598 = vmatpush2.msra.mxu0 0.0
    %1599 = vmatprep.subr.mxu0 0.0
    %1600 = vmatpush2.msra.mxu0 0.0
    %1601 = vmatprep.subr.mxu0 0.0
    %1602 = vmatpush2.msra.mxu0 0.0
    %1603 = vmatprep.subr.mxu0 0.0
    %1604 = vmatpush2.msra.mxu0 0.0
    %1605 = vmatprep.subr.mxu0 0.0
    %1606 = vmatpush2.msra.mxu0 0.0
    %1607 = vmatprep.subr.mxu0 0.0
    %1608 = vmatpush2.msra.mxu0 0.0
    %1609 = vmatprep.subr.mxu0 0.0
    %1610 = vmatpush2.msra.mxu0 0.0
    %1611 = vmatprep.subr.mxu0 0.0
    %1612 = vmatpush2.msra.mxu0 0.0
    %1613 = vmatprep.subr.mxu0 0.0
    %1614 = vmatpush2.msra.mxu0 0.0
    %1615 = vmatprep.subr.mxu0 0.0
    %1616 = vmatpush2.msra.mxu0 0.0
    %1617 = vmatprep.subr.mxu0 0.0
    %1618 = vmatpush2.msra.mxu0 0.0
    %1619 = vmatprep.subr.mxu0 0.0
    %1620 = vmatpush2.msra.mxu0 0.0
    %1621 = vmatprep.subr.mxu0 0.0
    %1622 = vmatpush2.msra.mxu0 0.0
    %1623 = vmatprep.mubr.f32.mxu0 0.0
    %1624 = vmatmul.mubr.f32.gmra.mxu0 %v1543
    %v1625 = vpop.f32.mrf.mxu0
    %v1626 = vadd.f32 0.0, %v1625
    %v1627 = vpop.f32.mrf.mxu0
    %1628 = vmatprep.mubr.f32.mxu0 0.0
    %1629 = vmatmul.mubr.f32.gmra.mxu0 %v1544
    %v1630 = vpop.f32.mrf.mxu0
    %v1631 = vadd.f32 0.0, %v1630
    %v1632 = vpop.f32.mrf.mxu0
    %1633 = vmatprep.mubr.f32.mxu0 0.0
    %1634 = vmatmul.mubr.f32.gmra.mxu0 %v1545
    %v1635 = vpop.f32.mrf.mxu0
    %v1636 = vadd.f32 0.0, %v1635
    %v1637 = vpop.f32.mrf.mxu0
    %1638 = vmatprep.mubr.f32.mxu0 0.0
    %1639 = vmatmul.mubr.f32.gmra.mxu0 %v1546
    %v1640 = vpop.f32.mrf.mxu0
    %v1641 = vadd.f32 0.0, %v1640
    %v1642 = vpop.f32.mrf.mxu0
    %1643 = vmatprep.mubr.f32.mxu0 0.0
    %1644 = vmatmul.mubr.f32.gmra.mxu0 %v1547
    %v1645 = vpop.f32.mrf.mxu0
    %v1646 = vadd.f32 0.0, %v1645
    %v1647 = vpop.f32.mrf.mxu0
    %1648 = vmatprep.mubr.f32.mxu0 0.0
    %1649 = vmatmul.mubr.f32.gmra.mxu0 %v1548
    %v1650 = vpop.f32.mrf.mxu0
    %v1651 = vadd.f32 0.0, %v1650
    %v1652 = vpop.f32.mrf.mxu0
    %1653 = vmatprep.mubr.f32.mxu0 0.0
    %1654 = vmatmul.mubr.f32.gmra.mxu0 %v1549
    %v1655 = vpop.f32.mrf.mxu0
    %v1656 = vadd.f32 0.0, %v1655
    %v1657 = vpop.f32.mrf.mxu0
    %1658 = vmatprep.mubr.f32.mxu0 0.0
    %1659 = vmatmul.mubr.f32.gmra.mxu0 %v1550
    %v1660 = vpop.f32.mrf.mxu0
    %v1661 = vadd.f32 0.0, %v1660
    %v1662 = vpop.f32.mrf.mxu0
    %1663 = vmatprep.mubr.f32.mxu0 0.0
    %1664 = vmatmul.mubr.f32.gmra.mxu0 %v1551
    %v1665 = vpop.f32.mrf.mxu0
    %v1666 = vadd.f32 0.0, %v1665
    %v1667 = vpop.f32.mrf.mxu0
    %1668 = vmatprep.mubr.f32.mxu0 0.0
    %1669 = vmatmul.mubr.f32.gmra.mxu0 %v1552
    %v1670 = vpop.f32.mrf.mxu0
    %v1671 = vadd.f32 0.0, %v1670
    %v1672 = vpop.f32.mrf.mxu0
    %1673 = vmatprep.mubr.f32.mxu0 0.0
    %1674 = vmatmul.mubr.f32.gmra.mxu0 %v1553
    %v1675 = vpop.f32.mrf.mxu0
    %v1676 = vadd.f32 0.0, %v1675
    %v1677 = vpop.f32.mrf.mxu0
    %1678 = vmatprep.mubr.f32.mxu0 0.0
    %1679 = vmatmul.mubr.f32.gmra.mxu0 %v1554
    %v1680 = vpop.f32.mrf.mxu0
    %v1681 = vadd.f32 0.0, %v1680
    %v1682 = vpop.f32.mrf.mxu0
    %1683 = vmatprep.mubr.f32.mxu0 0.0
    %1684 = vmatmul.mubr.f32.gmra.mxu0 %v1555
    %v1685 = vpop.f32.mrf.mxu0
    %v1686 = vadd.f32 0.0, %v1685
    %v1687 = vpop.f32.mrf.mxu0
    %1688 = vmatprep.mubr.f32.mxu0 0.0
    %1689 = vmatmul.mubr.f32.gmra.mxu0 %v1556
    %v1690 = vpop.f32.mrf.mxu0
    %v1691 = vadd.f32 0.0, %v1690
    %v1692 = vpop.f32.mrf.mxu0
    %1693 = vmatprep.mubr.f32.mxu0 0.0
    %1694 = vmatmul.mubr.f32.gmra.mxu0 %v1557
    %v1695 = vpop.f32.mrf.mxu0
    %v1696 = vadd.f32 0.0, %v1695
    %v1697 = vpop.f32.mrf.mxu0
    %1698 = vmatprep.mubr.f32.mxu0 0.0
    %1699 = vmatmul.mubr.f32.gmra.mxu0 %v1558
    %v1700 = vpop.f32.mrf.mxu0
    %v1701 = vadd.f32 0.0, %v1700
    %v1702 = vpop.f32.mrf.mxu0
    %1703 = vdwg.mxu0
    %v1704 = vadd.f32 %v1527, %v1626
    %v1705 = vadd.f32 %v1528, %v1631
    %v1706 = vadd.f32 %v1529, %v1636
    %v1707 = vadd.f32 %v1530, %v1641
    %v1708 = vadd.f32 %v1531, %v1646
    %v1709 = vadd.f32 %v1532, %v1651
    %v1710 = vadd.f32 %v1533, %v1656
    %v1711 = vadd.f32 %v1534, %v1661
    %v1712 = vadd.f32 %v1535, %v1666
    %v1713 = vadd.f32 %v1536, %v1671
    %v1714 = vadd.f32 %v1537, %v1676
    %v1715 = vadd.f32 %v1538, %v1681
    %v1716 = vadd.f32 %v1539, %v1686
    %v1717 = vadd.f32 %v1540, %v1691
    %v1718 = vadd.f32 %v1541, %v1696
    %v1719 = vadd.f32 %v1542, %v1701
    %v1720 = vadd.f32 %v1704, %v950
    %v1721 = vadd.f32 %v1705, %v955
    %v1722 = vadd.f32 %v1706, %v960
    %v1723 = vadd.f32 %v1707, %v965
    %v1724 = vadd.f32 %v1708, %v970
    %v1725 = vadd.f32 %v1709, %v975
    %v1726 = vadd.f32 %v1710, %v980
    %v1727 = vadd.f32 %v1711, %v985
    %v1728 = vadd.f32 %v1712, %v990
    %v1729 = vadd.f32 %v1713, %v995
    %v1730 = vadd.f32 %v1714, %v1000
    %v1731 = vadd.f32 %v1715, %v1005
    %v1732 = vadd.f32 %v1716, %v1010
    %v1733 = vadd.f32 %v1717, %v1015
    %v1734 = vadd.f32 %v1718, %v1020
    %v1735 = vadd.f32 %v1719, %v1025
    %v1736 = vtanh.pop %v1720
    %v1737 = vtanh.pop %v1721
    %v1738 = vtanh.pop %v1722
    %v1739 = vtanh.pop %v1723
    %v1740 = vtanh.pop %v1724
    %v1741 = vtanh.pop %v1725
    %v1742 = vtanh.pop %v1726
    %v1743 = vtanh.pop %v1727
    %v1744 = vtanh.pop %v1728
    %v1745 = vtanh.pop %v1729
    %v1746 = vtanh.pop %v1730
    %v1747 = vtanh.pop %v1731
    %v1748 = vtanh.pop %v1732
    %v1749 = vtanh.pop %v1733
    %v1750 = vtanh.pop %v1734
    %v1751 = vtanh.pop %v1735
    %1752 = vst [vmem:[%s1526] sm:$0xff] %v1736
    %1753 = vst [vmem:[%s1526 + $0x40] sm:$0xff] %v1737
    %1754 = vst [vmem:[%s1526 + $0x80] sm:$0xff] %v1738
    %1755 = vst [vmem:[%s1526 + $0xc0] sm:$0xff] %v1739
    %1756 = vst [vmem:[%s1526 + $0x100] sm:$0xff] %v1740
    %1757 = vst [vmem:[%s1526 + $0x140] sm:$0xff] %v1741
    %1758 = vst [vmem:[%s1526 + $0x180] sm:$0xff] %v1742
    %1759 = vst [vmem:[%s1526 + $0x1c0] sm:$0xff] %v1743
    %1760 = vst [vmem:[%s1526 + $0x200] sm:$0xff] %v1744
    %1761 = vst [vmem:[%s1526 + $0x240] sm:$0xff] %v1745
    %1762 = vst [vmem:[%s1526 + $0x280] sm:$0xff] %v1746
    %1763 = vst [vmem:[%s1526 + $0x2c0] sm:$0xff] %v1747
    %1764 = vst [vmem:[%s1526 + $0x300] sm:$0xff] %v1748
    %1765 = vst [vmem:[%s1526 + $0x340] sm:$0xff] %v1749
    %1766 = vst [vmem:[%s1526 + $0x380] sm:$0xff] %v1750
    %1767 = vst [vmem:[%s1526 + $0x3c0] sm:$0xff] %v1751
    %s1768 = scalar_lea.vmem [#allocation2], 24
    %v1769 = vld [vmem:[%s1768] sm:$0xff]
    %v1770 = vld [vmem:[%s1768 + $0x40] sm:$0xff]
    %v1771 = vld [vmem:[%s1768 + $0x80] sm:$0xff]
    %v1772 = vld [vmem:[%s1768 + $0xc0] sm:$0xff]
    %v1773 = vld [vmem:[%s1768 + $0x100] sm:$0xff]
    %v1774 = vld [vmem:[%s1768 + $0x140] sm:$0xff]
    %v1775 = vld [vmem:[%s1768 + $0x180] sm:$0xff]
    %v1776 = vld [vmem:[%s1768 + $0x1c0] sm:$0xff]
    %v1777 = vld [vmem:[%s1768 + $0x200] sm:$0xff]
    %v1778 = vld [vmem:[%s1768 + $0x240] sm:$0xff]
    %v1779 = vld [vmem:[%s1768 + $0x280] sm:$0xff]
    %v1780 = vld [vmem:[%s1768 + $0x2c0] sm:$0xff]
    %v1781 = vld [vmem:[%s1768 + $0x300] sm:$0xff]
    %v1782 = vld [vmem:[%s1768 + $0x340] sm:$0xff]
    %v1783 = vld [vmem:[%s1768 + $0x380] sm:$0xff]
    %v1784 = vld [vmem:[%s1768 + $0x3c0] sm:$0xff]
    %v1785 = vld [vmem:[%s3] sm:$0xff]
    %v1786 = vld [vmem:[%s3 + $0x8] sm:$0xff]
    %v1787 = vld [vmem:[%s3 + $0x10] sm:$0xff]
    %v1788 = vld [vmem:[%s3 + $0x18] sm:$0xff]
    %v1789 = vld [vmem:[%s3 + $0x20] sm:$0xff]
    %v1790 = vld [vmem:[%s3 + $0x28] sm:$0xff]
    %v1791 = vld [vmem:[%s3 + $0x30] sm:$0xff]
    %v1792 = vld [vmem:[%s3 + $0x38] sm:$0xff]
    %v1793 = vld [vmem:[%s3 + $0x40] sm:$0xff]
    %v1794 = vld [vmem:[%s3 + $0x48] sm:$0xff]
    %v1795 = vld [vmem:[%s3 + $0x50] sm:$0xff]
    %v1796 = vld [vmem:[%s3 + $0x58] sm:$0xff]
    %v1797 = vld [vmem:[%s3 + $0x60] sm:$0xff]
    %v1798 = vld [vmem:[%s3 + $0x68] sm:$0xff]
    %v1799 = vld [vmem:[%s3 + $0x70] sm:$0xff]
    %v1800 = vld [vmem:[%s3 + $0x78] sm:$0xff]
    %1801 = vmatprep.subr.mxu0 0.0
    %1802 = vmatpush1.msra.mxu0 %v1751
    %1803 = vmatprep.subr.mxu0 0.0
    %1804 = vmatpush1.msra.mxu0 %v1750
    %1805 = vmatprep.subr.mxu0 0.0
    %1806 = vmatpush1.msra.mxu0 %v1749
    %1807 = vmatprep.subr.mxu0 0.0
    %1808 = vmatpush1.msra.mxu0 %v1748
    %1809 = vmatprep.subr.mxu0 0.0
    %1810 = vmatpush1.msra.mxu0 %v1747
    %1811 = vmatprep.subr.mxu0 0.0
    %1812 = vmatpush1.msra.mxu0 %v1746
    %1813 = vmatprep.subr.mxu0 0.0
    %1814 = vmatpush1.msra.mxu0 %v1745
    %1815 = vmatprep.subr.mxu0 0.0
    %1816 = vmatpush1.msra.mxu0 %v1744
    %1817 = vmatprep.subr.mxu0 0.0
    %1818 = vmatpush1.msra.mxu0 %v1743
    %1819 = vmatprep.subr.mxu0 0.0
    %1820 = vmatpush1.msra.mxu0 %v1742
    %1821 = vmatprep.subr.mxu0 0.0
    %1822 = vmatpush1.msra.mxu0 %v1741
    %1823 = vmatprep.subr.mxu0 0.0
    %1824 = vmatpush1.msra.mxu0 %v1740
    %1825 = vmatprep.subr.mxu0 0.0
    %1826 = vmatpush1.msra.mxu0 %v1739
    %1827 = vmatprep.subr.mxu0 0.0
    %1828 = vmatpush1.msra.mxu0 %v1738
    %1829 = vmatprep.subr.mxu0 0.0
    %1830 = vmatpush1.msra.mxu0 %v1737
    %1831 = vmatprep.subr.mxu0 0.0
    %1832 = vmatpush1.msra.mxu0 %v1736
    %1833 = vmatprep.subr.mxu0 0.0
    %1834 = vmatpush2.msra.mxu0 0.0
    %1835 = vmatprep.subr.mxu0 0.0
    %1836 = vmatpush2.msra.mxu0 0.0
    %1837 = vmatprep.subr.mxu0 0.0
    %1838 = vmatpush2.msra.mxu0 0.0
    %1839 = vmatprep.subr.mxu0 0.0
    %1840 = vmatpush2.msra.mxu0 0.0
    %1841 = vmatprep.subr.mxu0 0.0
    %1842 = vmatpush2.msra.mxu0 0.0
    %1843 = vmatprep.subr.mxu0 0.0
    %1844 = vmatpush2.msra.mxu0 0.0
    %1845 = vmatprep.subr.mxu0 0.0
    %1846 = vmatpush2.msra.mxu0 0.0
    %1847 = vmatprep.subr.mxu0 0.0
    %1848 = vmatpush2.msra.mxu0 0.0
    %1849 = vmatprep.subr.mxu0 0.0
    %1850 = vmatpush2.msra.mxu0 0.0
    %1851 = vmatprep.subr.mxu0 0.0
    %1852 = vmatpush2.msra.mxu0 0.0
    %1853 = vmatprep.subr.mxu0 0.0
    %1854 = vmatpush2.msra.mxu0 0.0
    %1855 = vmatprep.subr.mxu0 0.0
    %1856 = vmatpush2.msra.mxu0 0.0
    %1857 = vmatprep.subr.mxu0 0.0
    %1858 = vmatpush2.msra.mxu0 0.0
    %1859 = vmatprep.subr.mxu0 0.0
    %1860 = vmatpush2.msra.mxu0 0.0
    %1861 = vmatprep.subr.mxu0 0.0
    %1862 = vmatpush2.msra.mxu0 0.0
    %1863 = vmatprep.subr.mxu0 0.0
    %1864 = vmatpush2.msra.mxu0 0.0
    %1865 = vmatprep.mubr.f32.mxu0 0.0
    %1866 = vmatmul.mubr.f32.gmra.mxu0 %v1785
    %v1867 = vpop.f32.mrf.mxu0
    %v1868 = vadd.f32 0.0, %v1867
    %v1869 = vpop.f32.mrf.mxu0
    %1870 = vmatprep.mubr.f32.mxu0 0.0
    %1871 = vmatmul.mubr.f32.gmra.mxu0 %v1786
    %v1872 = vpop.f32.mrf.mxu0
    %v1873 = vadd.f32 0.0, %v1872
    %v1874 = vpop.f32.mrf.mxu0
    %1875 = vmatprep.mubr.f32.mxu0 0.0
    %1876 = vmatmul.mubr.f32.gmra.mxu0 %v1787
    %v1877 = vpop.f32.mrf.mxu0
    %v1878 = vadd.f32 0.0, %v1877
    %v1879 = vpop.f32.mrf.mxu0
    %1880 = vmatprep.mubr.f32.mxu0 0.0
    %1881 = vmatmul.mubr.f32.gmra.mxu0 %v1788
    %v1882 = vpop.f32.mrf.mxu0
    %v1883 = vadd.f32 0.0, %v1882
    %v1884 = vpop.f32.mrf.mxu0
    %1885 = vmatprep.mubr.f32.mxu0 0.0
    %1886 = vmatmul.mubr.f32.gmra.mxu0 %v1789
    %v1887 = vpop.f32.mrf.mxu0
    %v1888 = vadd.f32 0.0, %v1887
    %v1889 = vpop.f32.mrf.mxu0
    %1890 = vmatprep.mubr.f32.mxu0 0.0
    %1891 = vmatmul.mubr.f32.gmra.mxu0 %v1790
    %v1892 = vpop.f32.mrf.mxu0
    %v1893 = vadd.f32 0.0, %v1892
    %v1894 = vpop.f32.mrf.mxu0
    %1895 = vmatprep.mubr.f32.mxu0 0.0
    %1896 = vmatmul.mubr.f32.gmra.mxu0 %v1791
    %v1897 = vpop.f32.mrf.mxu0
    %v1898 = vadd.f32 0.0, %v1897
    %v1899 = vpop.f32.mrf.mxu0
    %1900 = vmatprep.mubr.f32.mxu0 0.0
    %1901 = vmatmul.mubr.f32.gmra.mxu0 %v1792
    %v1902 = vpop.f32.mrf.mxu0
    %v1903 = vadd.f32 0.0, %v1902
    %v1904 = vpop.f32.mrf.mxu0
    %1905 = vmatprep.mubr.f32.mxu0 0.0
    %1906 = vmatmul.mubr.f32.gmra.mxu0 %v1793
    %v1907 = vpop.f32.mrf.mxu0
    %v1908 = vadd.f32 0.0, %v1907
    %v1909 = vpop.f32.mrf.mxu0
    %1910 = vmatprep.mubr.f32.mxu0 0.0
    %1911 = vmatmul.mubr.f32.gmra.mxu0 %v1794
    %v1912 = vpop.f32.mrf.mxu0
    %v1913 = vadd.f32 0.0, %v1912
    %v1914 = vpop.f32.mrf.mxu0
    %1915 = vmatprep.mubr.f32.mxu0 0.0
    %1916 = vmatmul.mubr.f32.gmra.mxu0 %v1795
    %v1917 = vpop.f32.mrf.mxu0
    %v1918 = vadd.f32 0.0, %v1917
    %v1919 = vpop.f32.mrf.mxu0
    %1920 = vmatprep.mubr.f32.mxu0 0.0
    %1921 = vmatmul.mubr.f32.gmra.mxu0 %v1796
    %v1922 = vpop.f32.mrf.mxu0
    %v1923 = vadd.f32 0.0, %v1922
    %v1924 = vpop.f32.mrf.mxu0
    %1925 = vmatprep.mubr.f32.mxu0 0.0
    %1926 = vmatmul.mubr.f32.gmra.mxu0 %v1797
    %v1927 = vpop.f32.mrf.mxu0
    %v1928 = vadd.f32 0.0, %v1927
    %v1929 = vpop.f32.mrf.mxu0
    %1930 = vmatprep.mubr.f32.mxu0 0.0
    %1931 = vmatmul.mubr.f32.gmra.mxu0 %v1798
    %v1932 = vpop.f32.mrf.mxu0
    %v1933 = vadd.f32 0.0, %v1932
    %v1934 = vpop.f32.mrf.mxu0
    %1935 = vmatprep.mubr.f32.mxu0 0.0
    %1936 = vmatmul.mubr.f32.gmra.mxu0 %v1799
    %v1937 = vpop.f32.mrf.mxu0
    %v1938 = vadd.f32 0.0, %v1937
    %v1939 = vpop.f32.mrf.mxu0
    %1940 = vmatprep.mubr.f32.mxu0 0.0
    %1941 = vmatmul.mubr.f32.gmra.mxu0 %v1800
    %v1942 = vpop.f32.mrf.mxu0
    %v1943 = vadd.f32 0.0, %v1942
    %v1944 = vpop.f32.mrf.mxu0
    %1945 = vdwg.mxu0
    %v1946 = vadd.f32 %v1769, %v1868
    %v1947 = vadd.f32 %v1770, %v1873
    %v1948 = vadd.f32 %v1771, %v1878
    %v1949 = vadd.f32 %v1772, %v1883
    %v1950 = vadd.f32 %v1773, %v1888
    %v1951 = vadd.f32 %v1774, %v1893
    %v1952 = vadd.f32 %v1775, %v1898
    %v1953 = vadd.f32 %v1776, %v1903
    %v1954 = vadd.f32 %v1777, %v1908
    %v1955 = vadd.f32 %v1778, %v1913
    %v1956 = vadd.f32 %v1779, %v1918
    %v1957 = vadd.f32 %v1780, %v1923
    %v1958 = vadd.f32 %v1781, %v1928
    %v1959 = vadd.f32 %v1782, %v1933
    %v1960 = vadd.f32 %v1783, %v1938
    %v1961 = vadd.f32 %v1784, %v1943
    %v1962 = vadd.f32 %v1946, %v950
    %v1963 = vadd.f32 %v1947, %v955
    %v1964 = vadd.f32 %v1948, %v960
    %v1965 = vadd.f32 %v1949, %v965
    %v1966 = vadd.f32 %v1950, %v970
    %v1967 = vadd.f32 %v1951, %v975
    %v1968 = vadd.f32 %v1952, %v980
    %v1969 = vadd.f32 %v1953, %v985
    %v1970 = vadd.f32 %v1954, %v990
    %v1971 = vadd.f32 %v1955, %v995
    %v1972 = vadd.f32 %v1956, %v1000
    %v1973 = vadd.f32 %v1957, %v1005
    %v1974 = vadd.f32 %v1958, %v1010
    %v1975 = vadd.f32 %v1959, %v1015
    %v1976 = vadd.f32 %v1960, %v1020
    %v1977 = vadd.f32 %v1961, %v1025
    %v1978 = vtanh.pop %v1962
    %v1979 = vtanh.pop %v1963
    %v1980 = vtanh.pop %v1964
    %v1981 = vtanh.pop %v1965
    %v1982 = vtanh.pop %v1966
    %v1983 = vtanh.pop %v1967
    %v1984 = vtanh.pop %v1968
    %v1985 = vtanh.pop %v1969
    %v1986 = vtanh.pop %v1970
    %v1987 = vtanh.pop %v1971
    %v1988 = vtanh.pop %v1972
    %v1989 = vtanh.pop %v1973
    %v1990 = vtanh.pop %v1974
    %v1991 = vtanh.pop %v1975
    %v1992 = vtanh.pop %v1976
    %v1993 = vtanh.pop %v1977
    %1994 = vst [vmem:[%s1768] sm:$0xff] %v1978
    %1995 = vst [vmem:[%s1768 + $0x40] sm:$0xff] %v1979
    %1996 = vst [vmem:[%s1768 + $0x80] sm:$0xff] %v1980
    %1997 = vst [vmem:[%s1768 + $0xc0] sm:$0xff] %v1981
    %1998 = vst [vmem:[%s1768 + $0x100] sm:$0xff] %v1982
    %1999 = vst [vmem:[%s1768 + $0x140] sm:$0xff] %v1983
    %2000 = vst [vmem:[%s1768 + $0x180] sm:$0xff] %v1984
    %2001 = vst [vmem:[%s1768 + $0x1c0] sm:$0xff] %v1985
    %2002 = vst [vmem:[%s1768 + $0x200] sm:$0xff] %v1986
    %2003 = vst [vmem:[%s1768 + $0x240] sm:$0xff] %v1987
    %2004 = vst [vmem:[%s1768 + $0x280] sm:$0xff] %v1988
    %2005 = vst [vmem:[%s1768 + $0x2c0] sm:$0xff] %v1989
    %2006 = vst [vmem:[%s1768 + $0x300] sm:$0xff] %v1990
    %2007 = vst [vmem:[%s1768 + $0x340] sm:$0xff] %v1991
    %2008 = vst [vmem:[%s1768 + $0x380] sm:$0xff] %v1992
    %2009 = vst [vmem:[%s1768 + $0x3c0] sm:$0xff] %v1993
    %s2010 = scalar_lea.vmem [#allocation2], 32
    %v2011 = vld [vmem:[%s2010] sm:$0xff]
    %v2012 = vld [vmem:[%s2010 + $0x40] sm:$0xff]
    %v2013 = vld [vmem:[%s2010 + $0x80] sm:$0xff]
    %v2014 = vld [vmem:[%s2010 + $0xc0] sm:$0xff]
    %v2015 = vld [vmem:[%s2010 + $0x100] sm:$0xff]
    %v2016 = vld [vmem:[%s2010 + $0x140] sm:$0xff]
    %v2017 = vld [vmem:[%s2010 + $0x180] sm:$0xff]
    %v2018 = vld [vmem:[%s2010 + $0x1c0] sm:$0xff]
    %v2019 = vld [vmem:[%s2010 + $0x200] sm:$0xff]
    %v2020 = vld [vmem:[%s2010 + $0x240] sm:$0xff]
    %v2021 = vld [vmem:[%s2010 + $0x280] sm:$0xff]
    %v2022 = vld [vmem:[%s2010 + $0x2c0] sm:$0xff]
    %v2023 = vld [vmem:[%s2010 + $0x300] sm:$0xff]
    %v2024 = vld [vmem:[%s2010 + $0x340] sm:$0xff]
    %v2025 = vld [vmem:[%s2010 + $0x380] sm:$0xff]
    %v2026 = vld [vmem:[%s2010 + $0x3c0] sm:$0xff]
    %v2027 = vld [vmem:[%s3] sm:$0xff]
    %v2028 = vld [vmem:[%s3 + $0x8] sm:$0xff]
    %v2029 = vld [vmem:[%s3 + $0x10] sm:$0xff]
    %v2030 = vld [vmem:[%s3 + $0x18] sm:$0xff]
    %v2031 = vld [vmem:[%s3 + $0x20] sm:$0xff]
    %v2032 = vld [vmem:[%s3 + $0x28] sm:$0xff]
    %v2033 = vld [vmem:[%s3 + $0x30] sm:$0xff]
    %v2034 = vld [vmem:[%s3 + $0x38] sm:$0xff]
    %v2035 = vld [vmem:[%s3 + $0x40] sm:$0xff]
    %v2036 = vld [vmem:[%s3 + $0x48] sm:$0xff]
    %v2037 = vld [vmem:[%s3 + $0x50] sm:$0xff]
    %v2038 = vld [vmem:[%s3 + $0x58] sm:$0xff]
    %v2039 = vld [vmem:[%s3 + $0x60] sm:$0xff]
    %v2040 = vld [vmem:[%s3 + $0x68] sm:$0xff]
    %v2041 = vld [vmem:[%s3 + $0x70] sm:$0xff]
    %v2042 = vld [vmem:[%s3 + $0x78] sm:$0xff]
    %2043 = vmatprep.subr.mxu0 0.0
    %2044 = vmatpush1.msra.mxu0 %v1993
    %2045 = vmatprep.subr.mxu0 0.0
    %2046 = vmatpush1.msra.mxu0 %v1992
    %2047 = vmatprep.subr.mxu0 0.0
    %2048 = vmatpush1.msra.mxu0 %v1991
    %2049 = vmatprep.subr.mxu0 0.0
    %2050 = vmatpush1.msra.mxu0 %v1990
    %2051 = vmatprep.subr.mxu0 0.0
    %2052 = vmatpush1.msra.mxu0 %v1989
    %2053 = vmatprep.subr.mxu0 0.0
    %2054 = vmatpush1.msra.mxu0 %v1988
    %2055 = vmatprep.subr.mxu0 0.0
    %2056 = vmatpush1.msra.mxu0 %v1987
    %2057 = vmatprep.subr.mxu0 0.0
    %2058 = vmatpush1.msra.mxu0 %v1986
    %2059 = vmatprep.subr.mxu0 0.0
    %2060 = vmatpush1.msra.mxu0 %v1985
    %2061 = vmatprep.subr.mxu0 0.0
    %2062 = vmatpush1.msra.mxu0 %v1984
    %2063 = vmatprep.subr.mxu0 0.0
    %2064 = vmatpush1.msra.mxu0 %v1983
    %2065 = vmatprep.subr.mxu0 0.0
    %2066 = vmatpush1.msra.mxu0 %v1982
    %2067 = vmatprep.subr.mxu0 0.0
    %2068 = vmatpush1.msra.mxu0 %v1981
    %2069 = vmatprep.subr.mxu0 0.0
    %2070 = vmatpush1.msra.mxu0 %v1980
    %2071 = vmatprep.subr.mxu0 0.0
    %2072 = vmatpush1.msra.mxu0 %v1979
    %2073 = vmatprep.subr.mxu0 0.0
    %2074 = vmatpush1.msra.mxu0 %v1978
    %2075 = vmatprep.subr.mxu0 0.0
    %2076 = vmatpush2.msra.mxu0 0.0
    %2077 = vmatprep.subr.mxu0 0.0
    %2078 = vmatpush2.msra.mxu0 0.0
    %2079 = vmatprep.subr.mxu0 0.0
    %2080 = vmatpush2.msra.mxu0 0.0
    %2081 = vmatprep.subr.mxu0 0.0
    %2082 = vmatpush2.msra.mxu0 0.0
    %2083 = vmatprep.subr.mxu0 0.0
    %2084 = vmatpush2.msra.mxu0 0.0
    %2085 = vmatprep.subr.mxu0 0.0
    %2086 = vmatpush2.msra.mxu0 0.0
    %2087 = vmatprep.subr.mxu0 0.0
    %2088 = vmatpush2.msra.mxu0 0.0
    %2089 = vmatprep.subr.mxu0 0.0
    %2090 = vmatpush2.msra.mxu0 0.0
    %2091 = vmatprep.subr.mxu0 0.0
    %2092 = vmatpush2.msra.mxu0 0.0
    %2093 = vmatprep.subr.mxu0 0.0
    %2094 = vmatpush2.msra.mxu0 0.0
    %2095 = vmatprep.subr.mxu0 0.0
    %2096 = vmatpush2.msra.mxu0 0.0
    %2097 = vmatprep.subr.mxu0 0.0
    %2098 = vmatpush2.msra.mxu0 0.0
    %2099 = vmatprep.subr.mxu0 0.0
    %2100 = vmatpush2.msra.mxu0 0.0
    %2101 = vmatprep.subr.mxu0 0.0
    %2102 = vmatpush2.msra.mxu0 0.0
    %2103 = vmatprep.subr.mxu0 0.0
    %2104 = vmatpush2.msra.mxu0 0.0
    %2105 = vmatprep.subr.mxu0 0.0
    %2106 = vmatpush2.msra.mxu0 0.0
    %2107 = vmatprep.mubr.f32.mxu0 0.0
    %2108 = vmatmul.mubr.f32.gmra.mxu0 %v2027
    %v2109 = vpop.f32.mrf.mxu0
    %v2110 = vadd.f32 0.0, %v2109
    %v2111 = vpop.f32.mrf.mxu0
    %2112 = vmatprep.mubr.f32.mxu0 0.0
    %2113 = vmatmul.mubr.f32.gmra.mxu0 %v2028
    %v2114 = vpop.f32.mrf.mxu0
    %v2115 = vadd.f32 0.0, %v2114
    %v2116 = vpop.f32.mrf.mxu0
    %2117 = vmatprep.mubr.f32.mxu0 0.0
    %2118 = vmatmul.mubr.f32.gmra.mxu0 %v2029
    %v2119 = vpop.f32.mrf.mxu0
    %v2120 = vadd.f32 0.0, %v2119
    %v2121 = vpop.f32.mrf.mxu0
    %2122 = vmatprep.mubr.f32.mxu0 0.0
    %2123 = vmatmul.mubr.f32.gmra.mxu0 %v2030
    %v2124 = vpop.f32.mrf.mxu0
    %v2125 = vadd.f32 0.0, %v2124
    %v2126 = vpop.f32.mrf.mxu0
    %2127 = vmatprep.mubr.f32.mxu0 0.0
    %2128 = vmatmul.mubr.f32.gmra.mxu0 %v2031
    %v2129 = vpop.f32.mrf.mxu0
    %v2130 = vadd.f32 0.0, %v2129
    %v2131 = vpop.f32.mrf.mxu0
    %2132 = vmatprep.mubr.f32.mxu0 0.0
    %2133 = vmatmul.mubr.f32.gmra.mxu0 %v2032
    %v2134 = vpop.f32.mrf.mxu0
    %v2135 = vadd.f32 0.0, %v2134
    %v2136 = vpop.f32.mrf.mxu0
    %2137 = vmatprep.mubr.f32.mxu0 0.0
    %2138 = vmatmul.mubr.f32.gmra.mxu0 %v2033
    %v2139 = vpop.f32.mrf.mxu0
    %v2140 = vadd.f32 0.0, %v2139
    %v2141 = vpop.f32.mrf.mxu0
    %2142 = vmatprep.mubr.f32.mxu0 0.0
    %2143 = vmatmul.mubr.f32.gmra.mxu0 %v2034
    %v2144 = vpop.f32.mrf.mxu0
    %v2145 = vadd.f32 0.0, %v2144
    %v2146 = vpop.f32.mrf.mxu0
    %2147 = vmatprep.mubr.f32.mxu0 0.0
    %2148 = vmatmul.mubr.f32.gmra.mxu0 %v2035
    %v2149 = vpop.f32.mrf.mxu0
    %v2150 = vadd.f32 0.0, %v2149
    %v2151 = vpop.f32.mrf.mxu0
    %2152 = vmatprep.mubr.f32.mxu0 0.0
    %2153 = vmatmul.mubr.f32.gmra.mxu0 %v2036
    %v2154 = vpop.f32.mrf.mxu0
    %v2155 = vadd.f32 0.0, %v2154
    %v2156 = vpop.f32.mrf.mxu0
    %2157 = vmatprep.mubr.f32.mxu0 0.0
    %2158 = vmatmul.mubr.f32.gmra.mxu0 %v2037
    %v2159 = vpop.f32.mrf.mxu0
    %v2160 = vadd.f32 0.0, %v2159
    %v2161 = vpop.f32.mrf.mxu0
    %2162 = vmatprep.mubr.f32.mxu0 0.0
    %2163 = vmatmul.mubr.f32.gmra.mxu0 %v2038
    %v2164 = vpop.f32.mrf.mxu0
    %v2165 = vadd.f32 0.0, %v2164
    %v2166 = vpop.f32.mrf.mxu0
    %2167 = vmatprep.mubr.f32.mxu0 0.0
    %2168 = vmatmul.mubr.f32.gmra.mxu0 %v2039
    %v2169 = vpop.f32.mrf.mxu0
    %v2170 = vadd.f32 0.0, %v2169
    %v2171 = vpop.f32.mrf.mxu0
    %2172 = vmatprep.mubr.f32.mxu0 0.0
    %2173 = vmatmul.mubr.f32.gmra.mxu0 %v2040
    %v2174 = vpop.f32.mrf.mxu0
    %v2175 = vadd.f32 0.0, %v2174
    %v2176 = vpop.f32.mrf.mxu0
    %2177 = vmatprep.mubr.f32.mxu0 0.0
    %2178 = vmatmul.mubr.f32.gmra.mxu0 %v2041
    %v2179 = vpop.f32.mrf.mxu0
    %v2180 = vadd.f32 0.0, %v2179
    %v2181 = vpop.f32.mrf.mxu0
    %2182 = vmatprep.mubr.f32.mxu0 0.0
    %2183 = vmatmul.mubr.f32.gmra.mxu0 %v2042
    %v2184 = vpop.f32.mrf.mxu0
    %v2185 = vadd.f32 0.0, %v2184
    %v2186 = vpop.f32.mrf.mxu0
    %2187 = vdwg.mxu0
    %v2188 = vadd.f32 %v2011, %v2110
    %v2189 = vadd.f32 %v2012, %v2115
    %v2190 = vadd.f32 %v2013, %v2120
    %v2191 = vadd.f32 %v2014, %v2125
    %v2192 = vadd.f32 %v2015, %v2130
    %v2193 = vadd.f32 %v2016, %v2135
    %v2194 = vadd.f32 %v2017, %v2140
    %v2195 = vadd.f32 %v2018, %v2145
    %v2196 = vadd.f32 %v2019, %v2150
    %v2197 = vadd.f32 %v2020, %v2155
    %v2198 = vadd.f32 %v2021, %v2160
    %v2199 = vadd.f32 %v2022, %v2165
    %v2200 = vadd.f32 %v2023, %v2170
    %v2201 = vadd.f32 %v2024, %v2175
    %v2202 = vadd.f32 %v2025, %v2180
    %v2203 = vadd.f32 %v2026, %v2185
    %v2204 = vadd.f32 %v2188, %v950
    %v2205 = vadd.f32 %v2189, %v955
    %v2206 = vadd.f32 %v2190, %v960
    %v2207 = vadd.f32 %v2191, %v965
    %v2208 = vadd.f32 %v2192, %v970
    %v2209 = vadd.f32 %v2193, %v975
    %v2210 = vadd.f32 %v2194, %v980
    %v2211 = vadd.f32 %v2195, %v985
    %v2212 = vadd.f32 %v2196, %v990
    %v2213 = vadd.f32 %v2197, %v995
    %v2214 = vadd.f32 %v2198, %v1000
    %v2215 = vadd.f32 %v2199, %v1005
    %v2216 = vadd.f32 %v2200, %v1010
    %v2217 = vadd.f32 %v2201, %v1015
    %v2218 = vadd.f32 %v2202, %v1020
    %v2219 = vadd.f32 %v2203, %v1025
    %v2220 = vtanh.pop %v2204
    %v2221 = vtanh.pop %v2205
    %v2222 = vtanh.pop %v2206
    %v2223 = vtanh.pop %v2207
    %v2224 = vtanh.pop %v2208
    %v2225 = vtanh.pop %v2209
    %v2226 = vtanh.pop %v2210
    %v2227 = vtanh.pop %v2211
    %v2228 = vtanh.pop %v2212
    %v2229 = vtanh.pop %v2213
    %v2230 = vtanh.pop %v2214
    %v2231 = vtanh.pop %v2215
    %v2232 = vtanh.pop %v2216
    %v2233 = vtanh.pop %v2217
    %v2234 = vtanh.pop %v2218
    %v2235 = vtanh.pop %v2219
    %2236 = vst [vmem:[%s2010] sm:$0xff] %v2220
    %2237 = vst [vmem:[%s2010 + $0x40] sm:$0xff] %v2221
    %2238 = vst [vmem:[%s2010 + $0x80] sm:$0xff] %v2222
    %2239 = vst [vmem:[%s2010 + $0xc0] sm:$0xff] %v2223
    %2240 = vst [vmem:[%s2010 + $0x100] sm:$0xff] %v2224
    %2241 = vst [vmem:[%s2010 + $0x140] sm:$0xff] %v2225
    %2242 = vst [vmem:[%s2010 + $0x180] sm:$0xff] %v2226
    %2243 = vst [vmem:[%s2010 + $0x1c0] sm:$0xff] %v2227
    %2244 = vst [vmem:[%s2010 + $0x200] sm:$0xff] %v2228
    %2245 = vst [vmem:[%s2010 + $0x240] sm:$0xff] %v2229
    %2246 = vst [vmem:[%s2010 + $0x280] sm:$0xff] %v2230
    %2247 = vst [vmem:[%s2010 + $0x2c0] sm:$0xff] %v2231
    %2248 = vst [vmem:[%s2010 + $0x300] sm:$0xff] %v2232
    %2249 = vst [vmem:[%s2010 + $0x340] sm:$0xff] %v2233
    %2250 = vst [vmem:[%s2010 + $0x380] sm:$0xff] %v2234
    %2251 = vst [vmem:[%s2010 + $0x3c0] sm:$0xff] %v2235
    %s2252 = scalar_lea.vmem [#allocation2], 40
    %v2253 = vld [vmem:[%s2252] sm:$0xff]
    %v2254 = vld [vmem:[%s2252 + $0x40] sm:$0xff]
    %v2255 = vld [vmem:[%s2252 + $0x80] sm:$0xff]
    %v2256 = vld [vmem:[%s2252 + $0xc0] sm:$0xff]
    %v2257 = vld [vmem:[%s2252 + $0x100] sm:$0xff]
    %v2258 = vld [vmem:[%s2252 + $0x140] sm:$0xff]
    %v2259 = vld [vmem:[%s2252 + $0x180] sm:$0xff]
    %v2260 = vld [vmem:[%s2252 + $0x1c0] sm:$0xff]
    %v2261 = vld [vmem:[%s2252 + $0x200] sm:$0xff]
    %v2262 = vld [vmem:[%s2252 + $0x240] sm:$0xff]
    %v2263 = vld [vmem:[%s2252 + $0x280] sm:$0xff]
    %v2264 = vld [vmem:[%s2252 + $0x2c0] sm:$0xff]
    %v2265 = vld [vmem:[%s2252 + $0x300] sm:$0xff]
    %v2266 = vld [vmem:[%s2252 + $0x340] sm:$0xff]
    %v2267 = vld [vmem:[%s2252 + $0x380] sm:$0xff]
    %v2268 = vld [vmem:[%s2252 + $0x3c0] sm:$0xff]
    %v2269 = vld [vmem:[%s3] sm:$0xff]
    %v2270 = vld [vmem:[%s3 + $0x8] sm:$0xff]
    %v2271 = vld [vmem:[%s3 + $0x10] sm:$0xff]
    %v2272 = vld [vmem:[%s3 + $0x18] sm:$0xff]
    %v2273 = vld [vmem:[%s3 + $0x20] sm:$0xff]
    %v2274 = vld [vmem:[%s3 + $0x28] sm:$0xff]
    %v2275 = vld [vmem:[%s3 + $0x30] sm:$0xff]
    %v2276 = vld [vmem:[%s3 + $0x38] sm:$0xff]
    %v2277 = vld [vmem:[%s3 + $0x40] sm:$0xff]
    %v2278 = vld [vmem:[%s3 + $0x48] sm:$0xff]
    %v2279 = vld [vmem:[%s3 + $0x50] sm:$0xff]
    %v2280 = vld [vmem:[%s3 + $0x58] sm:$0xff]
    %v2281 = vld [vmem:[%s3 + $0x60] sm:$0xff]
    %v2282 = vld [vmem:[%s3 + $0x68] sm:$0xff]
    %v2283 = vld [vmem:[%s3 + $0x70] sm:$0xff]
    %v2284 = vld [vmem:[%s3 + $0x78] sm:$0xff]
    %2285 = vmatprep.subr.mxu0 0.0
    %2286 = vmatpush1.msra.mxu0 %v2235
    %2287 = vmatprep.subr.mxu0 0.0
    %2288 = vmatpush1.msra.mxu0 %v2234
    %2289 = vmatprep.subr.mxu0 0.0
    %2290 = vmatpush1.msra.mxu0 %v2233
    %2291 = vmatprep.subr.mxu0 0.0
    %2292 = vmatpush1.msra.mxu0 %v2232
    %2293 = vmatprep.subr.mxu0 0.0
    %2294 = vmatpush1.msra.mxu0 %v2231
    %2295 = vmatprep.subr.mxu0 0.0
    %2296 = vmatpush1.msra.mxu0 %v2230
    %2297 = vmatprep.subr.mxu0 0.0
    %2298 = vmatpush1.msra.mxu0 %v2229
    %2299 = vmatprep.subr.mxu0 0.0
    %2300 = vmatpush1.msra.mxu0 %v2228
    %2301 = vmatprep.subr.mxu0 0.0
    %2302 = vmatpush1.msra.mxu0 %v2227
    %2303 = vmatprep.subr.mxu0 0.0
    %2304 = vmatpush1.msra.mxu0 %v2226
    %2305 = vmatprep.subr.mxu0 0.0
    %2306 = vmatpush1.msra.mxu0 %v2225
    %2307 = vmatprep.subr.mxu0 0.0
    %2308 = vmatpush1.msra.mxu0 %v2224
    %2309 = vmatprep.subr.mxu0 0.0
    %2310 = vmatpush1.msra.mxu0 %v2223
    %2311 = vmatprep.subr.mxu0 0.0
    %2312 = vmatpush1.msra.mxu0 %v2222
    %2313 = vmatprep.subr.mxu0 0.0
    %2314 = vmatpush1.msra.mxu0 %v2221
    %2315 = vmatprep.subr.mxu0 0.0
    %2316 = vmatpush1.msra.mxu0 %v2220
    %2317 = vmatprep.subr.mxu0 0.0
    %2318 = vmatpush2.msra.mxu0 0.0
    %2319 = vmatprep.subr.mxu0 0.0
    %2320 = vmatpush2.msra.mxu0 0.0
    %2321 = vmatprep.subr.mxu0 0.0
    %2322 = vmatpush2.msra.mxu0 0.0
    %2323 = vmatprep.subr.mxu0 0.0
    %2324 = vmatpush2.msra.mxu0 0.0
    %2325 = vmatprep.subr.mxu0 0.0
    %2326 = vmatpush2.msra.mxu0 0.0
    %2327 = vmatprep.subr.mxu0 0.0
    %2328 = vmatpush2.msra.mxu0 0.0
    %2329 = vmatprep.subr.mxu0 0.0
    %2330 = vmatpush2.msra.mxu0 0.0
    %2331 = vmatprep.subr.mxu0 0.0
    %2332 = vmatpush2.msra.mxu0 0.0
    %2333 = vmatprep.subr.mxu0 0.0
    %2334 = vmatpush2.msra.mxu0 0.0
    %2335 = vmatprep.subr.mxu0 0.0
    %2336 = vmatpush2.msra.mxu0 0.0
    %2337 = vmatprep.subr.mxu0 0.0
    %2338 = vmatpush2.msra.mxu0 0.0
    %2339 = vmatprep.subr.mxu0 0.0
    %2340 = vmatpush2.msra.mxu0 0.0
    %2341 = vmatprep.subr.mxu0 0.0
    %2342 = vmatpush2.msra.mxu0 0.0
    %2343 = vmatprep.subr.mxu0 0.0
    %2344 = vmatpush2.msra.mxu0 0.0
    %2345 = vmatprep.subr.mxu0 0.0
    %2346 = vmatpush2.msra.mxu0 0.0
    %2347 = vmatprep.subr.mxu0 0.0
    %2348 = vmatpush2.msra.mxu0 0.0
    %2349 = vmatprep.mubr.f32.mxu0 0.0
    %2350 = vmatmul.mubr.f32.gmra.mxu0 %v2269
    %v2351 = vpop.f32.mrf.mxu0
    %v2352 = vadd.f32 0.0, %v2351
    %v2353 = vpop.f32.mrf.mxu0
    %2354 = vmatprep.mubr.f32.mxu0 0.0
    %2355 = vmatmul.mubr.f32.gmra.mxu0 %v2270
    %v2356 = vpop.f32.mrf.mxu0
    %v2357 = vadd.f32 0.0, %v2356
    %v2358 = vpop.f32.mrf.mxu0
    %2359 = vmatprep.mubr.f32.mxu0 0.0
    %2360 = vmatmul.mubr.f32.gmra.mxu0 %v2271
    %v2361 = vpop.f32.mrf.mxu0
    %v2362 = vadd.f32 0.0, %v2361
    %v2363 = vpop.f32.mrf.mxu0
    %2364 = vmatprep.mubr.f32.mxu0 0.0
    %2365 = vmatmul.mubr.f32.gmra.mxu0 %v2272
    %v2366 = vpop.f32.mrf.mxu0
    %v2367 = vadd.f32 0.0, %v2366
    %v2368 = vpop.f32.mrf.mxu0
    %2369 = vmatprep.mubr.f32.mxu0 0.0
    %2370 = vmatmul.mubr.f32.gmra.mxu0 %v2273
    %v2371 = vpop.f32.mrf.mxu0
    %v2372 = vadd.f32 0.0, %v2371
    %v2373 = vpop.f32.mrf.mxu0
    %2374 = vmatprep.mubr.f32.mxu0 0.0
    %2375 = vmatmul.mubr.f32.gmra.mxu0 %v2274
    %v2376 = vpop.f32.mrf.mxu0
    %v2377 = vadd.f32 0.0, %v2376
    %v2378 = vpop.f32.mrf.mxu0
    %2379 = vmatprep.mubr.f32.mxu0 0.0
    %2380 = vmatmul.mubr.f32.gmra.mxu0 %v2275
    %v2381 = vpop.f32.mrf.mxu0
    %v2382 = vadd.f32 0.0, %v2381
    %v2383 = vpop.f32.mrf.mxu0
    %2384 = vmatprep.mubr.f32.mxu0 0.0
    %2385 = vmatmul.mubr.f32.gmra.mxu0 %v2276
    %v2386 = vpop.f32.mrf.mxu0
    %v2387 = vadd.f32 0.0, %v2386
    %v2388 = vpop.f32.mrf.mxu0
    %2389 = vmatprep.mubr.f32.mxu0 0.0
    %2390 = vmatmul.mubr.f32.gmra.mxu0 %v2277
    %v2391 = vpop.f32.mrf.mxu0
    %v2392 = vadd.f32 0.0, %v2391
    %v2393 = vpop.f32.mrf.mxu0
    %2394 = vmatprep.mubr.f32.mxu0 0.0
    %2395 = vmatmul.mubr.f32.gmra.mxu0 %v2278
    %v2396 = vpop.f32.mrf.mxu0
    %v2397 = vadd.f32 0.0, %v2396
    %v2398 = vpop.f32.mrf.mxu0
    %2399 = vmatprep.mubr.f32.mxu0 0.0
    %2400 = vmatmul.mubr.f32.gmra.mxu0 %v2279
    %v2401 = vpop.f32.mrf.mxu0
    %v2402 = vadd.f32 0.0, %v2401
    %v2403 = vpop.f32.mrf.mxu0
    %2404 = vmatprep.mubr.f32.mxu0 0.0
    %2405 = vmatmul.mubr.f32.gmra.mxu0 %v2280
    %v2406 = vpop.f32.mrf.mxu0
    %v2407 = vadd.f32 0.0, %v2406
    %v2408 = vpop.f32.mrf.mxu0
    %2409 = vmatprep.mubr.f32.mxu0 0.0
    %2410 = vmatmul.mubr.f32.gmra.mxu0 %v2281
    %v2411 = vpop.f32.mrf.mxu0
    %v2412 = vadd.f32 0.0, %v2411
    %v2413 = vpop.f32.mrf.mxu0
    %2414 = vmatprep.mubr.f32.mxu0 0.0
    %2415 = vmatmul.mubr.f32.gmra.mxu0 %v2282
    %v2416 = vpop.f32.mrf.mxu0
    %v2417 = vadd.f32 0.0, %v2416
    %v2418 = vpop.f32.mrf.mxu0
    %2419 = vmatprep.mubr.f32.mxu0 0.0
    %2420 = vmatmul.mubr.f32.gmra.mxu0 %v2283
    %v2421 = vpop.f32.mrf.mxu0
    %v2422 = vadd.f32 0.0, %v2421
    %v2423 = vpop.f32.mrf.mxu0
    %2424 = vmatprep.mubr.f32.mxu0 0.0
    %2425 = vmatmul.mubr.f32.gmra.mxu0 %v2284
    %v2426 = vpop.f32.mrf.mxu0
    %v2427 = vadd.f32 0.0, %v2426
    %v2428 = vpop.f32.mrf.mxu0
    %2429 = vdwg.mxu0
    %v2430 = vadd.f32 %v2253, %v2352
    %v2431 = vadd.f32 %v2254, %v2357
    %v2432 = vadd.f32 %v2255, %v2362
    %v2433 = vadd.f32 %v2256, %v2367
    %v2434 = vadd.f32 %v2257, %v2372
    %v2435 = vadd.f32 %v2258, %v2377
    %v2436 = vadd.f32 %v2259, %v2382
    %v2437 = vadd.f32 %v2260, %v2387
    %v2438 = vadd.f32 %v2261, %v2392
    %v2439 = vadd.f32 %v2262, %v2397
    %v2440 = vadd.f32 %v2263, %v2402
    %v2441 = vadd.f32 %v2264, %v2407
    %v2442 = vadd.f32 %v2265, %v2412
    %v2443 = vadd.f32 %v2266, %v2417
    %v2444 = vadd.f32 %v2267, %v2422
    %v2445 = vadd.f32 %v2268, %v2427
    %v2446 = vadd.f32 %v2430, %v950
    %v2447 = vadd.f32 %v2431, %v955
    %v2448 = vadd.f32 %v2432, %v960
    %v2449 = vadd.f32 %v2433, %v965
    %v2450 = vadd.f32 %v2434, %v970
    %v2451 = vadd.f32 %v2435, %v975
    %v2452 = vadd.f32 %v2436, %v980
    %v2453 = vadd.f32 %v2437, %v985
    %v2454 = vadd.f32 %v2438, %v990
    %v2455 = vadd.f32 %v2439, %v995
    %v2456 = vadd.f32 %v2440, %v1000
    %v2457 = vadd.f32 %v2441, %v1005
    %v2458 = vadd.f32 %v2442, %v1010
    %v2459 = vadd.f32 %v2443, %v1015
    %v2460 = vadd.f32 %v2444, %v1020
    %v2461 = vadd.f32 %v2445, %v1025
    %v2462 = vtanh.pop %v2446
    %v2463 = vtanh.pop %v2447
    %v2464 = vtanh.pop %v2448
    %v2465 = vtanh.pop %v2449
    %v2466 = vtanh.pop %v2450
    %v2467 = vtanh.pop %v2451
    %v2468 = vtanh.pop %v2452
    %v2469 = vtanh.pop %v2453
    %v2470 = vtanh.pop %v2454
    %v2471 = vtanh.pop %v2455
    %v2472 = vtanh.pop %v2456
    %v2473 = vtanh.pop %v2457
    %v2474 = vtanh.pop %v2458
    %v2475 = vtanh.pop %v2459
    %v2476 = vtanh.pop %v2460
    %v2477 = vtanh.pop %v2461
    %2478 = vst [vmem:[%s2252] sm:$0xff] %v2462
    %2479 = vst [vmem:[%s2252 + $0x40] sm:$0xff] %v2463
    %2480 = vst [vmem:[%s2252 + $0x80] sm:$0xff] %v2464
    %2481 = vst [vmem:[%s2252 + $0xc0] sm:$0xff] %v2465
    %2482 = vst [vmem:[%s2252 + $0x100] sm:$0xff] %v2466
    %2483 = vst [vmem:[%s2252 + $0x140] sm:$0xff] %v2467
    %2484 = vst [vmem:[%s2252 + $0x180] sm:$0xff] %v2468
    %2485 = vst [vmem:[%s2252 + $0x1c0] sm:$0xff] %v2469
    %2486 = vst [vmem:[%s2252 + $0x200] sm:$0xff] %v2470
    %2487 = vst [vmem:[%s2252 + $0x240] sm:$0xff] %v2471
    %2488 = vst [vmem:[%s2252 + $0x280] sm:$0xff] %v2472
    %2489 = vst [vmem:[%s2252 + $0x2c0] sm:$0xff] %v2473
    %2490 = vst [vmem:[%s2252 + $0x300] sm:$0xff] %v2474
    %2491 = vst [vmem:[%s2252 + $0x340] sm:$0xff] %v2475
    %2492 = vst [vmem:[%s2252 + $0x380] sm:$0xff] %v2476
    %2493 = vst [vmem:[%s2252 + $0x3c0] sm:$0xff] %v2477
    %s2494 = scalar_lea.vmem [#allocation2], 48
    %v2495 = vld [vmem:[%s2494] sm:$0xff]
    %v2496 = vld [vmem:[%s2494 + $0x40] sm:$0xff]
    %v2497 = vld [vmem:[%s2494 + $0x80] sm:$0xff]
    %v2498 = vld [vmem:[%s2494 + $0xc0] sm:$0xff]
    %v2499 = vld [vmem:[%s2494 + $0x100] sm:$0xff]
    %v2500 = vld [vmem:[%s2494 + $0x140] sm:$0xff]
    %v2501 = vld [vmem:[%s2494 + $0x180] sm:$0xff]
    %v2502 = vld [vmem:[%s2494 + $0x1c0] sm:$0xff]
    %v2503 = vld [vmem:[%s2494 + $0x200] sm:$0xff]
    %v2504 = vld [vmem:[%s2494 + $0x240] sm:$0xff]
    %v2505 = vld [vmem:[%s2494 + $0x280] sm:$0xff]
    %v2506 = vld [vmem:[%s2494 + $0x2c0] sm:$0xff]
    %v2507 = vld [vmem:[%s2494 + $0x300] sm:$0xff]
    %v2508 = vld [vmem:[%s2494 + $0x340] sm:$0xff]
    %v2509 = vld [vmem:[%s2494 + $0x380] sm:$0xff]
    %v2510 = vld [vmem:[%s2494 + $0x3c0] sm:$0xff]
    %v2511 = vld [vmem:[%s3] sm:$0xff]
    %v2512 = vld [vmem:[%s3 + $0x8] sm:$0xff]
    %v2513 = vld [vmem:[%s3 + $0x10] sm:$0xff]
    %v2514 = vld [vmem:[%s3 + $0x18] sm:$0xff]
    %v2515 = vld [vmem:[%s3 + $0x20] sm:$0xff]
    %v2516 = vld [vmem:[%s3 + $0x28] sm:$0xff]
    %v2517 = vld [vmem:[%s3 + $0x30] sm:$0xff]
    %v2518 = vld [vmem:[%s3 + $0x38] sm:$0xff]
    %v2519 = vld [vmem:[%s3 + $0x40] sm:$0xff]
    %v2520 = vld [vmem:[%s3 + $0x48] sm:$0xff]
    %v2521 = vld [vmem:[%s3 + $0x50] sm:$0xff]
    %v2522 = vld [vmem:[%s3 + $0x58] sm:$0xff]
    %v2523 = vld [vmem:[%s3 + $0x60] sm:$0xff]
    %v2524 = vld [vmem:[%s3 + $0x68] sm:$0xff]
    %v2525 = vld [vmem:[%s3 + $0x70] sm:$0xff]
    %v2526 = vld [vmem:[%s3 + $0x78] sm:$0xff]
    %2527 = vmatprep.subr.mxu0 0.0
    %2528 = vmatpush1.msra.mxu0 %v2477
    %2529 = vmatprep.subr.mxu0 0.0
    %2530 = vmatpush1.msra.mxu0 %v2476
    %2531 = vmatprep.subr.mxu0 0.0
    %2532 = vmatpush1.msra.mxu0 %v2475
    %2533 = vmatprep.subr.mxu0 0.0
    %2534 = vmatpush1.msra.mxu0 %v2474
    %2535 = vmatprep.subr.mxu0 0.0
    %2536 = vmatpush1.msra.mxu0 %v2473
    %2537 = vmatprep.subr.mxu0 0.0
    %2538 = vmatpush1.msra.mxu0 %v2472
    %2539 = vmatprep.subr.mxu0 0.0
    %2540 = vmatpush1.msra.mxu0 %v2471
    %2541 = vmatprep.subr.mxu0 0.0
    %2542 = vmatpush1.msra.mxu0 %v2470
    %2543 = vmatprep.subr.mxu0 0.0
    %2544 = vmatpush1.msra.mxu0 %v2469
    %2545 = vmatprep.subr.mxu0 0.0
    %2546 = vmatpush1.msra.mxu0 %v2468
    %2547 = vmatprep.subr.mxu0 0.0
    %2548 = vmatpush1.msra.mxu0 %v2467
    %2549 = vmatprep.subr.mxu0 0.0
    %2550 = vmatpush1.msra.mxu0 %v2466
    %2551 = vmatprep.subr.mxu0 0.0
    %2552 = vmatpush1.msra.mxu0 %v2465
    %2553 = vmatprep.subr.mxu0 0.0
    %2554 = vmatpush1.msra.mxu0 %v2464
    %2555 = vmatprep.subr.mxu0 0.0
    %2556 = vmatpush1.msra.mxu0 %v2463
    %2557 = vmatprep.subr.mxu0 0.0
    %2558 = vmatpush1.msra.mxu0 %v2462
    %2559 = vmatprep.subr.mxu0 0.0
    %2560 = vmatpush2.msra.mxu0 0.0
    %2561 = vmatprep.subr.mxu0 0.0
    %2562 = vmatpush2.msra.mxu0 0.0
    %2563 = vmatprep.subr.mxu0 0.0
    %2564 = vmatpush2.msra.mxu0 0.0
    %2565 = vmatprep.subr.mxu0 0.0
    %2566 = vmatpush2.msra.mxu0 0.0
    %2567 = vmatprep.subr.mxu0 0.0
    %2568 = vmatpush2.msra.mxu0 0.0
    %2569 = vmatprep.subr.mxu0 0.0
    %2570 = vmatpush2.msra.mxu0 0.0
    %2571 = vmatprep.subr.mxu0 0.0
    %2572 = vmatpush2.msra.mxu0 0.0
    %2573 = vmatprep.subr.mxu0 0.0
    %2574 = vmatpush2.msra.mxu0 0.0
    %2575 = vmatprep.subr.mxu0 0.0
    %2576 = vmatpush2.msra.mxu0 0.0
    %2577 = vmatprep.subr.mxu0 0.0
    %2578 = vmatpush2.msra.mxu0 0.0
    %2579 = vmatprep.subr.mxu0 0.0
    %2580 = vmatpush2.msra.mxu0 0.0
    %2581 = vmatprep.subr.mxu0 0.0
    %2582 = vmatpush2.msra.mxu0 0.0
    %2583 = vmatprep.subr.mxu0 0.0
    %2584 = vmatpush2.msra.mxu0 0.0
    %2585 = vmatprep.subr.mxu0 0.0
    %2586 = vmatpush2.msra.mxu0 0.0
    %2587 = vmatprep.subr.mxu0 0.0
    %2588 = vmatpush2.msra.mxu0 0.0
    %2589 = vmatprep.subr.mxu0 0.0
    %2590 = vmatpush2.msra.mxu0 0.0
    %2591 = vmatprep.mubr.f32.mxu0 0.0
    %2592 = vmatmul.mubr.f32.gmra.mxu0 %v2511
    %v2593 = vpop.f32.mrf.mxu0
    %v2594 = vadd.f32 0.0, %v2593
    %v2595 = vpop.f32.mrf.mxu0
    %2596 = vmatprep.mubr.f32.mxu0 0.0
    %2597 = vmatmul.mubr.f32.gmra.mxu0 %v2512
    %v2598 = vpop.f32.mrf.mxu0
    %v2599 = vadd.f32 0.0, %v2598
    %v2600 = vpop.f32.mrf.mxu0
    %2601 = vmatprep.mubr.f32.mxu0 0.0
    %2602 = vmatmul.mubr.f32.gmra.mxu0 %v2513
    %v2603 = vpop.f32.mrf.mxu0
    %v2604 = vadd.f32 0.0, %v2603
    %v2605 = vpop.f32.mrf.mxu0
    %2606 = vmatprep.mubr.f32.mxu0 0.0
    %2607 = vmatmul.mubr.f32.gmra.mxu0 %v2514
    %v2608 = vpop.f32.mrf.mxu0
    %v2609 = vadd.f32 0.0, %v2608
    %v2610 = vpop.f32.mrf.mxu0
    %2611 = vmatprep.mubr.f32.mxu0 0.0
    %2612 = vmatmul.mubr.f32.gmra.mxu0 %v2515
    %v2613 = vpop.f32.mrf.mxu0
    %v2614 = vadd.f32 0.0, %v2613
    %v2615 = vpop.f32.mrf.mxu0
    %2616 = vmatprep.mubr.f32.mxu0 0.0
    %2617 = vmatmul.mubr.f32.gmra.mxu0 %v2516
    %v2618 = vpop.f32.mrf.mxu0
    %v2619 = vadd.f32 0.0, %v2618
    %v2620 = vpop.f32.mrf.mxu0
    %2621 = vmatprep.mubr.f32.mxu0 0.0
    %2622 = vmatmul.mubr.f32.gmra.mxu0 %v2517
    %v2623 = vpop.f32.mrf.mxu0
    %v2624 = vadd.f32 0.0, %v2623
    %v2625 = vpop.f32.mrf.mxu0
    %2626 = vmatprep.mubr.f32.mxu0 0.0
    %2627 = vmatmul.mubr.f32.gmra.mxu0 %v2518
    %v2628 = vpop.f32.mrf.mxu0
    %v2629 = vadd.f32 0.0, %v2628
    %v2630 = vpop.f32.mrf.mxu0
    %2631 = vmatprep.mubr.f32.mxu0 0.0
    %2632 = vmatmul.mubr.f32.gmra.mxu0 %v2519
    %v2633 = vpop.f32.mrf.mxu0
    %v2634 = vadd.f32 0.0, %v2633
    %v2635 = vpop.f32.mrf.mxu0
    %2636 = vmatprep.mubr.f32.mxu0 0.0
    %2637 = vmatmul.mubr.f32.gmra.mxu0 %v2520
    %v2638 = vpop.f32.mrf.mxu0
    %v2639 = vadd.f32 0.0, %v2638
    %v2640 = vpop.f32.mrf.mxu0
    %2641 = vmatprep.mubr.f32.mxu0 0.0
    %2642 = vmatmul.mubr.f32.gmra.mxu0 %v2521
    %v2643 = vpop.f32.mrf.mxu0
    %v2644 = vadd.f32 0.0, %v2643
    %v2645 = vpop.f32.mrf.mxu0
    %2646 = vmatprep.mubr.f32.mxu0 0.0
    %2647 = vmatmul.mubr.f32.gmra.mxu0 %v2522
    %v2648 = vpop.f32.mrf.mxu0
    %v2649 = vadd.f32 0.0, %v2648
    %v2650 = vpop.f32.mrf.mxu0
    %2651 = vmatprep.mubr.f32.mxu0 0.0
    %2652 = vmatmul.mubr.f32.gmra.mxu0 %v2523
    %v2653 = vpop.f32.mrf.mxu0
    %v2654 = vadd.f32 0.0, %v2653
    %v2655 = vpop.f32.mrf.mxu0
    %2656 = vmatprep.mubr.f32.mxu0 0.0
    %2657 = vmatmul.mubr.f32.gmra.mxu0 %v2524
    %v2658 = vpop.f32.mrf.mxu0
    %v2659 = vadd.f32 0.0, %v2658
    %v2660 = vpop.f32.mrf.mxu0
    %2661 = vmatprep.mubr.f32.mxu0 0.0
    %2662 = vmatmul.mubr.f32.gmra.mxu0 %v2525
    %v2663 = vpop.f32.mrf.mxu0
    %v2664 = vadd.f32 0.0, %v2663
    %v2665 = vpop.f32.mrf.mxu0
    %2666 = vmatprep.mubr.f32.mxu0 0.0
    %2667 = vmatmul.mubr.f32.gmra.mxu0 %v2526
    %v2668 = vpop.f32.mrf.mxu0
    %v2669 = vadd.f32 0.0, %v2668
    %v2670 = vpop.f32.mrf.mxu0
    %2671 = vdwg.mxu0
    %v2672 = vadd.f32 %v2495, %v2594
    %v2673 = vadd.f32 %v2496, %v2599
    %v2674 = vadd.f32 %v2497, %v2604
    %v2675 = vadd.f32 %v2498, %v2609
    %v2676 = vadd.f32 %v2499, %v2614
    %v2677 = vadd.f32 %v2500, %v2619
    %v2678 = vadd.f32 %v2501, %v2624
    %v2679 = vadd.f32 %v2502, %v2629
    %v2680 = vadd.f32 %v2503, %v2634
    %v2681 = vadd.f32 %v2504, %v2639
    %v2682 = vadd.f32 %v2505, %v2644
    %v2683 = vadd.f32 %v2506, %v2649
    %v2684 = vadd.f32 %v2507, %v2654
    %v2685 = vadd.f32 %v2508, %v2659
    %v2686 = vadd.f32 %v2509, %v2664
    %v2687 = vadd.f32 %v2510, %v2669
    %v2688 = vadd.f32 %v2672, %v950
    %v2689 = vadd.f32 %v2673, %v955
    %v2690 = vadd.f32 %v2674, %v960
    %v2691 = vadd.f32 %v2675, %v965
    %v2692 = vadd.f32 %v2676, %v970
    %v2693 = vadd.f32 %v2677, %v975
    %v2694 = vadd.f32 %v2678, %v980
    %v2695 = vadd.f32 %v2679, %v985
    %v2696 = vadd.f32 %v2680, %v990
    %v2697 = vadd.f32 %v2681, %v995
    %v2698 = vadd.f32 %v2682, %v1000
    %v2699 = vadd.f32 %v2683, %v1005
    %v2700 = vadd.f32 %v2684, %v1010
    %v2701 = vadd.f32 %v2685, %v1015
    %v2702 = vadd.f32 %v2686, %v1020
    %v2703 = vadd.f32 %v2687, %v1025
    %v2704 = vtanh.pop %v2688
    %v2705 = vtanh.pop %v2689
    %v2706 = vtanh.pop %v2690
    %v2707 = vtanh.pop %v2691
    %v2708 = vtanh.pop %v2692
    %v2709 = vtanh.pop %v2693
    %v2710 = vtanh.pop %v2694
    %v2711 = vtanh.pop %v2695
    %v2712 = vtanh.pop %v2696
    %v2713 = vtanh.pop %v2697
    %v2714 = vtanh.pop %v2698
    %v2715 = vtanh.pop %v2699
    %v2716 = vtanh.pop %v2700
    %v2717 = vtanh.pop %v2701
    %v2718 = vtanh.pop %v2702
    %v2719 = vtanh.pop %v2703
    %2720 = vst [vmem:[%s2494] sm:$0xff] %v2704
    %2721 = vst [vmem:[%s2494 + $0x40] sm:$0xff] %v2705
    %2722 = vst [vmem:[%s2494 + $0x80] sm:$0xff] %v2706
    %2723 = vst [vmem:[%s2494 + $0xc0] sm:$0xff] %v2707
    %2724 = vst [vmem:[%s2494 + $0x100] sm:$0xff] %v2708
    %2725 = vst [vmem:[%s2494 + $0x140] sm:$0xff] %v2709
    %2726 = vst [vmem:[%s2494 + $0x180] sm:$0xff] %v2710
    %2727 = vst [vmem:[%s2494 + $0x1c0] sm:$0xff] %v2711
    %2728 = vst [vmem:[%s2494 + $0x200] sm:$0xff] %v2712
    %2729 = vst [vmem:[%s2494 + $0x240] sm:$0xff] %v2713
    %2730 = vst [vmem:[%s2494 + $0x280] sm:$0xff] %v2714
    %2731 = vst [vmem:[%s2494 + $0x2c0] sm:$0xff] %v2715
    %2732 = vst [vmem:[%s2494 + $0x300] sm:$0xff] %v2716
    %2733 = vst [vmem:[%s2494 + $0x340] sm:$0xff] %v2717
    %2734 = vst [vmem:[%s2494 + $0x380] sm:$0xff] %v2718
    %2735 = vst [vmem:[%s2494 + $0x3c0] sm:$0xff] %v2719
    %s2736 = scalar_lea.vmem [#allocation2], 56
    %v2737 = vld [vmem:[%s2736] sm:$0xff]
    %v2738 = vld [vmem:[%s2736 + $0x40] sm:$0xff]
    %v2739 = vld [vmem:[%s2736 + $0x80] sm:$0xff]
    %v2740 = vld [vmem:[%s2736 + $0xc0] sm:$0xff]
    %v2741 = vld [vmem:[%s2736 + $0x100] sm:$0xff]
    %v2742 = vld [vmem:[%s2736 + $0x140] sm:$0xff]
    %v2743 = vld [vmem:[%s2736 + $0x180] sm:$0xff]
    %v2744 = vld [vmem:[%s2736 + $0x1c0] sm:$0xff]
    %v2745 = vld [vmem:[%s2736 + $0x200] sm:$0xff]
    %v2746 = vld [vmem:[%s2736 + $0x240] sm:$0xff]
    %v2747 = vld [vmem:[%s2736 + $0x280] sm:$0xff]
    %v2748 = vld [vmem:[%s2736 + $0x2c0] sm:$0xff]
    %v2749 = vld [vmem:[%s2736 + $0x300] sm:$0xff]
    %v2750 = vld [vmem:[%s2736 + $0x340] sm:$0xff]
    %v2751 = vld [vmem:[%s2736 + $0x380] sm:$0xff]
    %v2752 = vld [vmem:[%s2736 + $0x3c0] sm:$0xff]
    %v2753 = vld [vmem:[%s3] sm:$0xff]
    %v2754 = vld [vmem:[%s3 + $0x8] sm:$0xff]
    %v2755 = vld [vmem:[%s3 + $0x10] sm:$0xff]
    %v2756 = vld [vmem:[%s3 + $0x18] sm:$0xff]
    %v2757 = vld [vmem:[%s3 + $0x20] sm:$0xff]
    %v2758 = vld [vmem:[%s3 + $0x28] sm:$0xff]
    %v2759 = vld [vmem:[%s3 + $0x30] sm:$0xff]
    %v2760 = vld [vmem:[%s3 + $0x38] sm:$0xff]
    %v2761 = vld [vmem:[%s3 + $0x40] sm:$0xff]
    %v2762 = vld [vmem:[%s3 + $0x48] sm:$0xff]
    %v2763 = vld [vmem:[%s3 + $0x50] sm:$0xff]
    %v2764 = vld [vmem:[%s3 + $0x58] sm:$0xff]
    %v2765 = vld [vmem:[%s3 + $0x60] sm:$0xff]
    %v2766 = vld [vmem:[%s3 + $0x68] sm:$0xff]
    %v2767 = vld [vmem:[%s3 + $0x70] sm:$0xff]
    %v2768 = vld [vmem:[%s3 + $0x78] sm:$0xff]
    %2769 = vmatprep.subr.mxu0 0.0
    %2770 = vmatpush1.msra.mxu0 %v2719
    %2771 = vmatprep.subr.mxu0 0.0
    %2772 = vmatpush1.msra.mxu0 %v2718
    %2773 = vmatprep.subr.mxu0 0.0
    %2774 = vmatpush1.msra.mxu0 %v2717
    %2775 = vmatprep.subr.mxu0 0.0
    %2776 = vmatpush1.msra.mxu0 %v2716
    %2777 = vmatprep.subr.mxu0 0.0
    %2778 = vmatpush1.msra.mxu0 %v2715
    %2779 = vmatprep.subr.mxu0 0.0
    %2780 = vmatpush1.msra.mxu0 %v2714
    %2781 = vmatprep.subr.mxu0 0.0
    %2782 = vmatpush1.msra.mxu0 %v2713
    %2783 = vmatprep.subr.mxu0 0.0
    %2784 = vmatpush1.msra.mxu0 %v2712
    %2785 = vmatprep.subr.mxu0 0.0
    %2786 = vmatpush1.msra.mxu0 %v2711
    %2787 = vmatprep.subr.mxu0 0.0
    %2788 = vmatpush1.msra.mxu0 %v2710
    %2789 = vmatprep.subr.mxu0 0.0
    %2790 = vmatpush1.msra.mxu0 %v2709
    %2791 = vmatprep.subr.mxu0 0.0
    %2792 = vmatpush1.msra.mxu0 %v2708
    %2793 = vmatprep.subr.mxu0 0.0
    %2794 = vmatpush1.msra.mxu0 %v2707
    %2795 = vmatprep.subr.mxu0 0.0
    %2796 = vmatpush1.msra.mxu0 %v2706
    %2797 = vmatprep.subr.mxu0 0.0
    %2798 = vmatpush1.msra.mxu0 %v2705
    %2799 = vmatprep.subr.mxu0 0.0
    %2800 = vmatpush1.msra.mxu0 %v2704
    %2801 = vmatprep.subr.mxu0 0.0
    %2802 = vmatpush2.msra.mxu0 0.0
    %2803 = vmatprep.subr.mxu0 0.0
    %2804 = vmatpush2.msra.mxu0 0.0
    %2805 = vmatprep.subr.mxu0 0.0
    %2806 = vmatpush2.msra.mxu0 0.0
    %2807 = vmatprep.subr.mxu0 0.0
    %2808 = vmatpush2.msra.mxu0 0.0
    %2809 = vmatprep.subr.mxu0 0.0
    %2810 = vmatpush2.msra.mxu0 0.0
    %2811 = vmatprep.subr.mxu0 0.0
    %2812 = vmatpush2.msra.mxu0 0.0
    %2813 = vmatprep.subr.mxu0 0.0
    %2814 = vmatpush2.msra.mxu0 0.0
    %2815 = vmatprep.subr.mxu0 0.0
    %2816 = vmatpush2.msra.mxu0 0.0
    %2817 = vmatprep.subr.mxu0 0.0
    %2818 = vmatpush2.msra.mxu0 0.0
    %2819 = vmatprep.subr.mxu0 0.0
    %2820 = vmatpush2.msra.mxu0 0.0
    %2821 = vmatprep.subr.mxu0 0.0
    %2822 = vmatpush2.msra.mxu0 0.0
    %2823 = vmatprep.subr.mxu0 0.0
    %2824 = vmatpush2.msra.mxu0 0.0
    %2825 = vmatprep.subr.mxu0 0.0
    %2826 = vmatpush2.msra.mxu0 0.0
    %2827 = vmatprep.subr.mxu0 0.0
    %2828 = vmatpush2.msra.mxu0 0.0
    %2829 = vmatprep.subr.mxu0 0.0
    %2830 = vmatpush2.msra.mxu0 0.0
    %2831 = vmatprep.subr.mxu0 0.0
    %2832 = vmatpush2.msra.mxu0 0.0
    %2833 = vmatprep.mubr.f32.mxu0 0.0
    %2834 = vmatmul.mubr.f32.gmra.mxu0 %v2753
    %v2835 = vpop.f32.mrf.mxu0
    %v2836 = vadd.f32 0.0, %v2835
    %v2837 = vpop.f32.mrf.mxu0
    %2838 = vmatprep.mubr.f32.mxu0 0.0
    %2839 = vmatmul.mubr.f32.gmra.mxu0 %v2754
    %v2840 = vpop.f32.mrf.mxu0
    %v2841 = vadd.f32 0.0, %v2840
    %v2842 = vpop.f32.mrf.mxu0
    %2843 = vmatprep.mubr.f32.mxu0 0.0
    %2844 = vmatmul.mubr.f32.gmra.mxu0 %v2755
    %v2845 = vpop.f32.mrf.mxu0
    %v2846 = vadd.f32 0.0, %v2845
    %v2847 = vpop.f32.mrf.mxu0
    %2848 = vmatprep.mubr.f32.mxu0 0.0
    %2849 = vmatmul.mubr.f32.gmra.mxu0 %v2756
    %v2850 = vpop.f32.mrf.mxu0
    %v2851 = vadd.f32 0.0, %v2850
    %v2852 = vpop.f32.mrf.mxu0
    %2853 = vmatprep.mubr.f32.mxu0 0.0
    %2854 = vmatmul.mubr.f32.gmra.mxu0 %v2757
    %v2855 = vpop.f32.mrf.mxu0
    %v2856 = vadd.f32 0.0, %v2855
    %v2857 = vpop.f32.mrf.mxu0
    %2858 = vmatprep.mubr.f32.mxu0 0.0
    %2859 = vmatmul.mubr.f32.gmra.mxu0 %v2758
    %v2860 = vpop.f32.mrf.mxu0
    %v2861 = vadd.f32 0.0, %v2860
    %v2862 = vpop.f32.mrf.mxu0
    %2863 = vmatprep.mubr.f32.mxu0 0.0
    %2864 = vmatmul.mubr.f32.gmra.mxu0 %v2759
    %v2865 = vpop.f32.mrf.mxu0
    %v2866 = vadd.f32 0.0, %v2865
    %v2867 = vpop.f32.mrf.mxu0
    %2868 = vmatprep.mubr.f32.mxu0 0.0
    %2869 = vmatmul.mubr.f32.gmra.mxu0 %v2760
    %v2870 = vpop.f32.mrf.mxu0
    %v2871 = vadd.f32 0.0, %v2870
    %v2872 = vpop.f32.mrf.mxu0
    %2873 = vmatprep.mubr.f32.mxu0 0.0
    %2874 = vmatmul.mubr.f32.gmra.mxu0 %v2761
    %v2875 = vpop.f32.mrf.mxu0
    %v2876 = vadd.f32 0.0, %v2875
    %v2877 = vpop.f32.mrf.mxu0
    %2878 = vmatprep.mubr.f32.mxu0 0.0
    %2879 = vmatmul.mubr.f32.gmra.mxu0 %v2762
    %v2880 = vpop.f32.mrf.mxu0
    %v2881 = vadd.f32 0.0, %v2880
    %v2882 = vpop.f32.mrf.mxu0
    %2883 = vmatprep.mubr.f32.mxu0 0.0
    %2884 = vmatmul.mubr.f32.gmra.mxu0 %v2763
    %v2885 = vpop.f32.mrf.mxu0
    %v2886 = vadd.f32 0.0, %v2885
    %v2887 = vpop.f32.mrf.mxu0
    %2888 = vmatprep.mubr.f32.mxu0 0.0
    %2889 = vmatmul.mubr.f32.gmra.mxu0 %v2764
    %v2890 = vpop.f32.mrf.mxu0
    %v2891 = vadd.f32 0.0, %v2890
    %v2892 = vpop.f32.mrf.mxu0
    %2893 = vmatprep.mubr.f32.mxu0 0.0
    %2894 = vmatmul.mubr.f32.gmra.mxu0 %v2765
    %v2895 = vpop.f32.mrf.mxu0
    %v2896 = vadd.f32 0.0, %v2895
    %v2897 = vpop.f32.mrf.mxu0
    %2898 = vmatprep.mubr.f32.mxu0 0.0
    %2899 = vmatmul.mubr.f32.gmra.mxu0 %v2766
    %v2900 = vpop.f32.mrf.mxu0
    %v2901 = vadd.f32 0.0, %v2900
    %v2902 = vpop.f32.mrf.mxu0
    %2903 = vmatprep.mubr.f32.mxu0 0.0
    %2904 = vmatmul.mubr.f32.gmra.mxu0 %v2767
    %v2905 = vpop.f32.mrf.mxu0
    %v2906 = vadd.f32 0.0, %v2905
    %v2907 = vpop.f32.mrf.mxu0
    %2908 = vmatprep.mubr.f32.mxu0 0.0
    %2909 = vmatmul.mubr.f32.gmra.mxu0 %v2768
    %v2910 = vpop.f32.mrf.mxu0
    %v2911 = vadd.f32 0.0, %v2910
    %v2912 = vpop.f32.mrf.mxu0
    %2913 = vdwg.mxu0
    %v2914 = vadd.f32 %v2737, %v2836
    %v2915 = vadd.f32 %v2738, %v2841
    %v2916 = vadd.f32 %v2739, %v2846
    %v2917 = vadd.f32 %v2740, %v2851
    %v2918 = vadd.f32 %v2741, %v2856
    %v2919 = vadd.f32 %v2742, %v2861
    %v2920 = vadd.f32 %v2743, %v2866
    %v2921 = vadd.f32 %v2744, %v2871
    %v2922 = vadd.f32 %v2745, %v2876
    %v2923 = vadd.f32 %v2746, %v2881
    %v2924 = vadd.f32 %v2747, %v2886
    %v2925 = vadd.f32 %v2748, %v2891
    %v2926 = vadd.f32 %v2749, %v2896
    %v2927 = vadd.f32 %v2750, %v2901
    %v2928 = vadd.f32 %v2751, %v2906
    %v2929 = vadd.f32 %v2752, %v2911
    %v2930 = vadd.f32 %v2914, %v950
    %v2931 = vadd.f32 %v2915, %v955
    %v2932 = vadd.f32 %v2916, %v960
    %v2933 = vadd.f32 %v2917, %v965
    %v2934 = vadd.f32 %v2918, %v970
    %v2935 = vadd.f32 %v2919, %v975
    %v2936 = vadd.f32 %v2920, %v980
    %v2937 = vadd.f32 %v2921, %v985
    %v2938 = vadd.f32 %v2922, %v990
    %v2939 = vadd.f32 %v2923, %v995
    %v2940 = vadd.f32 %v2924, %v1000
    %v2941 = vadd.f32 %v2925, %v1005
    %v2942 = vadd.f32 %v2926, %v1010
    %v2943 = vadd.f32 %v2927, %v1015
    %v2944 = vadd.f32 %v2928, %v1020
    %v2945 = vadd.f32 %v2929, %v1025
    %v2946 = vtanh.pop %v2930
    %v2947 = vtanh.pop %v2931
    %v2948 = vtanh.pop %v2932
    %v2949 = vtanh.pop %v2933
    %v2950 = vtanh.pop %v2934
    %v2951 = vtanh.pop %v2935
    %v2952 = vtanh.pop %v2936
    %v2953 = vtanh.pop %v2937
    %v2954 = vtanh.pop %v2938
    %v2955 = vtanh.pop %v2939
    %v2956 = vtanh.pop %v2940
    %v2957 = vtanh.pop %v2941
    %v2958 = vtanh.pop %v2942
    %v2959 = vtanh.pop %v2943
    %v2960 = vtanh.pop %v2944
    %v2961 = vtanh.pop %v2945
    %2962 = vst [vmem:[%s2736] sm:$0xff] %v2946
    %2963 = vst [vmem:[%s2736 + $0x40] sm:$0xff] %v2947
    %2964 = vst [vmem:[%s2736 + $0x80] sm:$0xff] %v2948
    %2965 = vst [vmem:[%s2736 + $0xc0] sm:$0xff] %v2949
    %2966 = vst [vmem:[%s2736 + $0x100] sm:$0xff] %v2950
    %2967 = vst [vmem:[%s2736 + $0x140] sm:$0xff] %v2951
    %2968 = vst [vmem:[%s2736 + $0x180] sm:$0xff] %v2952
    %2969 = vst [vmem:[%s2736 + $0x1c0] sm:$0xff] %v2953
    %2970 = vst [vmem:[%s2736 + $0x200] sm:$0xff] %v2954
    %2971 = vst [vmem:[%s2736 + $0x240] sm:$0xff] %v2955
    %2972 = vst [vmem:[%s2736 + $0x280] sm:$0xff] %v2956
    %2973 = vst [vmem:[%s2736 + $0x2c0] sm:$0xff] %v2957
    %2974 = vst [vmem:[%s2736 + $0x300] sm:$0xff] %v2958
    %2975 = vst [vmem:[%s2736 + $0x340] sm:$0xff] %v2959
    %2976 = vst [vmem:[%s2736 + $0x380] sm:$0xff] %v2960
    %2977 = vst [vmem:[%s2736 + $0x3c0] sm:$0xff] %v2961
    %2978 = vst [vmem:[#allocation3] sm:$0xff] %v2946
    %2979 = vst [vmem:[#allocation3 + $0x8] sm:$0xff] %v2947
    %2980 = vst [vmem:[#allocation3 + $0x10] sm:$0xff] %v2948
    %2981 = vst [vmem:[#allocation3 + $0x18] sm:$0xff] %v2949
    %2982 = vst [vmem:[#allocation3 + $0x20] sm:$0xff] %v2950
    %2983 = vst [vmem:[#allocation3 + $0x28] sm:$0xff] %v2951
    %2984 = vst [vmem:[#allocation3 + $0x30] sm:$0xff] %v2952
    %2985 = vst [vmem:[#allocation3 + $0x38] sm:$0xff] %v2953
    %2986 = vst [vmem:[#allocation3 + $0x40] sm:$0xff] %v2954
    %2987 = vst [vmem:[#allocation3 + $0x48] sm:$0xff] %v2955
    %2988 = vst [vmem:[#allocation3 + $0x50] sm:$0xff] %v2956
    %2989 = vst [vmem:[#allocation3 + $0x58] sm:$0xff] %v2957
    %2990 = vst [vmem:[#allocation3 + $0x60] sm:$0xff] %v2958
    %2991 = vst [vmem:[#allocation3 + $0x68] sm:$0xff] %v2959
    %2992 = vst [vmem:[#allocation3 + $0x70] sm:$0xff] %v2960
    %2993 = vst [vmem:[#allocation3 + $0x78] sm:$0xff] %v2961
    // Predicated region
    $region38: #{tpu_custom_call.1} parent=1 // pred_check
      %p2994 = pneg %p895
    $region39: #{tpu_custom_call.1} parent=1 // pred_check_branch
      %2996 = sbr.rel (%p2994) target = $region41
    $region40: #{tpu_custom_call.1} parent=1 // pred_region
      %2997 = vst [vmem:[#allocation8] sm:$0xff] %v2946
      %2998 = vst [vmem:[#allocation8 + $0x8] sm:$0xff] %v2947
      %2999 = vst [vmem:[#allocation8 + $0x10] sm:$0xff] %v2948
      %3000 = vst [vmem:[#allocation8 + $0x18] sm:$0xff] %v2949
      %3001 = vst [vmem:[#allocation8 + $0x20] sm:$0xff] %v2950
      %3002 = vst [vmem:[#allocation8 + $0x28] sm:$0xff] %v2951
      %3003 = vst [vmem:[#allocation8 + $0x30] sm:$0xff] %v2952
      %3004 = vst [vmem:[#allocation8 + $0x38] sm:$0xff] %v2953
      %3005 = vst [vmem:[#allocation8 + $0x40] sm:$0xff] %v2954
      %3006 = vst [vmem:[#allocation8 + $0x48] sm:$0xff] %v2955
      %3007 = vst [vmem:[#allocation8 + $0x50] sm:$0xff] %v2956
      %3008 = vst [vmem:[#allocation8 + $0x58] sm:$0xff] %v2957
      %3009 = vst [vmem:[#allocation8 + $0x60] sm:$0xff] %v2958
      %3010 = vst [vmem:[#allocation8 + $0x68] sm:$0xff] %v2959
      %3011 = vst [vmem:[#allocation8 + $0x70] sm:$0xff] %v2960
      %3012 = vst [vmem:[#allocation8 + $0x78] sm:$0xff] %v2961
    $region41: #{tpu_custom_call.1} parent=1 // pred_fallthru
      _
    %v3013 = vld [vmem:[#allocation2] sm:$0xff]
    %v3014 = vld [vmem:[#allocation2 + $0x8] sm:$0xff]
    %v3015 = vld [vmem:[#allocation2 + $0x10] sm:$0xff]
    %v3016 = vld [vmem:[#allocation2 + $0x18] sm:$0xff]
    %v3017 = vld [vmem:[#allocation2 + $0x20] sm:$0xff]
    %v3018 = vld [vmem:[#allocation2 + $0x28] sm:$0xff]
    %v3019 = vld [vmem:[#allocation2 + $0x30] sm:$0xff]
    %v3020 = vld [vmem:[#allocation2 + $0x38] sm:$0xff]
    %v3021 = vld [vmem:[#allocation2 + $0x40] sm:$0xff]
    %v3022 = vld [vmem:[#allocation2 + $0x48] sm:$0xff]
    %v3023 = vld [vmem:[#allocation2 + $0x50] sm:$0xff]
    %v3024 = vld [vmem:[#allocation2 + $0x58] sm:$0xff]
    %v3025 = vld [vmem:[#allocation2 + $0x60] sm:$0xff]
    %v3026 = vld [vmem:[#allocation2 + $0x68] sm:$0xff]
    %v3027 = vld [vmem:[#allocation2 + $0x70] sm:$0xff]
    %v3028 = vld [vmem:[#allocation2 + $0x78] sm:$0xff]
    %v3029 = vld [vmem:[#allocation2 + $0x80] sm:$0xff]
    %v3030 = vld [vmem:[#allocation2 + $0x88] sm:$0xff]
    %v3031 = vld [vmem:[#allocation2 + $0x90] sm:$0xff]
    %v3032 = vld [vmem:[#allocation2 + $0x98] sm:$0xff]
    %v3033 = vld [vmem:[#allocation2 + $0xa0] sm:$0xff]
    %v3034 = vld [vmem:[#allocation2 + $0xa8] sm:$0xff]
    %v3035 = vld [vmem:[#allocation2 + $0xb0] sm:$0xff]
    %v3036 = vld [vmem:[#allocation2 + $0xb8] sm:$0xff]
    %v3037 = vld [vmem:[#allocation2 + $0xc0] sm:$0xff]
    %v3038 = vld [vmem:[#allocation2 + $0xc8] sm:$0xff]
    %v3039 = vld [vmem:[#allocation2 + $0xd0] sm:$0xff]
    %v3040 = vld [vmem:[#allocation2 + $0xd8] sm:$0xff]
    %v3041 = vld [vmem:[#allocation2 + $0xe0] sm:$0xff]
    %v3042 = vld [vmem:[#allocation2 + $0xe8] sm:$0xff]
    %v3043 = vld [vmem:[#allocation2 + $0xf0] sm:$0xff]
    %v3044 = vld [vmem:[#allocation2 + $0xf8] sm:$0xff]
    %v3045 = vld [vmem:[#allocation2 + $0x100] sm:$0xff]
    %v3046 = vld [vmem:[#allocation2 + $0x108] sm:$0xff]
    %v3047 = vld [vmem:[#allocation2 + $0x110] sm:$0xff]
    %v3048 = vld [vmem:[#allocation2 + $0x118] sm:$0xff]
    %v3049 = vld [vmem:[#allocation2 + $0x120] sm:$0xff]
    %v3050 = vld [vmem:[#allocation2 + $0x128] sm:$0xff]
    %v3051 = vld [vmem:[#allocation2 + $0x130] sm:$0xff]
    %v3052 = vld [vmem:[#allocation2 + $0x138] sm:$0xff]
    %v3053 = vld [vmem:[#allocation2 + $0x140] sm:$0xff]
    %v3054 = vld [vmem:[#allocation2 + $0x148] sm:$0xff]
    %v3055 = vld [vmem:[#allocation2 + $0x150] sm:$0xff]
    %v3056 = vld [vmem:[#allocation2 + $0x158] sm:$0xff]
    %v3057 = vld [vmem:[#allocation2 + $0x160] sm:$0xff]
    %v3058 = vld [vmem:[#allocation2 + $0x168] sm:$0xff]
    %v3059 = vld [vmem:[#allocation2 + $0x170] sm:$0xff]
    %v3060 = vld [vmem:[#allocation2 + $0x178] sm:$0xff]
    %v3061 = vld [vmem:[#allocation2 + $0x180] sm:$0xff]
    %v3062 = vld [vmem:[#allocation2 + $0x188] sm:$0xff]
    %v3063 = vld [vmem:[#allocation2 + $0x190] sm:$0xff]
    %v3064 = vld [vmem:[#allocation2 + $0x198] sm:$0xff]
    %v3065 = vld [vmem:[#allocation2 + $0x1a0] sm:$0xff]
    %v3066 = vld [vmem:[#allocation2 + $0x1a8] sm:$0xff]
    %v3067 = vld [vmem:[#allocation2 + $0x1b0] sm:$0xff]
    %v3068 = vld [vmem:[#allocation2 + $0x1b8] sm:$0xff]
    %v3069 = vld [vmem:[#allocation2 + $0x1c0] sm:$0xff]
    %v3070 = vld [vmem:[#allocation2 + $0x1c8] sm:$0xff]
    %v3071 = vld [vmem:[#allocation2 + $0x1d0] sm:$0xff]
    %v3072 = vld [vmem:[#allocation2 + $0x1d8] sm:$0xff]
    %v3073 = vld [vmem:[#allocation2 + $0x1e0] sm:$0xff]
    %v3074 = vld [vmem:[#allocation2 + $0x1e8] sm:$0xff]
    %v3075 = vld [vmem:[#allocation2 + $0x1f0] sm:$0xff]
    %v3076 = vld [vmem:[#allocation2 + $0x1f8] sm:$0xff]
    %v3077 = vld [vmem:[#allocation2 + $0x200] sm:$0xff]
    %v3078 = vld [vmem:[#allocation2 + $0x208] sm:$0xff]
    %v3079 = vld [vmem:[#allocation2 + $0x210] sm:$0xff]
    %v3080 = vld [vmem:[#allocation2 + $0x218] sm:$0xff]
    %v3081 = vld [vmem:[#allocation2 + $0x220] sm:$0xff]
    %v3082 = vld [vmem:[#allocation2 + $0x228] sm:$0xff]
    %v3083 = vld [vmem:[#allocation2 + $0x230] sm:$0xff]
    %v3084 = vld [vmem:[#allocation2 + $0x238] sm:$0xff]
    %v3085 = vld [vmem:[#allocation2 + $0x240] sm:$0xff]
    %v3086 = vld [vmem:[#allocation2 + $0x248] sm:$0xff]
    %v3087 = vld [vmem:[#allocation2 + $0x250] sm:$0xff]
    %v3088 = vld [vmem:[#allocation2 + $0x258] sm:$0xff]
    %v3089 = vld [vmem:[#allocation2 + $0x260] sm:$0xff]
    %v3090 = vld [vmem:[#allocation2 + $0x268] sm:$0xff]
    %v3091 = vld [vmem:[#allocation2 + $0x270] sm:$0xff]
    %v3092 = vld [vmem:[#allocation2 + $0x278] sm:$0xff]
    %v3093 = vld [vmem:[#allocation2 + $0x280] sm:$0xff]
    %v3094 = vld [vmem:[#allocation2 + $0x288] sm:$0xff]
    %v3095 = vld [vmem:[#allocation2 + $0x290] sm:$0xff]
    %v3096 = vld [vmem:[#allocation2 + $0x298] sm:$0xff]
    %v3097 = vld [vmem:[#allocation2 + $0x2a0] sm:$0xff]
    %v3098 = vld [vmem:[#allocation2 + $0x2a8] sm:$0xff]
    %v3099 = vld [vmem:[#allocation2 + $0x2b0] sm:$0xff]
    %v3100 = vld [vmem:[#allocation2 + $0x2b8] sm:$0xff]
    %v3101 = vld [vmem:[#allocation2 + $0x2c0] sm:$0xff]
    %v3102 = vld [vmem:[#allocation2 + $0x2c8] sm:$0xff]
    %v3103 = vld [vmem:[#allocation2 + $0x2d0] sm:$0xff]
    %v3104 = vld [vmem:[#allocation2 + $0x2d8] sm:$0xff]
    %v3105 = vld [vmem:[#allocation2 + $0x2e0] sm:$0xff]
    %v3106 = vld [vmem:[#allocation2 + $0x2e8] sm:$0xff]
    %v3107 = vld [vmem:[#allocation2 + $0x2f0] sm:$0xff]
    %v3108 = vld [vmem:[#allocation2 + $0x2f8] sm:$0xff]
    %v3109 = vld [vmem:[#allocation2 + $0x300] sm:$0xff]
    %v3110 = vld [vmem:[#allocation2 + $0x308] sm:$0xff]
    %v3111 = vld [vmem:[#allocation2 + $0x310] sm:$0xff]
    %v3112 = vld [vmem:[#allocation2 + $0x318] sm:$0xff]
    %v3113 = vld [vmem:[#allocation2 + $0x320] sm:$0xff]
    %v3114 = vld [vmem:[#allocation2 + $0x328] sm:$0xff]
    %v3115 = vld [vmem:[#allocation2 + $0x330] sm:$0xff]
    %v3116 = vld [vmem:[#allocation2 + $0x338] sm:$0xff]
    %v3117 = vld [vmem:[#allocation2 + $0x340] sm:$0xff]
    %v3118 = vld [vmem:[#allocation2 + $0x348] sm:$0xff]
    %v3119 = vld [vmem:[#allocation2 + $0x350] sm:$0xff]
    %v3120 = vld [vmem:[#allocation2 + $0x358] sm:$0xff]
    %v3121 = vld [vmem:[#allocation2 + $0x360] sm:$0xff]
    %v3122 = vld [vmem:[#allocation2 + $0x368] sm:$0xff]
    %v3123 = vld [vmem:[#allocation2 + $0x370] sm:$0xff]
    %v3124 = vld [vmem:[#allocation2 + $0x378] sm:$0xff]
    %v3125 = vld [vmem:[#allocation2 + $0x380] sm:$0xff]
    %v3126 = vld [vmem:[#allocation2 + $0x388] sm:$0xff]
    %v3127 = vld [vmem:[#allocation2 + $0x390] sm:$0xff]
    %v3128 = vld [vmem:[#allocation2 + $0x398] sm:$0xff]
    %v3129 = vld [vmem:[#allocation2 + $0x3a0] sm:$0xff]
    %v3130 = vld [vmem:[#allocation2 + $0x3a8] sm:$0xff]
    %v3131 = vld [vmem:[#allocation2 + $0x3b0] sm:$0xff]
    %v3132 = vld [vmem:[#allocation2 + $0x3b8] sm:$0xff]
    %v3133 = vld [vmem:[#allocation2 + $0x3c0] sm:$0xff]
    %v3134 = vld [vmem:[#allocation2 + $0x3c8] sm:$0xff]
    %v3135 = vld [vmem:[#allocation2 + $0x3d0] sm:$0xff]
    %v3136 = vld [vmem:[#allocation2 + $0x3d8] sm:$0xff]
    %v3137 = vld [vmem:[#allocation2 + $0x3e0] sm:$0xff]
    %v3138 = vld [vmem:[#allocation2 + $0x3e8] sm:$0xff]
    %v3139 = vld [vmem:[#allocation2 + $0x3f0] sm:$0xff]
    %v3140 = vld [vmem:[#allocation2 + $0x3f8] sm:$0xff]
    %v3141 = vld [vmem:[%s4] sm:$0xff]
    %v3142 = vld [vmem:[%s4 + $0x8] sm:$0xff]
    %v3143 = vld [vmem:[%s6] sm:$0xff]
    %v3144 = vld [vmem:[%s6 + $0x8] sm:$0xff]
    %3146 = vset.pattern.permute.xlu0 0
    %3147 = vperm.xlu0 %3146, %v3143
    %v3148 = vpop.permute.xlu0 %3147
    %3151 = vset.pattern.permute.xlu0 0
    %3152 = vperm.xlu0 %3151, %v3144
    %v3153 = vpop.permute.xlu0 %3152
    %3155 = vmatprep.subr.mxu0 %v3134
    %3156 = vmatpush1.msra.mxu0 %v3133
    %3157 = vmatprep.subr.mxu0 %v3126
    %3158 = vmatpush1.msra.mxu0 %v3125
    %3159 = vmatprep.subr.mxu0 %v3118
    %3160 = vmatpush1.msra.mxu0 %v3117
    %3161 = vmatprep.subr.mxu0 %v3110
    %3162 = vmatpush1.msra.mxu0 %v3109
    %3163 = vmatprep.subr.mxu0 %v3102
    %3164 = vmatpush1.msra.mxu0 %v3101
    %3165 = vmatprep.subr.mxu0 %v3094
    %3166 = vmatpush1.msra.mxu0 %v3093
    %3167 = vmatprep.subr.mxu0 %v3086
    %3168 = vmatpush1.msra.mxu0 %v3085
    %3169 = vmatprep.subr.mxu0 %v3078
    %3170 = vmatpush1.msra.mxu0 %v3077
    %3171 = vmatprep.subr.mxu0 %v3070
    %3172 = vmatpush1.msra.mxu0 %v3069
    %3173 = vmatprep.subr.mxu0 %v3062
    %3174 = vmatpush1.msra.mxu0 %v3061
    %3175 = vmatprep.subr.mxu0 %v3054
    %3176 = vmatpush1.msra.mxu0 %v3053
    %3177 = vmatprep.subr.mxu0 %v3046
    %3178 = vmatpush1.msra.mxu0 %v3045
    %3179 = vmatprep.subr.mxu0 %v3038
    %3180 = vmatpush1.msra.mxu0 %v3037
    %3181 = vmatprep.subr.mxu0 %v3030
    %3182 = vmatpush1.msra.mxu0 %v3029
    %3183 = vmatprep.subr.mxu0 %v3022
    %3184 = vmatpush1.msra.mxu0 %v3021
    %3185 = vmatprep.subr.mxu0 %v3014
    %3186 = vmatpush1.msra.mxu0 %v3013
    %3187 = vmatprep.subr.mxu0 0.0
    %3188 = vmatpush2.msra.mxu0 0.0
    %3189 = vmatprep.subr.mxu0 0.0
    %3190 = vmatpush2.msra.mxu0 0.0
    %3191 = vmatprep.subr.mxu0 0.0
    %3192 = vmatpush2.msra.mxu0 0.0
    %3193 = vmatprep.subr.mxu0 0.0
    %3194 = vmatpush2.msra.mxu0 0.0
    %3195 = vmatprep.subr.mxu0 0.0
    %3196 = vmatpush2.msra.mxu0 0.0
    %3197 = vmatprep.subr.mxu0 0.0
    %3198 = vmatpush2.msra.mxu0 0.0
    %3199 = vmatprep.subr.mxu0 0.0
    %3200 = vmatpush2.msra.mxu0 0.0
    %3201 = vmatprep.subr.mxu0 0.0
    %3202 = vmatpush2.msra.mxu0 0.0
    %3203 = vmatprep.subr.mxu0 0.0
    %3204 = vmatpush2.msra.mxu0 0.0
    %3205 = vmatprep.subr.mxu0 0.0
    %3206 = vmatpush2.msra.mxu0 0.0
    %3207 = vmatprep.subr.mxu0 0.0
    %3208 = vmatpush2.msra.mxu0 0.0
    %3209 = vmatprep.subr.mxu0 0.0
    %3210 = vmatpush2.msra.mxu0 0.0
    %3211 = vmatprep.subr.mxu0 0.0
    %3212 = vmatpush2.msra.mxu0 0.0
    %3213 = vmatprep.subr.mxu0 0.0
    %3214 = vmatpush2.msra.mxu0 0.0
    %3215 = vmatprep.subr.mxu0 0.0
    %3216 = vmatpush2.msra.mxu0 0.0
    %3217 = vmatprep.subr.mxu0 0.0
    %3218 = vmatpush2.msra.mxu0 0.0
    %3219 = vmatprep.mubr.f32.mxu0 0.0
    %3220 = vmatmul.mubr.f32.gmra.mxu0 %v3141
    %v3221 = vpop.f32.mrf.mxu0
    %v3222 = vadd.f32 %v3148, %v3221
    %v3223 = vpop.f32.mrf.mxu0
    %v3224 = vadd.f32 %v3148, %v3223
    %3225 = vmatprep.mubr.f32.mxu0 0.0
    %3226 = vmatmul.mubr.f32.gmra.mxu0 %v3142
    %v3227 = vpop.f32.mrf.mxu0
    %v3228 = vadd.f32 %v3153, %v3227
    %v3229 = vpop.f32.mrf.mxu0
    %v3230 = vadd.f32 %v3153, %v3229
    %3231 = vdwg.mxu0
    %3232 = vmatprep.subr.mxu0 %v3136
    %3233 = vmatpush1.msra.mxu0 %v3135
    %3234 = vmatprep.subr.mxu0 %v3128
    %3235 = vmatpush1.msra.mxu0 %v3127
    %3236 = vmatprep.subr.mxu0 %v3120
    %3237 = vmatpush1.msra.mxu0 %v3119
    %3238 = vmatprep.subr.mxu0 %v3112
    %3239 = vmatpush1.msra.mxu0 %v3111
    %3240 = vmatprep.subr.mxu0 %v3104
    %3241 = vmatpush1.msra.mxu0 %v3103
    %3242 = vmatprep.subr.mxu0 %v3096
    %3243 = vmatpush1.msra.mxu0 %v3095
    %3244 = vmatprep.subr.mxu0 %v3088
    %3245 = vmatpush1.msra.mxu0 %v3087
    %3246 = vmatprep.subr.mxu0 %v3080
    %3247 = vmatpush1.msra.mxu0 %v3079
    %3248 = vmatprep.subr.mxu0 %v3072
    %3249 = vmatpush1.msra.mxu0 %v3071
    %3250 = vmatprep.subr.mxu0 %v3064
    %3251 = vmatpush1.msra.mxu0 %v3063
    %3252 = vmatprep.subr.mxu0 %v3056
    %3253 = vmatpush1.msra.mxu0 %v3055
    %3254 = vmatprep.subr.mxu0 %v3048
    %3255 = vmatpush1.msra.mxu0 %v3047
    %3256 = vmatprep.subr.mxu0 %v3040
    %3257 = vmatpush1.msra.mxu0 %v3039
    %3258 = vmatprep.subr.mxu0 %v3032
    %3259 = vmatpush1.msra.mxu0 %v3031
    %3260 = vmatprep.subr.mxu0 %v3024
    %3261 = vmatpush1.msra.mxu0 %v3023
    %3262 = vmatprep.subr.mxu0 %v3016
    %3263 = vmatpush1.msra.mxu0 %v3015
    %3264 = vmatprep.subr.mxu0 0.0
    %3265 = vmatpush2.msra.mxu0 0.0
    %3266 = vmatprep.subr.mxu0 0.0
    %3267 = vmatpush2.msra.mxu0 0.0
    %3268 = vmatprep.subr.mxu0 0.0
    %3269 = vmatpush2.msra.mxu0 0.0
    %3270 = vmatprep.subr.mxu0 0.0
    %3271 = vmatpush2.msra.mxu0 0.0
    %3272 = vmatprep.subr.mxu0 0.0
    %3273 = vmatpush2.msra.mxu0 0.0
    %3274 = vmatprep.subr.mxu0 0.0
    %3275 = vmatpush2.msra.mxu0 0.0
    %3276 = vmatprep.subr.mxu0 0.0
    %3277 = vmatpush2.msra.mxu0 0.0
    %3278 = vmatprep.subr.mxu0 0.0
    %3279 = vmatpush2.msra.mxu0 0.0
    %3280 = vmatprep.subr.mxu0 0.0
    %3281 = vmatpush2.msra.mxu0 0.0
    %3282 = vmatprep.subr.mxu0 0.0
    %3283 = vmatpush2.msra.mxu0 0.0
    %3284 = vmatprep.subr.mxu0 0.0
    %3285 = vmatpush2.msra.mxu0 0.0
    %3286 = vmatprep.subr.mxu0 0.0
    %3287 = vmatpush2.msra.mxu0 0.0
    %3288 = vmatprep.subr.mxu0 0.0
    %3289 = vmatpush2.msra.mxu0 0.0
    %3290 = vmatprep.subr.mxu0 0.0
    %3291 = vmatpush2.msra.mxu0 0.0
    %3292 = vmatprep.subr.mxu0 0.0
    %3293 = vmatpush2.msra.mxu0 0.0
    %3294 = vmatprep.subr.mxu0 0.0
    %3295 = vmatpush2.msra.mxu0 0.0
    %3296 = vmatprep.mubr.f32.mxu0 0.0
    %3297 = vmatmul.mubr.f32.gmra.mxu0 %v3141
    %v3298 = vpop.f32.mrf.mxu0
    %v3299 = vadd.f32 %v3148, %v3298
    %v3300 = vpop.f32.mrf.mxu0
    %v3301 = vadd.f32 %v3148, %v3300
    %3302 = vmatprep.mubr.f32.mxu0 0.0
    %3303 = vmatmul.mubr.f32.gmra.mxu0 %v3142
    %v3304 = vpop.f32.mrf.mxu0
    %v3305 = vadd.f32 %v3153, %v3304
    %v3306 = vpop.f32.mrf.mxu0
    %v3307 = vadd.f32 %v3153, %v3306
    %3308 = vdwg.mxu0
    %3309 = vmatprep.subr.mxu0 %v3138
    %3310 = vmatpush1.msra.mxu0 %v3137
    %3311 = vmatprep.subr.mxu0 %v3130
    %3312 = vmatpush1.msra.mxu0 %v3129
    %3313 = vmatprep.subr.mxu0 %v3122
    %3314 = vmatpush1.msra.mxu0 %v3121
    %3315 = vmatprep.subr.mxu0 %v3114
    %3316 = vmatpush1.msra.mxu0 %v3113
    %3317 = vmatprep.subr.mxu0 %v3106
    %3318 = vmatpush1.msra.mxu0 %v3105
    %3319 = vmatprep.subr.mxu0 %v3098
    %3320 = vmatpush1.msra.mxu0 %v3097
    %3321 = vmatprep.subr.mxu0 %v3090
    %3322 = vmatpush1.msra.mxu0 %v3089
    %3323 = vmatprep.subr.mxu0 %v3082
    %3324 = vmatpush1.msra.mxu0 %v3081
    %3325 = vmatprep.subr.mxu0 %v3074
    %3326 = vmatpush1.msra.mxu0 %v3073
    %3327 = vmatprep.subr.mxu0 %v3066
    %3328 = vmatpush1.msra.mxu0 %v3065
    %3329 = vmatprep.subr.mxu0 %v3058
    %3330 = vmatpush1.msra.mxu0 %v3057
    %3331 = vmatprep.subr.mxu0 %v3050
    %3332 = vmatpush1.msra.mxu0 %v3049
    %3333 = vmatprep.subr.mxu0 %v3042
    %3334 = vmatpush1.msra.mxu0 %v3041
    %3335 = vmatprep.subr.mxu0 %v3034
    %3336 = vmatpush1.msra.mxu0 %v3033
    %3337 = vmatprep.subr.mxu0 %v3026
    %3338 = vmatpush1.msra.mxu0 %v3025
    %3339 = vmatprep.subr.mxu0 %v3018
    %3340 = vmatpush1.msra.mxu0 %v3017
    %3341 = vmatprep.subr.mxu0 0.0
    %3342 = vmatpush2.msra.mxu0 0.0
    %3343 = vmatprep.subr.mxu0 0.0
    %3344 = vmatpush2.msra.mxu0 0.0
    %3345 = vmatprep.subr.mxu0 0.0
    %3346 = vmatpush2.msra.mxu0 0.0
    %3347 = vmatprep.subr.mxu0 0.0
    %3348 = vmatpush2.msra.mxu0 0.0
    %3349 = vmatprep.subr.mxu0 0.0
    %3350 = vmatpush2.msra.mxu0 0.0
    %3351 = vmatprep.subr.mxu0 0.0
    %3352 = vmatpush2.msra.mxu0 0.0
    %3353 = vmatprep.subr.mxu0 0.0
    %3354 = vmatpush2.msra.mxu0 0.0
    %3355 = vmatprep.subr.mxu0 0.0
    %3356 = vmatpush2.msra.mxu0 0.0
    %3357 = vmatprep.subr.mxu0 0.0
    %3358 = vmatpush2.msra.mxu0 0.0
    %3359 = vmatprep.subr.mxu0 0.0
    %3360 = vmatpush2.msra.mxu0 0.0
    %3361 = vmatprep.subr.mxu0 0.0
    %3362 = vmatpush2.msra.mxu0 0.0
    %3363 = vmatprep.subr.mxu0 0.0
    %3364 = vmatpush2.msra.mxu0 0.0
    %3365 = vmatprep.subr.mxu0 0.0
    %3366 = vmatpush2.msra.mxu0 0.0
    %3367 = vmatprep.subr.mxu0 0.0
    %3368 = vmatpush2.msra.mxu0 0.0
    %3369 = vmatprep.subr.mxu0 0.0
    %3370 = vmatpush2.msra.mxu0 0.0
    %3371 = vmatprep.subr.mxu0 0.0
    %3372 = vmatpush2.msra.mxu0 0.0
    %3373 = vmatprep.mubr.f32.mxu0 0.0
    %3374 = vmatmul.mubr.f32.gmra.mxu0 %v3141
    %v3375 = vpop.f32.mrf.mxu0
    %v3376 = vadd.f32 %v3148, %v3375
    %v3377 = vpop.f32.mrf.mxu0
    %v3378 = vadd.f32 %v3148, %v3377
    %3379 = vmatprep.mubr.f32.mxu0 0.0
    %3380 = vmatmul.mubr.f32.gmra.mxu0 %v3142
    %v3381 = vpop.f32.mrf.mxu0
    %v3382 = vadd.f32 %v3153, %v3381
    %v3383 = vpop.f32.mrf.mxu0
    %v3384 = vadd.f32 %v3153, %v3383
    %3385 = vdwg.mxu0
    %3386 = vmatprep.subr.mxu0 %v3140
    %3387 = vmatpush1.msra.mxu0 %v3139
    %3388 = vmatprep.subr.mxu0 %v3132
    %3389 = vmatpush1.msra.mxu0 %v3131
    %3390 = vmatprep.subr.mxu0 %v3124
    %3391 = vmatpush1.msra.mxu0 %v3123
    %3392 = vmatprep.subr.mxu0 %v3116
    %3393 = vmatpush1.msra.mxu0 %v3115
    %3394 = vmatprep.subr.mxu0 %v3108
    %3395 = vmatpush1.msra.mxu0 %v3107
    %3396 = vmatprep.subr.mxu0 %v3100
    %3397 = vmatpush1.msra.mxu0 %v3099
    %3398 = vmatprep.subr.mxu0 %v3092
    %3399 = vmatpush1.msra.mxu0 %v3091
    %3400 = vmatprep.subr.mxu0 %v3084
    %3401 = vmatpush1.msra.mxu0 %v3083
    %3402 = vmatprep.subr.mxu0 %v3076
    %3403 = vmatpush1.msra.mxu0 %v3075
    %3404 = vmatprep.subr.mxu0 %v3068
    %3405 = vmatpush1.msra.mxu0 %v3067
    %3406 = vmatprep.subr.mxu0 %v3060
    %3407 = vmatpush1.msra.mxu0 %v3059
    %3408 = vmatprep.subr.mxu0 %v3052
    %3409 = vmatpush1.msra.mxu0 %v3051
    %3410 = vmatprep.subr.mxu0 %v3044
    %3411 = vmatpush1.msra.mxu0 %v3043
    %3412 = vmatprep.subr.mxu0 %v3036
    %3413 = vmatpush1.msra.mxu0 %v3035
    %3414 = vmatprep.subr.mxu0 %v3028
    %3415 = vmatpush1.msra.mxu0 %v3027
    %3416 = vmatprep.subr.mxu0 %v3020
    %3417 = vmatpush1.msra.mxu0 %v3019
    %3418 = vmatprep.subr.mxu0 0.0
    %3419 = vmatpush2.msra.mxu0 0.0
    %3420 = vmatprep.subr.mxu0 0.0
    %3421 = vmatpush2.msra.mxu0 0.0
    %3422 = vmatprep.subr.mxu0 0.0
    %3423 = vmatpush2.msra.mxu0 0.0
    %3424 = vmatprep.subr.mxu0 0.0
    %3425 = vmatpush2.msra.mxu0 0.0
    %3426 = vmatprep.subr.mxu0 0.0
    %3427 = vmatpush2.msra.mxu0 0.0
    %3428 = vmatprep.subr.mxu0 0.0
    %3429 = vmatpush2.msra.mxu0 0.0
    %3430 = vmatprep.subr.mxu0 0.0
    %3431 = vmatpush2.msra.mxu0 0.0
    %3432 = vmatprep.subr.mxu0 0.0
    %3433 = vmatpush2.msra.mxu0 0.0
    %3434 = vmatprep.subr.mxu0 0.0
    %3435 = vmatpush2.msra.mxu0 0.0
    %3436 = vmatprep.subr.mxu0 0.0
    %3437 = vmatpush2.msra.mxu0 0.0
    %3438 = vmatprep.subr.mxu0 0.0
    %3439 = vmatpush2.msra.mxu0 0.0
    %3440 = vmatprep.subr.mxu0 0.0
    %3441 = vmatpush2.msra.mxu0 0.0
    %3442 = vmatprep.subr.mxu0 0.0
    %3443 = vmatpush2.msra.mxu0 0.0
    %3444 = vmatprep.subr.mxu0 0.0
    %3445 = vmatpush2.msra.mxu0 0.0
    %3446 = vmatprep.subr.mxu0 0.0
    %3447 = vmatpush2.msra.mxu0 0.0
    %3448 = vmatprep.subr.mxu0 0.0
    %3449 = vmatpush2.msra.mxu0 0.0
    %3450 = vmatprep.mubr.f32.mxu0 0.0
    %3451 = vmatmul.mubr.f32.gmra.mxu0 %v3141
    %v3452 = vpop.f32.mrf.mxu0
    %v3453 = vadd.f32 %v3148, %v3452
    %v3454 = vpop.f32.mrf.mxu0
    %v3455 = vadd.f32 %v3148, %v3454
    %3456 = vmatprep.mubr.f32.mxu0 0.0
    %3457 = vmatmul.mubr.f32.gmra.mxu0 %v3142
    %v3458 = vpop.f32.mrf.mxu0
    %v3459 = vadd.f32 %v3153, %v3458
    %v3460 = vpop.f32.mrf.mxu0
    %v3461 = vadd.f32 %v3153, %v3460
    %3462 = vdwg.mxu0
    %v3463 = vmax.f32 %v3222, %v3228
    %v3464 = vrot.slane %v3463, 4
    %v3465 = vmax.f32 %v3463, %v3464
    %v3466 = vrot.slane %v3465, 2
    %v3467 = vmax.f32 %v3465, %v3466
    %v3468 = vrot.slane %v3467, 1
    %v3469 = vmax.f32 %v3467, %v3468
    %v3470 = vmax.f32 %v3224, %v3230
    %v3471 = vrot.slane %v3470, 4
    %v3472 = vmax.f32 %v3470, %v3471
    %v3473 = vrot.slane %v3472, 2
    %v3474 = vmax.f32 %v3472, %v3473
    %v3475 = vrot.slane %v3474, 1
    %v3476 = vmax.f32 %v3474, %v3475
    %v3477 = vmax.f32 %v3299, %v3305
    %v3478 = vrot.slane %v3477, 4
    %v3479 = vmax.f32 %v3477, %v3478
    %v3480 = vrot.slane %v3479, 2
    %v3481 = vmax.f32 %v3479, %v3480
    %v3482 = vrot.slane %v3481, 1
    %v3483 = vmax.f32 %v3481, %v3482
    %v3484 = vmax.f32 %v3301, %v3307
    %v3485 = vrot.slane %v3484, 4
    %v3486 = vmax.f32 %v3484, %v3485
    %v3487 = vrot.slane %v3486, 2
    %v3488 = vmax.f32 %v3486, %v3487
    %v3489 = vrot.slane %v3488, 1
    %v3490 = vmax.f32 %v3488, %v3489
    %v3491 = vmax.f32 %v3376, %v3382
    %v3492 = vrot.slane %v3491, 4
    %v3493 = vmax.f32 %v3491, %v3492
    %v3494 = vrot.slane %v3493, 2
    %v3495 = vmax.f32 %v3493, %v3494
    %v3496 = vrot.slane %v3495, 1
    %v3497 = vmax.f32 %v3495, %v3496
    %v3498 = vmax.f32 %v3378, %v3384
    %v3499 = vrot.slane %v3498, 4
    %v3500 = vmax.f32 %v3498, %v3499
    %v3501 = vrot.slane %v3500, 2
    %v3502 = vmax.f32 %v3500, %v3501
    %v3503 = vrot.slane %v3502, 1
    %v3504 = vmax.f32 %v3502, %v3503
    %v3505 = vmax.f32 %v3453, %v3459
    %v3506 = vrot.slane %v3505, 4
    %v3507 = vmax.f32 %v3505, %v3506
    %v3508 = vrot.slane %v3507, 2
    %v3509 = vmax.f32 %v3507, %v3508
    %v3510 = vrot.slane %v3509, 1
    %v3511 = vmax.f32 %v3509, %v3510
    %v3512 = vmax.f32 %v3455, %v3461
    %v3513 = vrot.slane %v3512, 4
    %v3514 = vmax.f32 %v3512, %v3513
    %v3515 = vrot.slane %v3514, 2
    %v3516 = vmax.f32 %v3514, %v3515
    %v3517 = vrot.slane %v3516, 1
    %v3518 = vmax.f32 %v3516, %v3517
    %v3519 = vsub.f32 %v3222, %v3469
    %v3520 = vsub.f32 %v3224, %v3476
    %v3521 = vsub.f32 %v3299, %v3483
    %v3522 = vsub.f32 %v3301, %v3490
    %v3523 = vsub.f32 %v3376, %v3497
    %v3524 = vsub.f32 %v3378, %v3504
    %v3525 = vsub.f32 %v3453, %v3511
    %v3526 = vsub.f32 %v3455, %v3518
    %v3527 = vsub.f32 %v3228, %v3469
    %v3528 = vsub.f32 %v3230, %v3476
    %v3529 = vsub.f32 %v3305, %v3483
    %v3530 = vsub.f32 %v3307, %v3490
    %v3531 = vsub.f32 %v3382, %v3497
    %v3532 = vsub.f32 %v3384, %v3504
    %v3533 = vsub.f32 %v3459, %v3511
    %v3534 = vsub.f32 %v3461, %v3518
    %v3535 = vmul.f32 %v3519, 1.442695
    %v3536 = vpow.pop %v3535
    %v3537 = vmul.f32 %v3520, 1.442695
    %v3538 = vpow.pop %v3537
    %v3539 = vmul.f32 %v3521, 1.442695
    %v3540 = vpow.pop %v3539
    %v3541 = vmul.f32 %v3522, 1.442695
    %v3542 = vpow.pop %v3541
    %v3543 = vmul.f32 %v3523, 1.442695
    %v3544 = vpow.pop %v3543
    %v3545 = vmul.f32 %v3524, 1.442695
    %v3546 = vpow.pop %v3545
    %v3547 = vmul.f32 %v3525, 1.442695
    %v3548 = vpow.pop %v3547
    %v3549 = vmul.f32 %v3526, 1.442695
    %v3550 = vpow.pop %v3549
    %v3551 = vmul.f32 %v3527, 1.442695
    %v3552 = vpow.pop %v3551
    %v3553 = vmul.f32 %v3528, 1.442695
    %v3554 = vpow.pop %v3553
    %v3555 = vmul.f32 %v3529, 1.442695
    %v3556 = vpow.pop %v3555
    %v3557 = vmul.f32 %v3530, 1.442695
    %v3558 = vpow.pop %v3557
    %v3559 = vmul.f32 %v3531, 1.442695
    %v3560 = vpow.pop %v3559
    %v3561 = vmul.f32 %v3532, 1.442695
    %v3562 = vpow.pop %v3561
    %v3563 = vmul.f32 %v3533, 1.442695
    %v3564 = vpow.pop %v3563
    %v3565 = vmul.f32 %v3534, 1.442695
    %v3566 = vpow.pop %v3565
    %v3567 = vadd.f32 %v3536, %v3552
    %v3568 = vrot.slane %v3567, 4
    %v3569 = vadd.f32 %v3567, %v3568
    %v3570 = vrot.slane %v3569, 2
    %v3571 = vadd.f32 %v3569, %v3570
    %v3572 = vrot.slane %v3571, 1
    %v3573 = vadd.f32 %v3571, %v3572
    %v3574 = vadd.f32 %v3538, %v3554
    %v3575 = vrot.slane %v3574, 4
    %v3576 = vadd.f32 %v3574, %v3575
    %v3577 = vrot.slane %v3576, 2
    %v3578 = vadd.f32 %v3576, %v3577
    %v3579 = vrot.slane %v3578, 1
    %v3580 = vadd.f32 %v3578, %v3579
    %v3581 = vadd.f32 %v3540, %v3556
    %v3582 = vrot.slane %v3581, 4
    %v3583 = vadd.f32 %v3581, %v3582
    %v3584 = vrot.slane %v3583, 2
    %v3585 = vadd.f32 %v3583, %v3584
    %v3586 = vrot.slane %v3585, 1
    %v3587 = vadd.f32 %v3585, %v3586
    %v3588 = vadd.f32 %v3542, %v3558
    %v3589 = vrot.slane %v3588, 4
    %v3590 = vadd.f32 %v3588, %v3589
    %v3591 = vrot.slane %v3590, 2
    %v3592 = vadd.f32 %v3590, %v3591
    %v3593 = vrot.slane %v3592, 1
    %v3594 = vadd.f32 %v3592, %v3593
    %v3595 = vadd.f32 %v3544, %v3560
    %v3596 = vrot.slane %v3595, 4
    %v3597 = vadd.f32 %v3595, %v3596
    %v3598 = vrot.slane %v3597, 2
    %v3599 = vadd.f32 %v3597, %v3598
    %v3600 = vrot.slane %v3599, 1
    %v3601 = vadd.f32 %v3599, %v3600
    %v3602 = vadd.f32 %v3546, %v3562
    %v3603 = vrot.slane %v3602, 4
    %v3604 = vadd.f32 %v3602, %v3603
    %v3605 = vrot.slane %v3604, 2
    %v3606 = vadd.f32 %v3604, %v3605
    %v3607 = vrot.slane %v3606, 1
    %v3608 = vadd.f32 %v3606, %v3607
    %v3609 = vadd.f32 %v3548, %v3564
    %v3610 = vrot.slane %v3609, 4
    %v3611 = vadd.f32 %v3609, %v3610
    %v3612 = vrot.slane %v3611, 2
    %v3613 = vadd.f32 %v3611, %v3612
    %v3614 = vrot.slane %v3613, 1
    %v3615 = vadd.f32 %v3613, %v3614
    %v3616 = vadd.f32 %v3550, %v3566
    %v3617 = vrot.slane %v3616, 4
    %v3618 = vadd.f32 %v3616, %v3617
    %v3619 = vrot.slane %v3618, 2
    %v3620 = vadd.f32 %v3618, %v3619
    %v3621 = vrot.slane %v3620, 1
    %v3622 = vadd.f32 %v3620, %v3621
    %v3623 = vrcp.pop %v3573
    %v3624 = vrcp.pop %v3580
    %v3625 = vrcp.pop %v3587
    %v3626 = vrcp.pop %v3594
    %v3627 = vrcp.pop %v3601
    %v3628 = vrcp.pop %v3608
    %v3629 = vrcp.pop %v3615
    %v3630 = vrcp.pop %v3622
    %v3631 = vmul.f32 %v3536, %v3623
    %v3632 = vmul.f32 %v3538, %v3624
    %v3633 = vmul.f32 %v3540, %v3625
    %v3634 = vmul.f32 %v3542, %v3626
    %v3635 = vmul.f32 %v3544, %v3627
    %v3636 = vmul.f32 %v3546, %v3628
    %v3637 = vmul.f32 %v3548, %v3629
    %v3638 = vmul.f32 %v3550, %v3630
    %v3639 = vmul.f32 %v3552, %v3623
    %v3640 = vmul.f32 %v3554, %v3624
    %v3641 = vmul.f32 %v3556, %v3625
    %v3642 = vmul.f32 %v3558, %v3626
    %v3643 = vmul.f32 %v3560, %v3627
    %v3644 = vmul.f32 %v3562, %v3628
    %v3645 = vmul.f32 %v3564, %v3629
    %v3646 = vmul.f32 %v3566, %v3630
    %3647 = vst [vmem:[#allocation7] sm:$0xff] %v3631
    %3648 = vst [vmem:[#allocation7 + $0x8] sm:$0xff] %v3632
    %3649 = vst [vmem:[#allocation7 + $0x10] sm:$0xff] %v3633
    %3650 = vst [vmem:[#allocation7 + $0x18] sm:$0xff] %v3634
    %3651 = vst [vmem:[#allocation7 + $0x20] sm:$0xff] %v3635
    %3652 = vst [vmem:[#allocation7 + $0x28] sm:$0xff] %v3636
    %3653 = vst [vmem:[#allocation7 + $0x30] sm:$0xff] %v3637
    %3654 = vst [vmem:[#allocation7 + $0x38] sm:$0xff] %v3638
    %3655 = vst [vmem:[#allocation7 + $0x40] sm:$0xff] %v3639
    %3656 = vst [vmem:[#allocation7 + $0x48] sm:$0xff] %v3640
    %3657 = vst [vmem:[#allocation7 + $0x50] sm:$0xff] %v3641
    %3658 = vst [vmem:[#allocation7 + $0x58] sm:$0xff] %v3642
    %3659 = vst [vmem:[#allocation7 + $0x60] sm:$0xff] %v3643
    %3660 = vst [vmem:[#allocation7 + $0x68] sm:$0xff] %v3644
    %3661 = vst [vmem:[#allocation7 + $0x70] sm:$0xff] %v3645
    %3662 = vst [vmem:[#allocation7 + $0x78] sm:$0xff] %v3646
    // Predicated region
    $region42: #{tpu_custom_call.1} parent=1 // pred_check
      _
    $region43: #{tpu_custom_call.1} parent=1 // pred_check_branch
      %3664 = sbr.rel (0) target = $region45
    $region44: #{tpu_custom_call.1} parent=1 // pred_region
      %s3665 = sadd.s32 0, 0
      %s3666 = smul.u32 8, %s3665
      %s3668 = ssub.s32 2048, 2048
      %3669 = vsyncadd [#allocation6], %s3668
      %s3670 = smul.addr %s3666, 128
      %s3671 = scalar_lea.hbm %s7, %s3670
      %s3672 = sshll.u32 [#allocation7], 4
      %s3673 = int_to_ptr.vmem [resolvable:$true] %s3672
      %3678 = dma.vmem_to_hbm [thread:$0]  %s3673, 2048, %s3671, [#allocation6], 1024, 1024, 64
    $region45: #{tpu_custom_call.1} parent=1 // pred_fallthru
      _
    // Predicated region
    $region46: #{tpu_custom_call.1} parent=1 // pred_check
      _
    $region47: #{tpu_custom_call.1} parent=1 // pred_check_branch
      %3680 = sbr.rel (0) target = $region49
    $region48: #{tpu_custom_call.1} parent=1 // pred_region
      %s3682 = ssub.s32 2048, 2048
      %3683 = vsyncadd [#allocation9], %s3682
      %s3684 = sshll.u32 [#allocation8], 4
      %s3685 = int_to_ptr.vmem [resolvable:$true] %s3684
      %3690 = dma.vmem_to_hbm [thread:$0]  %s3685, 2048, %s8, [#allocation9], 128, 128, 8
    $region49: #{tpu_custom_call.1} parent=1 // pred_fallthru
      _
    // Predicated region
    $region50: #{tpu_custom_call.1} parent=1 // pred_check
      _
    $region51: #{tpu_custom_call.1} parent=1 // pred_check_branch
      %3692 = sbr.rel (0) target = $region53
    $region52: #{tpu_custom_call.1} parent=1 // pred_region
      %3693 = dma.done [#allocation6], 2048
    $region53: #{tpu_custom_call.1} parent=1 // pred_fallthru
      _
    // Predicated region
    $region54: #{tpu_custom_call.1} parent=1 // pred_check
      _
    $region55: #{tpu_custom_call.1} parent=1 // pred_check_branch
      %3695 = sbr.rel (0) target = $region57
    $region56: #{tpu_custom_call.1} parent=1 // pred_region
      %3696 = dma.done [#allocation9], 2048
    $region57: #{tpu_custom_call.1} parent=1 // pred_fallthru
      _
    %3697 = vsyncpa [#allocation5], 1
    %3698 = vsyncpa [#allocation6], 1
    %3699 = vsyncpa [#allocation9], 1

</llo_original>
